<compile_context>
chip_gen: v7x
topology: tpu7x:2x2x1
jax: 0.10.0
libtpu: 0.0.40
codegen_flags: <defaults>
</compile_context>

<pallas_src>
import math

import jax
import jax.numpy as jnp
from jax.experimental import pallas as pl
from jax.experimental.pallas import tpu as pltpu


# ----------------------------- Pallas kernel --------------------------------

def _make_model_kernel(num_layers, T, B, H, O):
    """Builds the fused multi-layer bidirectional-LSTM + Linear kernel.

    Ref layout (positional):
      x_ref                          : (T, B, D0)   time-major input
      per layer l (4 refs each):
        wih_ref  : (D_l, 8H)  [W_ih_fwd^T | W_ih_bwd^T]   (D_0 = input_dim,
                                                           D_l = 2H for l > 0)
        whhf_ref : (H, 4H)    forward  W_hh^T
        whhb_ref : (H, 4H)    backward W_hh^T
        b_ref    : (1, 8H)    [(b_ih+b_hh)_fwd | (b_ih+b_hh)_bwd]
      wfc_ref  : (2H, O), bfc_ref : (1, O)
      fc_ref   : (B, O)  output
      gxf_scr, gxb_scr : (T, B, 4H)  precomputed input-gate slabs
      hf_scr,  hb_scr  : (T, B, H)   per-direction hidden slabs (in time order)

    Gate order matches PyTorch: i, f, g, o.
    """
    H4 = 4 * H

    def kernel(*refs):
        idx = 0
        x_ref = refs[idx]; idx += 1
        layers = []
        for _ in range(num_layers):
            layers.append(refs[idx:idx + 4]); idx += 4
        wfc_ref = refs[idx]; idx += 1
        bfc_ref = refs[idx]; idx += 1
        fc_ref = refs[idx]; idx += 1
        gxf_scr = refs[idx]; idx += 1
        gxb_scr = refs[idx]; idx += 1
        hf_scr = refs[idx]; idx += 1
        hb_scr = refs[idx]; idx += 1

        def lstm_update(gates, c):
            # Two full-width (B, 4H) EUP passes, then static lane slices.
            sig = jax.nn.sigmoid(gates)
            tnh = jnp.tanh(gates)
            i = sig[:, 0:H]
            f = sig[:, H:2 * H]
            g = tnh[:, 2 * H:3 * H]
            o = sig[:, 3 * H:4 * H]
            c_new = f * c + i * g
            return o * jnp.tanh(c_new), c_new

        h_f_last = None
        for li, (wih_ref, whhf_ref, whhb_ref, b_ref) in enumerate(layers):
            # ---- Hoisted input projection for all timesteps and both
            # directions: one (or two) MXU matmuls, bias folded in.
            if li == 0:
                D = wih_ref.shape[0]
                x_all = x_ref[...].reshape(T * B, D)
                gx = jnp.dot(x_all, wih_ref[...],
                             preferred_element_type=jnp.float32) + b_ref[...]
            else:
                # Consume the previous layer's hidden slabs directly with split
                # weight panels: no lane-concat, no (T, B, 2H) buffer.
                hf_all = hf_scr[...].reshape(T * B, H)
                hb_all = hb_scr[...].reshape(T * B, H)
                gx = (jnp.dot(hf_all, wih_ref[0:H, :],
                              preferred_element_type=jnp.float32)
                      + jnp.dot(hb_all, wih_ref[H:2 * H, :],
                                preferred_element_type=jnp.float32)
                      + b_ref[...])
            gx3 = gx.reshape(T, B, 2 * H4)
            gxf_scr[...] = gx3[:, :, 0:H4]          # 128-lane aligned slices
            gxb_scr[...] = gx3[:, :, H4:2 * H4]

            # Hoist the (small) recurrent weights out of the time loop.
            whh_f = whhf_ref[...]
            whh_b = whhb_ref[...]

            def step(t, carry, whh_f=whh_f, whh_b=whh_b):
                h_f, c_f, h_b, c_b = carry
                tb = T - 1 - t
                gates_f = gxf_scr[t] + jnp.dot(
                    h_f, whh_f, preferred_element_type=jnp.float32)
                gates_b = gxb_scr[tb] + jnp.dot(
                    h_b, whh_b, preferred_element_type=jnp.float32)
                h_f, c_f = lstm_update(gates_f, c_f)
                h_b, c_b = lstm_update(gates_b, c_b)
                hf_scr[t] = h_f
                hb_scr[tb] = h_b
                return h_f, c_f, h_b, c_b

            zeros = jnp.zeros((B, H), jnp.float32)   # h0 = c0 = 0
            h_f_last, _, _, _ = jax.lax.fori_loop(
                0, T, step, (zeros, zeros, zeros, zeros), unroll=True)

        # ---- Fused final Linear on out[:, -1, :] = [h_fwd(T-1) | h_bwd(T-1)].
        # h_fwd(T-1) is the forward carry; h_bwd(T-1) sits at hb_scr[T-1]
        # (backward direction processes position T-1 first).
        fc = (jnp.dot(h_f_last, wfc_ref[0:H, :],
                      preferred_element_type=jnp.float32)
              + jnp.dot(hb_scr[T - 1], wfc_ref[H:2 * H, :],
                        preferred_element_type=jnp.float32)
              + bfc_ref[...])
        fc_ref[...] = fc.astype(fc_ref.dtype)

    return kernel


# ----------------------------- model wrapper --------------------------------

def init_params(key, input_dim, hidden_dim, num_layers, output_dim):
    """Deterministic init matching PyTorch's default U(-1/sqrt(H), 1/sqrt(H))."""
    k = 1.0 / math.sqrt(hidden_dim)
    lstm_params = []
    for layer in range(num_layers):
        layer_in = input_dim if layer == 0 else 2 * hidden_dim
        dirs = []
        for _d in range(2):  # forward, backward
            key, k1, k2, k3, k4 = jax.random.split(key, 5)
            w_ih = jax.random.uniform(k1, (4 * hidden_dim, layer_in),
                                      jnp.float32, -k, k)
            w_hh = jax.random.uniform(k2, (4 * hidden_dim, hidden_dim),
                                      jnp.float32, -k, k)
            b_ih = jax.random.uniform(k3, (4 * hidden_dim,), jnp.float32, -k, k)
            b_hh = jax.random.uniform(k4, (4 * hidden_dim,), jnp.float32, -k, k)
            dirs.append((w_ih, w_hh, b_ih, b_hh))
        lstm_params.append(dirs)
    kf = 1.0 / math.sqrt(2 * hidden_dim)
    key, k1, k2 = jax.random.split(key, 3)
    w_fc = jax.random.uniform(k1, (output_dim, 2 * hidden_dim),
                              jnp.float32, -kf, kf)
    b_fc = jax.random.uniform(k2, (output_dim,), jnp.float32, -kf, kf)
    return {"lstm": lstm_params, "fc": (w_fc, b_fc)}


def lstm_model_forward(params, x):
    """x: (B, T, input_dim) batch-first, like the PyTorch module.  h0 = c0 = 0."""
    B = x.shape[0]
    x_tm = jnp.transpose(x, (1, 0, 2)).astype(jnp.float32)       # (T, B, D)
    # Pad batch to a multiple of 8 sublanes; padded rows are independent and
    # sliced off at the end.
    B_pad = ((B + 7) // 8) * 8
    if B_pad != B:
        x_tm = jnp.pad(x_tm, ((0, 0), (0, B_pad - B), (0, 0)))
    T, Bp, D0 = x_tm.shape

    lstm = params["lstm"]
    num_layers = len(lstm)
    H = lstm[0][0][1].shape[1]                  # w_hh: (4H, H)
    w_fc, b_fc = params["fc"]
    O = w_fc.shape[0]

    # ---- Pack weights into kernel layout and build specs.
    args = [x_tm]
    in_specs = [pl.BlockSpec((T, Bp, D0), lambda i: (0, 0, 0))]
    for dirs in lstm:
        (w_ih_f, w_hh_f, b_ih_f, b_hh_f) = dirs[0]
        (w_ih_b, w_hh_b, b_ih_b, b_hh_b) = dirs[1]
        wih_t = jnp.concatenate([w_ih_f.T, w_ih_b.T], axis=1)            # (D_l, 8H)
        bias_row = jnp.concatenate([b_ih_f + b_hh_f,
                                    b_ih_b + b_hh_b])[None, :]           # (1, 8H)
        D_l = wih_t.shape[0]
        args += [wih_t, w_hh_f.T, w_hh_b.T, bias_row]
        in_specs += [
            pl.BlockSpec((D_l, 8 * H), lambda i: (0, 0)),
            pl.BlockSpec((H, 4 * H), lambda i: (0, 0)),
            pl.BlockSpec((H, 4 * H), lambda i: (0, 0)),
            pl.BlockSpec((1, 8 * H), lambda i: (0, 0)),
        ]
    args += [w_fc.T, b_fc[None, :]]
    in_specs += [pl.BlockSpec((2 * H, O), lambda i: (0, 0)),
                 pl.BlockSpec((1, O), lambda i: (0, 0))]

    # TODO(synk): inter-layer dropout is training-mode only in torch; omitted
    # (inference semantics).
    kernel = _make_model_kernel(num_layers, T, Bp, H, O)
    fc_out = pl.pallas_call(
        kernel,
        out_shape=jax.ShapeDtypeStruct((Bp, O), jnp.float32),
        grid=(1,),
        in_specs=in_specs,
        out_specs=pl.BlockSpec((Bp, O), lambda i: (0, 0)),
        scratch_shapes=[
            pltpu.VMEM((T, Bp, 4 * H), jnp.float32),   # gxf
            pltpu.VMEM((T, Bp, 4 * H), jnp.float32),   # gxb
            pltpu.VMEM((T, Bp, H), jnp.float32),       # hf
            pltpu.VMEM((T, Bp, H), jnp.float32),       # hb
        ],
        compiler_params=pltpu.CompilerParams(dimension_semantics=("arbitrary",)),
    )(*args)
    return fc_out[:B]                                    # (B, output_dim)


# ----------------------------- pure-JAX reference ---------------------------

def _ref_cell_scan(x_tm, w_ih, w_hh, b, hidden_dim):
    B = x_tm.shape[1]
    h0 = jnp.zeros((B, hidden_dim), jnp.float32)
    c0 = jnp.zeros((B, hidden_dim), jnp.float32)

    def step(carry, x_t):
        h, c = carry
        gates = x_t @ w_ih.T + h @ w_hh.T + b
        i, f, g, o = jnp.split(gates, 4, axis=-1)
        c = jax.nn.sigmoid(f) * c + jax.nn.sigmoid(i) * jnp.tanh(g)
        h = jax.nn.sigmoid(o) * jnp.tanh(c)
        return (h, c), h

    _, hs = jax.lax.scan(step, (h0, c0), x_tm)
    return hs


def ref_forward(params, x, hidden_dim):
    x_tm = jnp.transpose(x, (1, 0, 2)).astype(jnp.float32)
    layer_in = x_tm
    for dirs in params["lstm"]:
        (w_ih_f, w_hh_f, b_ih_f, b_hh_f) = dirs[0]
        (w_ih_b, w_hh_b, b_ih_b, b_hh_b) = dirs[1]
        out_f = _ref_cell_scan(layer_in, w_ih_f, w_hh_f, b_ih_f + b_hh_f,
                               hidden_dim)
        out_b = _ref_cell_scan(layer_in[::-1], w_ih_b, w_hh_b,
                               b_ih_b + b_hh_b, hidden_dim)[::-1]
        layer_in = jnp.concatenate([out_f, out_b], axis=-1)
    w_fc, b_fc = params["fc"]
    return layer_in[-1] @ w_fc.T + b_fc


# ----------------------------- main ------------------------------------------

if __name__ == "__main__":
    input_dim = 4
    hidden_dim = 32
    num_layers = 2
    output_dim = 1
    batch = 2
    seq = 8

    key = jax.random.PRNGKey(0)
    key, pkey, xkey = jax.random.split(key, 3)
    params = init_params(pkey, input_dim, hidden_dim, num_layers, output_dim)
    x = jax.random.normal(xkey, (batch, seq, input_dim), jnp.float32)

    out = lstm_model_forward(params, x)
    out = jax.block_until_ready(out)
    assert out.shape == (batch, output_dim)

    ref = jax.block_until_ready(ref_forward(params, x, hidden_dim))
    assert jnp.allclose(out, ref, atol=1e-5, rtol=1e-5), (out, ref)

    print("KERNEL_OK")
</pallas_src>

<mosaic_0001>
module attributes {stable_mosaic.version = 11 : i64} {
  func.func @kernel(%arg0: i32, %arg1: memref<8x8x4xf32, #tpu.memory_space<vmem>>, %arg2: memref<4x256xf32, #tpu.memory_space<vmem>>, %arg3: memref<32x128xf32, #tpu.memory_space<vmem>>, %arg4: memref<32x128xf32, #tpu.memory_space<vmem>>, %arg5: memref<1x256xf32, #tpu.memory_space<vmem>>, %arg6: memref<64x256xf32, #tpu.memory_space<vmem>>, %arg7: memref<32x128xf32, #tpu.memory_space<vmem>>, %arg8: memref<32x128xf32, #tpu.memory_space<vmem>>, %arg9: memref<1x256xf32, #tpu.memory_space<vmem>>, %arg10: memref<64x1xf32, #tpu.memory_space<vmem>>, %arg11: memref<1x1xf32, #tpu.memory_space<vmem>>, %arg12: memref<8x1xf32, #tpu.memory_space<vmem>>, %arg13: memref<8x8x128xf32, #tpu.memory_space<vmem>>, %arg14: memref<8x8x128xf32, #tpu.memory_space<vmem>>, %arg15: memref<8x8x32xf32, #tpu.memory_space<vmem>>, %arg16: memref<8x8x32xf32, #tpu.memory_space<vmem>>) attributes {dimension_semantics = [#tpu.dimension_semantics<arbitrary>], iteration_bounds = array<i64: 1>, scalar_prefetch = 0 : i64, scratch_operands = 4 : i64, tpu.core_type = #tpu.core_type<tc>, window_params = [{pipeline_mode = #tpu.pipeline_mode<synchronous>, transform_indices = @transform_0, window_bounds = array<i64: 8, 8, 4>}, {pipeline_mode = #tpu.pipeline_mode<synchronous>, transform_indices = @transform_1, window_bounds = array<i64: 4, 256>}, {pipeline_mode = #tpu.pipeline_mode<synchronous>, transform_indices = @transform_2, window_bounds = array<i64: 32, 128>}, {pipeline_mode = #tpu.pipeline_mode<synchronous>, transform_indices = @transform_3, window_bounds = array<i64: 32, 128>}, {pipeline_mode = #tpu.pipeline_mode<synchronous>, transform_indices = @transform_4, window_bounds = array<i64: 1, 256>}, {pipeline_mode = #tpu.pipeline_mode<synchronous>, transform_indices = @transform_5, window_bounds = array<i64: 64, 256>}, {pipeline_mode = #tpu.pipeline_mode<synchronous>, transform_indices = @transform_6, window_bounds = array<i64: 32, 128>}, {pipeline_mode = #tpu.pipeline_mode<synchronous>, transform_indices = @transform_7, window_bounds = array<i64: 32, 128>}, {pipeline_mode = #tpu.pipeline_mode<synchronous>, transform_indices = @transform_8, window_bounds = array<i64: 1, 256>}, {pipeline_mode = #tpu.pipeline_mode<synchronous>, transform_indices = @transform_9, window_bounds = array<i64: 64, 1>}, {pipeline_mode = #tpu.pipeline_mode<synchronous>, transform_indices = @transform_10, window_bounds = array<i64: 1, 1>}, {pipeline_mode = #tpu.pipeline_mode<synchronous>, transform_indices = @transform_11, window_bounds = array<i64: 8, 1>}]} {
    %c0 = arith.constant 0 : index
    %c0_0 = arith.constant 0 : index
    %c0_1 = arith.constant 0 : index
    %0 = vector.load %arg1[%c0, %c0_0, %c0_1] : memref<8x8x4xf32, #tpu.memory_space<vmem>>, vector<8x8x4xf32>
    %1 = vector.shape_cast %0 : vector<8x8x4xf32> to vector<64x4xf32>
    %c0_2 = arith.constant 0 : index
    %c0_3 = arith.constant 0 : index
    %2 = vector.load %arg2[%c0_2, %c0_3] : memref<4x256xf32, #tpu.memory_space<vmem>>, vector<4x256xf32>
    %cst = arith.constant dense<0.000000e+00> : vector<64x256xf32>
    %3 = tpu.matmul %1, %2, %cst {dimension_numbers = #tpu.dot_dimension_numbers<[1], [0], [0], [1], [0, 0, 1, 1], [], []>} : vector<64x4xf32>, vector<4x256xf32>, vector<64x256xf32> -> vector<64x256xf32>
    %c0_4 = arith.constant 0 : index
    %c0_5 = arith.constant 0 : index
    %4 = vector.load %arg5[%c0_4, %c0_5] : memref<1x256xf32, #tpu.memory_space<vmem>>, vector<1x256xf32>
    %5 = vector.broadcast %4 : vector<1x256xf32> to vector<64x256xf32>
    %6 = arith.addf %3, %5 : vector<64x256xf32>
    %7 = vector.shape_cast %6 : vector<64x256xf32> to vector<8x8x256xf32>
    %8 = vector.extract_strided_slice %7 {offsets = [0, 0, 0], sizes = [8, 8, 128], strides = [1, 1, 1]} : vector<8x8x256xf32> to vector<8x8x128xf32>
    %c0_6 = arith.constant 0 : index
    %c0_7 = arith.constant 0 : index
    %c0_8 = arith.constant 0 : index
    %9 = vector.load %arg13[%c0_6, %c0_7, %c0_8] : memref<8x8x128xf32, #tpu.memory_space<vmem>>, vector<8x8x128xf32>
    tpu.vector_store %arg13[%c0_6, %c0_7, %c0_8], %8 {strides = array<i32>} : memref<8x8x128xf32, #tpu.memory_space<vmem>>, vector<8x8x128xf32>,
    %10 = vector.extract_strided_slice %7 {offsets = [0, 0, 128], sizes = [8, 8, 128], strides = [1, 1, 1]} : vector<8x8x256xf32> to vector<8x8x128xf32>
    %c0_9 = arith.constant 0 : index
    %c0_10 = arith.constant 0 : index
    %c0_11 = arith.constant 0 : index
    %11 = vector.load %arg14[%c0_9, %c0_10, %c0_11] : memref<8x8x128xf32, #tpu.memory_space<vmem>>, vector<8x8x128xf32>
    tpu.vector_store %arg14[%c0_9, %c0_10, %c0_11], %10 {strides = array<i32>} : memref<8x8x128xf32, #tpu.memory_space<vmem>>, vector<8x8x128xf32>,
    %c0_12 = arith.constant 0 : index
    %c0_13 = arith.constant 0 : index
    %12 = vector.load %arg3[%c0_12, %c0_13] : memref<32x128xf32, #tpu.memory_space<vmem>>, vector<32x128xf32>
    %c0_14 = arith.constant 0 : index
    %c0_15 = arith.constant 0 : index
    %13 = vector.load %arg4[%c0_14, %c0_15] : memref<32x128xf32, #tpu.memory_space<vmem>>, vector<32x128xf32>
    %cst_16 = arith.constant 0.000000e+00 : f32
    %14 = vector.broadcast %cst_16 : f32 to vector<8x32xf32>
    %c0_i32 = arith.constant 0 : i32
    %c7_i32 = arith.constant 7 : i32
    %15 = arith.subi %c7_i32, %c0_i32 : i32
    %16 = arith.index_cast %c0_i32 : i32 to index
    %c0_17 = arith.constant 0 : index
    %c0_18 = arith.constant 0 : index
    %17 = vector.load %arg13[%16, %c0_17, %c0_18] : memref<8x8x128xf32, #tpu.memory_space<vmem>>, vector<1x8x128xf32>
    %18 = vector.shape_cast %17 : vector<1x8x128xf32> to vector<8x128xf32>
    %cst_19 = arith.constant dense<0.000000e+00> : vector<8x128xf32>
    %19 = tpu.matmul %14, %12, %cst_19 {dimension_numbers = #tpu.dot_dimension_numbers<[1], [0], [0], [1], [0, 0, 1, 1], [], []>} : vector<8x32xf32>, vector<32x128xf32>, vector<8x128xf32> -> vector<8x128xf32>
    %20 = arith.addf %18, %19 : vector<8x128xf32>
    %21 = arith.index_cast %15 : i32 to index
    %c0_20 = arith.constant 0 : index
    %c0_21 = arith.constant 0 : index
    %22 = vector.load %arg14[%21, %c0_20, %c0_21] : memref<8x8x128xf32, #tpu.memory_space<vmem>>, vector<1x8x128xf32>
    %23 = vector.shape_cast %22 : vector<1x8x128xf32> to vector<8x128xf32>
    %cst_22 = arith.constant dense<0.000000e+00> : vector<8x128xf32>
    %24 = tpu.matmul %14, %13, %cst_22 {dimension_numbers = #tpu.dot_dimension_numbers<[1], [0], [0], [1], [0, 0, 1, 1], [], []>} : vector<8x32xf32>, vector<32x128xf32>, vector<8x128xf32> -> vector<8x128xf32>
    %25 = arith.addf %23, %24 : vector<8x128xf32>
    %26 = arith.negf %20 : vector<8x128xf32>
    %27 = math.exp %26 : vector<8x128xf32>
    %cst_23 = arith.constant 1.000000e+00 : f32
    %28 = vector.broadcast %cst_23 : f32 to vector<8x128xf32>
    %29 = arith.addf %28, %27 : vector<8x128xf32>
    %30 = arith.divf %28, %29 : vector<8x128xf32>
    %31 = math.tanh %20 : vector<8x128xf32>
    %32 = vector.extract_strided_slice %30 {offsets = [0, 0], sizes = [8, 32], strides = [1, 1]} : vector<8x128xf32> to vector<8x32xf32>
    %33 = vector.extract_strided_slice %30 {offsets = [0, 32], sizes = [8, 32], strides = [1, 1]} : vector<8x128xf32> to vector<8x32xf32>
    %34 = vector.extract_strided_slice %31 {offsets = [0, 64], sizes = [8, 32], strides = [1, 1]} : vector<8x128xf32> to vector<8x32xf32>
    %35 = vector.extract_strided_slice %30 {offsets = [0, 96], sizes = [8, 32], strides = [1, 1]} : vector<8x128xf32> to vector<8x32xf32>
    %36 = arith.mulf %33, %14 : vector<8x32xf32>
    %37 = arith.mulf %32, %34 : vector<8x32xf32>
    %38 = arith.addf %36, %37 : vector<8x32xf32>
    %39 = math.tanh %38 : vector<8x32xf32>
    %40 = arith.mulf %35, %39 : vector<8x32xf32>
    %41 = arith.negf %25 : vector<8x128xf32>
    %42 = math.exp %41 : vector<8x128xf32>
    %cst_24 = arith.constant 1.000000e+00 : f32
    %43 = vector.broadcast %cst_24 : f32 to vector<8x128xf32>
    %44 = arith.addf %43, %42 : vector<8x128xf32>
    %45 = arith.divf %43, %44 : vector<8x128xf32>
    %46 = math.tanh %25 : vector<8x128xf32>
    %47 = vector.extract_strided_slice %45 {offsets = [0, 0], sizes = [8, 32], strides = [1, 1]} : vector<8x128xf32> to vector<8x32xf32>
    %48 = vector.extract_strided_slice %45 {offsets = [0, 32], sizes = [8, 32], strides = [1, 1]} : vector<8x128xf32> to vector<8x32xf32>
    %49 = vector.extract_strided_slice %46 {offsets = [0, 64], sizes = [8, 32], strides = [1, 1]} : vector<8x128xf32> to vector<8x32xf32>
    %50 = vector.extract_strided_slice %45 {offsets = [0, 96], sizes = [8, 32], strides = [1, 1]} : vector<8x128xf32> to vector<8x32xf32>
    %51 = arith.mulf %48, %14 : vector<8x32xf32>
    %52 = arith.mulf %47, %49 : vector<8x32xf32>
    %53 = arith.addf %51, %52 : vector<8x32xf32>
    %54 = math.tanh %53 : vector<8x32xf32>
    %55 = arith.mulf %50, %54 : vector<8x32xf32>
    %56 = arith.index_cast %c0_i32 : i32 to index
    %c0_25 = arith.constant 0 : index
    %c0_26 = arith.constant 0 : index
    %57 = vector.load %arg15[%56, %c0_25, %c0_26] : memref<8x8x32xf32, #tpu.memory_space<vmem>>, vector<1x8x32xf32>
    %58 = vector.shape_cast %57 : vector<1x8x32xf32> to vector<8x32xf32>
    %59 = vector.shape_cast %40 : vector<8x32xf32> to vector<1x8x32xf32>
    tpu.vector_store %arg15[%56, %c0_25, %c0_26], %59 {strides = array<i32>} : memref<8x8x32xf32, #tpu.memory_space<vmem>>, vector<1x8x32xf32>,
    %60 = arith.index_cast %15 : i32 to index
    %c0_27 = arith.constant 0 : index
    %c0_28 = arith.constant 0 : index
    %61 = vector.load %arg16[%60, %c0_27, %c0_28] : memref<8x8x32xf32, #tpu.memory_space<vmem>>, vector<1x8x32xf32>
    %62 = vector.shape_cast %61 : vector<1x8x32xf32> to vector<8x32xf32>
    %63 = vector.shape_cast %55 : vector<8x32xf32> to vector<1x8x32xf32>
    tpu.vector_store %arg16[%60, %c0_27, %c0_28], %63 {strides = array<i32>} : memref<8x8x32xf32, #tpu.memory_space<vmem>>, vector<1x8x32xf32>,
    %c1_i32 = arith.constant 1 : i32
    %c7_i32_29 = arith.constant 7 : i32
    %64 = arith.subi %c7_i32_29, %c1_i32 : i32
    %65 = arith.index_cast %c1_i32 : i32 to index
    %c0_30 = arith.constant 0 : index
    %c0_31 = arith.constant 0 : index
    %66 = vector.load %arg13[%65, %c0_30, %c0_31] : memref<8x8x128xf32, #tpu.memory_space<vmem>>, vector<1x8x128xf32>
    %67 = vector.shape_cast %66 : vector<1x8x128xf32> to vector<8x128xf32>
    %cst_32 = arith.constant dense<0.000000e+00> : vector<8x128xf32>
    %68 = tpu.matmul %40, %12, %cst_32 {dimension_numbers = #tpu.dot_dimension_numbers<[1], [0], [0], [1], [0, 0, 1, 1], [], []>} : vector<8x32xf32>, vector<32x128xf32>, vector<8x128xf32> -> vector<8x128xf32>
    %69 = arith.addf %67, %68 : vector<8x128xf32>
    %70 = arith.index_cast %64 : i32 to index
    %c0_33 = arith.constant 0 : index
    %c0_34 = arith.constant 0 : index
    %71 = vector.load %arg14[%70, %c0_33, %c0_34] : memref<8x8x128xf32, #tpu.memory_space<vmem>>, vector<1x8x128xf32>
    %72 = vector.shape_cast %71 : vector<1x8x128xf32> to vector<8x128xf32>
    %cst_35 = arith.constant dense<0.000000e+00> : vector<8x128xf32>
    %73 = tpu.matmul %55, %13, %cst_35 {dimension_numbers = #tpu.dot_dimension_numbers<[1], [0], [0], [1], [0, 0, 1, 1], [], []>} : vector<8x32xf32>, vector<32x128xf32>, vector<8x128xf32> -> vector<8x128xf32>
    %74 = arith.addf %72, %73 : vector<8x128xf32>
    %75 = arith.negf %69 : vector<8x128xf32>
    %76 = math.exp %75 : vector<8x128xf32>
    %cst_36 = arith.constant 1.000000e+00 : f32
    %77 = vector.broadcast %cst_36 : f32 to vector<8x128xf32>
    %78 = arith.addf %77, %76 : vector<8x128xf32>
    %79 = arith.divf %77, %78 : vector<8x128xf32>
    %80 = math.tanh %69 : vector<8x128xf32>
    %81 = vector.extract_strided_slice %79 {offsets = [0, 0], sizes = [8, 32], strides = [1, 1]} : vector<8x128xf32> to vector<8x32xf32>
    %82 = vector.extract_strided_slice %79 {offsets = [0, 32], sizes = [8, 32], strides = [1, 1]} : vector<8x128xf32> to vector<8x32xf32>
    %83 = vector.extract_strided_slice %80 {offsets = [0, 64], sizes = [8, 32], strides = [1, 1]} : vector<8x128xf32> to vector<8x32xf32>
    %84 = vector.extract_strided_slice %79 {offsets = [0, 96], sizes = [8, 32], strides = [1, 1]} : vector<8x128xf32> to vector<8x32xf32>
    %85 = arith.mulf %82, %38 : vector<8x32xf32>
    %86 = arith.mulf %81, %83 : vector<8x32xf32>
    %87 = arith.addf %85, %86 : vector<8x32xf32>
    %88 = math.tanh %87 : vector<8x32xf32>
    %89 = arith.mulf %84, %88 : vector<8x32xf32>
    %90 = arith.negf %74 : vector<8x128xf32>
    %91 = math.exp %90 : vector<8x128xf32>
    %cst_37 = arith.constant 1.000000e+00 : f32
    %92 = vector.broadcast %cst_37 : f32 to vector<8x128xf32>
    %93 = arith.addf %92, %91 : vector<8x128xf32>
    %94 = arith.divf %92, %93 : vector<8x128xf32>
    %95 = math.tanh %74 : vector<8x128xf32>
    %96 = vector.extract_strided_slice %94 {offsets = [0, 0], sizes = [8, 32], strides = [1, 1]} : vector<8x128xf32> to vector<8x32xf32>
    %97 = vector.extract_strided_slice %94 {offsets = [0, 32], sizes = [8, 32], strides = [1, 1]} : vector<8x128xf32> to vector<8x32xf32>
    %98 = vector.extract_strided_slice %95 {offsets = [0, 64], sizes = [8, 32], strides = [1, 1]} : vector<8x128xf32> to vector<8x32xf32>
    %99 = vector.extract_strided_slice %94 {offsets = [0, 96], sizes = [8, 32], strides = [1, 1]} : vector<8x128xf32> to vector<8x32xf32>
    %100 = arith.mulf %97, %53 : vector<8x32xf32>
    %101 = arith.mulf %96, %98 : vector<8x32xf32>
    %102 = arith.addf %100, %101 : vector<8x32xf32>
    %103 = math.tanh %102 : vector<8x32xf32>
    %104 = arith.mulf %99, %103 : vector<8x32xf32>
    %105 = arith.index_cast %c1_i32 : i32 to index
    %c0_38 = arith.constant 0 : index
    %c0_39 = arith.constant 0 : index
    %106 = vector.load %arg15[%105, %c0_38, %c0_39] : memref<8x8x32xf32, #tpu.memory_space<vmem>>, vector<1x8x32xf32>
    %107 = vector.shape_cast %106 : vector<1x8x32xf32> to vector<8x32xf32>
    %108 = vector.shape_cast %89 : vector<8x32xf32> to vector<1x8x32xf32>
    tpu.vector_store %arg15[%105, %c0_38, %c0_39], %108 {strides = array<i32>} : memref<8x8x32xf32, #tpu.memory_space<vmem>>, vector<1x8x32xf32>,
    %109 = arith.index_cast %64 : i32 to index
    %c0_40 = arith.constant 0 : index
    %c0_41 = arith.constant 0 : index
    %110 = vector.load %arg16[%109, %c0_40, %c0_41] : memref<8x8x32xf32, #tpu.memory_space<vmem>>, vector<1x8x32xf32>
    %111 = vector.shape_cast %110 : vector<1x8x32xf32> to vector<8x32xf32>
    %112 = vector.shape_cast %104 : vector<8x32xf32> to vector<1x8x32xf32>
    tpu.vector_store %arg16[%109, %c0_40, %c0_41], %112 {strides = array<i32>} : memref<8x8x32xf32, #tpu.memory_space<vmem>>, vector<1x8x32xf32>,
    %c2_i32 = arith.constant 2 : i32
    %c7_i32_42 = arith.constant 7 : i32
    %113 = arith.subi %c7_i32_42, %c2_i32 : i32
    %114 = arith.index_cast %c2_i32 : i32 to index
    %c0_43 = arith.constant 0 : index
    %c0_44 = arith.constant 0 : index
    %115 = vector.load %arg13[%114, %c0_43, %c0_44] : memref<8x8x128xf32, #tpu.memory_space<vmem>>, vector<1x8x128xf32>
    %116 = vector.shape_cast %115 : vector<1x8x128xf32> to vector<8x128xf32>
    %cst_45 = arith.constant dense<0.000000e+00> : vector<8x128xf32>
    %117 = tpu.matmul %89, %12, %cst_45 {dimension_numbers = #tpu.dot_dimension_numbers<[1], [0], [0], [1], [0, 0, 1, 1], [], []>} : vector<8x32xf32>, vector<32x128xf32>, vector<8x128xf32> -> vector<8x128xf32>
    %118 = arith.addf %116, %117 : vector<8x128xf32>
    %119 = arith.index_cast %113 : i32 to index
    %c0_46 = arith.constant 0 : index
    %c0_47 = arith.constant 0 : index
    %120 = vector.load %arg14[%119, %c0_46, %c0_47] : memref<8x8x128xf32, #tpu.memory_space<vmem>>, vector<1x8x128xf32>
    %121 = vector.shape_cast %120 : vector<1x8x128xf32> to vector<8x128xf32>
    %cst_48 = arith.constant dense<0.000000e+00> : vector<8x128xf32>
    %122 = tpu.matmul %104, %13, %cst_48 {dimension_numbers = #tpu.dot_dimension_numbers<[1], [0], [0], [1], [0, 0, 1, 1], [], []>} : vector<8x32xf32>, vector<32x128xf32>, vector<8x128xf32> -> vector<8x128xf32>
    %123 = arith.addf %121, %122 : vector<8x128xf32>
    %124 = arith.negf %118 : vector<8x128xf32>
    %125 = math.exp %124 : vector<8x128xf32>
    %cst_49 = arith.constant 1.000000e+00 : f32
    %126 = vector.broadcast %cst_49 : f32 to vector<8x128xf32>
    %127 = arith.addf %126, %125 : vector<8x128xf32>
    %128 = arith.divf %126, %127 : vector<8x128xf32>
    %129 = math.tanh %118 : vector<8x128xf32>
    %130 = vector.extract_strided_slice %128 {offsets = [0, 0], sizes = [8, 32], strides = [1, 1]} : vector<8x128xf32> to vector<8x32xf32>
    %131 = vector.extract_strided_slice %128 {offsets = [0, 32], sizes = [8, 32], strides = [1, 1]} : vector<8x128xf32> to vector<8x32xf32>
    %132 = vector.extract_strided_slice %129 {offsets = [0, 64], sizes = [8, 32], strides = [1, 1]} : vector<8x128xf32> to vector<8x32xf32>
    %133 = vector.extract_strided_slice %128 {offsets = [0, 96], sizes = [8, 32], strides = [1, 1]} : vector<8x128xf32> to vector<8x32xf32>
    %134 = arith.mulf %131, %87 : vector<8x32xf32>
    %135 = arith.mulf %130, %132 : vector<8x32xf32>
    %136 = arith.addf %134, %135 : vector<8x32xf32>
    %137 = math.tanh %136 : vector<8x32xf32>
    %138 = arith.mulf %133, %137 : vector<8x32xf32>
    %139 = arith.negf %123 : vector<8x128xf32>
    %140 = math.exp %139 : vector<8x128xf32>
    %cst_50 = arith.constant 1.000000e+00 : f32
    %141 = vector.broadcast %cst_50 : f32 to vector<8x128xf32>
    %142 = arith.addf %141, %140 : vector<8x128xf32>
    %143 = arith.divf %141, %142 : vector<8x128xf32>
    %144 = math.tanh %123 : vector<8x128xf32>
    %145 = vector.extract_strided_slice %143 {offsets = [0, 0], sizes = [8, 32], strides = [1, 1]} : vector<8x128xf32> to vector<8x32xf32>
    %146 = vector.extract_strided_slice %143 {offsets = [0, 32], sizes = [8, 32], strides = [1, 1]} : vector<8x128xf32> to vector<8x32xf32>
    %147 = vector.extract_strided_slice %144 {offsets = [0, 64], sizes = [8, 32], strides = [1, 1]} : vector<8x128xf32> to vector<8x32xf32>
    %148 = vector.extract_strided_slice %143 {offsets = [0, 96], sizes = [8, 32], strides = [1, 1]} : vector<8x128xf32> to vector<8x32xf32>
    %149 = arith.mulf %146, %102 : vector<8x32xf32>
    %150 = arith.mulf %145, %147 : vector<8x32xf32>
    %151 = arith.addf %149, %150 : vector<8x32xf32>
    %152 = math.tanh %151 : vector<8x32xf32>
    %153 = arith.mulf %148, %152 : vector<8x32xf32>
    %154 = arith.index_cast %c2_i32 : i32 to index
    %c0_51 = arith.constant 0 : index
    %c0_52 = arith.constant 0 : index
    %155 = vector.load %arg15[%154, %c0_51, %c0_52] : memref<8x8x32xf32, #tpu.memory_space<vmem>>, vector<1x8x32xf32>
    %156 = vector.shape_cast %155 : vector<1x8x32xf32> to vector<8x32xf32>
    %157 = vector.shape_cast %138 : vector<8x32xf32> to vector<1x8x32xf32>
    tpu.vector_store %arg15[%154, %c0_51, %c0_52], %157 {strides = array<i32>} : memref<8x8x32xf32, #tpu.memory_space<vmem>>, vector<1x8x32xf32>,
    %158 = arith.index_cast %113 : i32 to index
    %c0_53 = arith.constant 0 : index
    %c0_54 = arith.constant 0 : index
    %159 = vector.load %arg16[%158, %c0_53, %c0_54] : memref<8x8x32xf32, #tpu.memory_space<vmem>>, vector<1x8x32xf32>
    %160 = vector.shape_cast %159 : vector<1x8x32xf32> to vector<8x32xf32>
    %161 = vector.shape_cast %153 : vector<8x32xf32> to vector<1x8x32xf32>
    tpu.vector_store %arg16[%158, %c0_53, %c0_54], %161 {strides = array<i32>} : memref<8x8x32xf32, #tpu.memory_space<vmem>>, vector<1x8x32xf32>,
    %c3_i32 = arith.constant 3 : i32
    %c7_i32_55 = arith.constant 7 : i32
    %162 = arith.subi %c7_i32_55, %c3_i32 : i32
    %163 = arith.index_cast %c3_i32 : i32 to index
    %c0_56 = arith.constant 0 : index
    %c0_57 = arith.constant 0 : index
    %164 = vector.load %arg13[%163, %c0_56, %c0_57] : memref<8x8x128xf32, #tpu.memory_space<vmem>>, vector<1x8x128xf32>
    %165 = vector.shape_cast %164 : vector<1x8x128xf32> to vector<8x128xf32>
    %cst_58 = arith.constant dense<0.000000e+00> : vector<8x128xf32>
    %166 = tpu.matmul %138, %12, %cst_58 {dimension_numbers = #tpu.dot_dimension_numbers<[1], [0], [0], [1], [0, 0, 1, 1], [], []>} : vector<8x32xf32>, vector<32x128xf32>, vector<8x128xf32> -> vector<8x128xf32>
    %167 = arith.addf %165, %166 : vector<8x128xf32>
    %168 = arith.index_cast %162 : i32 to index
    %c0_59 = arith.constant 0 : index
    %c0_60 = arith.constant 0 : index
    %169 = vector.load %arg14[%168, %c0_59, %c0_60] : memref<8x8x128xf32, #tpu.memory_space<vmem>>, vector<1x8x128xf32>
    %170 = vector.shape_cast %169 : vector<1x8x128xf32> to vector<8x128xf32>
    %cst_61 = arith.constant dense<0.000000e+00> : vector<8x128xf32>
    %171 = tpu.matmul %153, %13, %cst_61 {dimension_numbers = #tpu.dot_dimension_numbers<[1], [0], [0], [1], [0, 0, 1, 1], [], []>} : vector<8x32xf32>, vector<32x128xf32>, vector<8x128xf32> -> vector<8x128xf32>
    %172 = arith.addf %170, %171 : vector<8x128xf32>
    %173 = arith.negf %167 : vector<8x128xf32>
    %174 = math.exp %173 : vector<8x128xf32>
    %cst_62 = arith.constant 1.000000e+00 : f32
    %175 = vector.broadcast %cst_62 : f32 to vector<8x128xf32>
    %176 = arith.addf %175, %174 : vector<8x128xf32>
    %177 = arith.divf %175, %176 : vector<8x128xf32>
    %178 = math.tanh %167 : vector<8x128xf32>
    %179 = vector.extract_strided_slice %177 {offsets = [0, 0], sizes = [8, 32], strides = [1, 1]} : vector<8x128xf32> to vector<8x32xf32>
    %180 = vector.extract_strided_slice %177 {offsets = [0, 32], sizes = [8, 32], strides = [1, 1]} : vector<8x128xf32> to vector<8x32xf32>
    %181 = vector.extract_strided_slice %178 {offsets = [0, 64], sizes = [8, 32], strides = [1, 1]} : vector<8x128xf32> to vector<8x32xf32>
    %182 = vector.extract_strided_slice %177 {offsets = [0, 96], sizes = [8, 32], strides = [1, 1]} : vector<8x128xf32> to vector<8x32xf32>
    %183 = arith.mulf %180, %136 : vector<8x32xf32>
    %184 = arith.mulf %179, %181 : vector<8x32xf32>
    %185 = arith.addf %183, %184 : vector<8x32xf32>
    %186 = math.tanh %185 : vector<8x32xf32>
    %187 = arith.mulf %182, %186 : vector<8x32xf32>
    %188 = arith.negf %172 : vector<8x128xf32>
    %189 = math.exp %188 : vector<8x128xf32>
    %cst_63 = arith.constant 1.000000e+00 : f32
    %190 = vector.broadcast %cst_63 : f32 to vector<8x128xf32>
    %191 = arith.addf %190, %189 : vector<8x128xf32>
    %192 = arith.divf %190, %191 : vector<8x128xf32>
    %193 = math.tanh %172 : vector<8x128xf32>
    %194 = vector.extract_strided_slice %192 {offsets = [0, 0], sizes = [8, 32], strides = [1, 1]} : vector<8x128xf32> to vector<8x32xf32>
    %195 = vector.extract_strided_slice %192 {offsets = [0, 32], sizes = [8, 32], strides = [1, 1]} : vector<8x128xf32> to vector<8x32xf32>
    %196 = vector.extract_strided_slice %193 {offsets = [0, 64], sizes = [8, 32], strides = [1, 1]} : vector<8x128xf32> to vector<8x32xf32>
    %197 = vector.extract_strided_slice %192 {offsets = [0, 96], sizes = [8, 32], strides = [1, 1]} : vector<8x128xf32> to vector<8x32xf32>
    %198 = arith.mulf %195, %151 : vector<8x32xf32>
    %199 = arith.mulf %194, %196 : vector<8x32xf32>
    %200 = arith.addf %198, %199 : vector<8x32xf32>
    %201 = math.tanh %200 : vector<8x32xf32>
    %202 = arith.mulf %197, %201 : vector<8x32xf32>
    %203 = arith.index_cast %c3_i32 : i32 to index
    %c0_64 = arith.constant 0 : index
    %c0_65 = arith.constant 0 : index
    %204 = vector.load %arg15[%203, %c0_64, %c0_65] : memref<8x8x32xf32, #tpu.memory_space<vmem>>, vector<1x8x32xf32>
    %205 = vector.shape_cast %204 : vector<1x8x32xf32> to vector<8x32xf32>
    %206 = vector.shape_cast %187 : vector<8x32xf32> to vector<1x8x32xf32>
    tpu.vector_store %arg15[%203, %c0_64, %c0_65], %206 {strides = array<i32>} : memref<8x8x32xf32, #tpu.memory_space<vmem>>, vector<1x8x32xf32>,
    %207 = arith.index_cast %162 : i32 to index
    %c0_66 = arith.constant 0 : index
    %c0_67 = arith.constant 0 : index
    %208 = vector.load %arg16[%207, %c0_66, %c0_67] : memref<8x8x32xf32, #tpu.memory_space<vmem>>, vector<1x8x32xf32>
    %209 = vector.shape_cast %208 : vector<1x8x32xf32> to vector<8x32xf32>
    %210 = vector.shape_cast %202 : vector<8x32xf32> to vector<1x8x32xf32>
    tpu.vector_store %arg16[%207, %c0_66, %c0_67], %210 {strides = array<i32>} : memref<8x8x32xf32, #tpu.memory_space<vmem>>, vector<1x8x32xf32>,
    %c4_i32 = arith.constant 4 : i32
    %c7_i32_68 = arith.constant 7 : i32
    %211 = arith.subi %c7_i32_68, %c4_i32 : i32
    %212 = arith.index_cast %c4_i32 : i32 to index
    %c0_69 = arith.constant 0 : index
    %c0_70 = arith.constant 0 : index
    %213 = vector.load %arg13[%212, %c0_69, %c0_70] : memref<8x8x128xf32, #tpu.memory_space<vmem>>, vector<1x8x128xf32>
    %214 = vector.shape_cast %213 : vector<1x8x128xf32> to vector<8x128xf32>
    %cst_71 = arith.constant dense<0.000000e+00> : vector<8x128xf32>
    %215 = tpu.matmul %187, %12, %cst_71 {dimension_numbers = #tpu.dot_dimension_numbers<[1], [0], [0], [1], [0, 0, 1, 1], [], []>} : vector<8x32xf32>, vector<32x128xf32>, vector<8x128xf32> -> vector<8x128xf32>
    %216 = arith.addf %214, %215 : vector<8x128xf32>
    %217 = arith.index_cast %211 : i32 to index
    %c0_72 = arith.constant 0 : index
    %c0_73 = arith.constant 0 : index
    %218 = vector.load %arg14[%217, %c0_72, %c0_73] : memref<8x8x128xf32, #tpu.memory_space<vmem>>, vector<1x8x128xf32>
    %219 = vector.shape_cast %218 : vector<1x8x128xf32> to vector<8x128xf32>
    %cst_74 = arith.constant dense<0.000000e+00> : vector<8x128xf32>
    %220 = tpu.matmul %202, %13, %cst_74 {dimension_numbers = #tpu.dot_dimension_numbers<[1], [0], [0], [1], [0, 0, 1, 1], [], []>} : vector<8x32xf32>, vector<32x128xf32>, vector<8x128xf32> -> vector<8x128xf32>
    %221 = arith.addf %219, %220 : vector<8x128xf32>
    %222 = arith.negf %216 : vector<8x128xf32>
    %223 = math.exp %222 : vector<8x128xf32>
    %cst_75 = arith.constant 1.000000e+00 : f32
    %224 = vector.broadcast %cst_75 : f32 to vector<8x128xf32>
    %225 = arith.addf %224, %223 : vector<8x128xf32>
    %226 = arith.divf %224, %225 : vector<8x128xf32>
    %227 = math.tanh %216 : vector<8x128xf32>
    %228 = vector.extract_strided_slice %226 {offsets = [0, 0], sizes = [8, 32], strides = [1, 1]} : vector<8x128xf32> to vector<8x32xf32>
    %229 = vector.extract_strided_slice %226 {offsets = [0, 32], sizes = [8, 32], strides = [1, 1]} : vector<8x128xf32> to vector<8x32xf32>
    %230 = vector.extract_strided_slice %227 {offsets = [0, 64], sizes = [8, 32], strides = [1, 1]} : vector<8x128xf32> to vector<8x32xf32>
    %231 = vector.extract_strided_slice %226 {offsets = [0, 96], sizes = [8, 32], strides = [1, 1]} : vector<8x128xf32> to vector<8x32xf32>
    %232 = arith.mulf %229, %185 : vector<8x32xf32>
    %233 = arith.mulf %228, %230 : vector<8x32xf32>
    %234 = arith.addf %232, %233 : vector<8x32xf32>
    %235 = math.tanh %234 : vector<8x32xf32>
    %236 = arith.mulf %231, %235 : vector<8x32xf32>
    %237 = arith.negf %221 : vector<8x128xf32>
    %238 = math.exp %237 : vector<8x128xf32>
    %cst_76 = arith.constant 1.000000e+00 : f32
    %239 = vector.broadcast %cst_76 : f32 to vector<8x128xf32>
    %240 = arith.addf %239, %238 : vector<8x128xf32>
    %241 = arith.divf %239, %240 : vector<8x128xf32>
    %242 = math.tanh %221 : vector<8x128xf32>
    %243 = vector.extract_strided_slice %241 {offsets = [0, 0], sizes = [8, 32], strides = [1, 1]} : vector<8x128xf32> to vector<8x32xf32>
    %244 = vector.extract_strided_slice %241 {offsets = [0, 32], sizes = [8, 32], strides = [1, 1]} : vector<8x128xf32> to vector<8x32xf32>
    %245 = vector.extract_strided_slice %242 {offsets = [0, 64], sizes = [8, 32], strides = [1, 1]} : vector<8x128xf32> to vector<8x32xf32>
    %246 = vector.extract_strided_slice %241 {offsets = [0, 96], sizes = [8, 32], strides = [1, 1]} : vector<8x128xf32> to vector<8x32xf32>
    %247 = arith.mulf %244, %200 : vector<8x32xf32>
    %248 = arith.mulf %243, %245 : vector<8x32xf32>
    %249 = arith.addf %247, %248 : vector<8x32xf32>
    %250 = math.tanh %249 : vector<8x32xf32>
    %251 = arith.mulf %246, %250 : vector<8x32xf32>
    %252 = arith.index_cast %c4_i32 : i32 to index
    %c0_77 = arith.constant 0 : index
    %c0_78 = arith.constant 0 : index
    %253 = vector.load %arg15[%252, %c0_77, %c0_78] : memref<8x8x32xf32, #tpu.memory_space<vmem>>, vector<1x8x32xf32>
    %254 = vector.shape_cast %253 : vector<1x8x32xf32> to vector<8x32xf32>
    %255 = vector.shape_cast %236 : vector<8x32xf32> to vector<1x8x32xf32>
    tpu.vector_store %arg15[%252, %c0_77, %c0_78], %255 {strides = array<i32>} : memref<8x8x32xf32, #tpu.memory_space<vmem>>, vector<1x8x32xf32>,
    %256 = arith.index_cast %211 : i32 to index
    %c0_79 = arith.constant 0 : index
    %c0_80 = arith.constant 0 : index
    %257 = vector.load %arg16[%256, %c0_79, %c0_80] : memref<8x8x32xf32, #tpu.memory_space<vmem>>, vector<1x8x32xf32>
    %258 = vector.shape_cast %257 : vector<1x8x32xf32> to vector<8x32xf32>
    %259 = vector.shape_cast %251 : vector<8x32xf32> to vector<1x8x32xf32>
    tpu.vector_store %arg16[%256, %c0_79, %c0_80], %259 {strides = array<i32>} : memref<8x8x32xf32, #tpu.memory_space<vmem>>, vector<1x8x32xf32>,
    %c5_i32 = arith.constant 5 : i32
    %c7_i32_81 = arith.constant 7 : i32
    %260 = arith.subi %c7_i32_81, %c5_i32 : i32
    %261 = arith.index_cast %c5_i32 : i32 to index
    %c0_82 = arith.constant 0 : index
    %c0_83 = arith.constant 0 : index
    %262 = vector.load %arg13[%261, %c0_82, %c0_83] : memref<8x8x128xf32, #tpu.memory_space<vmem>>, vector<1x8x128xf32>
    %263 = vector.shape_cast %262 : vector<1x8x128xf32> to vector<8x128xf32>
    %cst_84 = arith.constant dense<0.000000e+00> : vector<8x128xf32>
    %264 = tpu.matmul %236, %12, %cst_84 {dimension_numbers = #tpu.dot_dimension_numbers<[1], [0], [0], [1], [0, 0, 1, 1], [], []>} : vector<8x32xf32>, vector<32x128xf32>, vector<8x128xf32> -> vector<8x128xf32>
    %265 = arith.addf %263, %264 : vector<8x128xf32>
    %266 = arith.index_cast %260 : i32 to index
    %c0_85 = arith.constant 0 : index
    %c0_86 = arith.constant 0 : index
    %267 = vector.load %arg14[%266, %c0_85, %c0_86] : memref<8x8x128xf32, #tpu.memory_space<vmem>>, vector<1x8x128xf32>
    %268 = vector.shape_cast %267 : vector<1x8x128xf32> to vector<8x128xf32>
    %cst_87 = arith.constant dense<0.000000e+00> : vector<8x128xf32>
    %269 = tpu.matmul %251, %13, %cst_87 {dimension_numbers = #tpu.dot_dimension_numbers<[1], [0], [0], [1], [0, 0, 1, 1], [], []>} : vector<8x32xf32>, vector<32x128xf32>, vector<8x128xf32> -> vector<8x128xf32>
    %270 = arith.addf %268, %269 : vector<8x128xf32>
    %271 = arith.negf %265 : vector<8x128xf32>
    %272 = math.exp %271 : vector<8x128xf32>
    %cst_88 = arith.constant 1.000000e+00 : f32
    %273 = vector.broadcast %cst_88 : f32 to vector<8x128xf32>
    %274 = arith.addf %273, %272 : vector<8x128xf32>
    %275 = arith.divf %273, %274 : vector<8x128xf32>
    %276 = math.tanh %265 : vector<8x128xf32>
    %277 = vector.extract_strided_slice %275 {offsets = [0, 0], sizes = [8, 32], strides = [1, 1]} : vector<8x128xf32> to vector<8x32xf32>
    %278 = vector.extract_strided_slice %275 {offsets = [0, 32], sizes = [8, 32], strides = [1, 1]} : vector<8x128xf32> to vector<8x32xf32>
    %279 = vector.extract_strided_slice %276 {offsets = [0, 64], sizes = [8, 32], strides = [1, 1]} : vector<8x128xf32> to vector<8x32xf32>
    %280 = vector.extract_strided_slice %275 {offsets = [0, 96], sizes = [8, 32], strides = [1, 1]} : vector<8x128xf32> to vector<8x32xf32>
    %281 = arith.mulf %278, %234 : vector<8x32xf32>
    %282 = arith.mulf %277, %279 : vector<8x32xf32>
    %283 = arith.addf %281, %282 : vector<8x32xf32>
    %284 = math.tanh %283 : vector<8x32xf32>
    %285 = arith.mulf %280, %284 : vector<8x32xf32>
    %286 = arith.negf %270 : vector<8x128xf32>
    %287 = math.exp %286 : vector<8x128xf32>
    %cst_89 = arith.constant 1.000000e+00 : f32
    %288 = vector.broadcast %cst_89 : f32 to vector<8x128xf32>
    %289 = arith.addf %288, %287 : vector<8x128xf32>
    %290 = arith.divf %288, %289 : vector<8x128xf32>
    %291 = math.tanh %270 : vector<8x128xf32>
    %292 = vector.extract_strided_slice %290 {offsets = [0, 0], sizes = [8, 32], strides = [1, 1]} : vector<8x128xf32> to vector<8x32xf32>
    %293 = vector.extract_strided_slice %290 {offsets = [0, 32], sizes = [8, 32], strides = [1, 1]} : vector<8x128xf32> to vector<8x32xf32>
    %294 = vector.extract_strided_slice %291 {offsets = [0, 64], sizes = [8, 32], strides = [1, 1]} : vector<8x128xf32> to vector<8x32xf32>
    %295 = vector.extract_strided_slice %290 {offsets = [0, 96], sizes = [8, 32], strides = [1, 1]} : vector<8x128xf32> to vector<8x32xf32>
    %296 = arith.mulf %293, %249 : vector<8x32xf32>
    %297 = arith.mulf %292, %294 : vector<8x32xf32>
    %298 = arith.addf %296, %297 : vector<8x32xf32>
    %299 = math.tanh %298 : vector<8x32xf32>
    %300 = arith.mulf %295, %299 : vector<8x32xf32>
    %301 = arith.index_cast %c5_i32 : i32 to index
    %c0_90 = arith.constant 0 : index
    %c0_91 = arith.constant 0 : index
    %302 = vector.load %arg15[%301, %c0_90, %c0_91] : memref<8x8x32xf32, #tpu.memory_space<vmem>>, vector<1x8x32xf32>
    %303 = vector.shape_cast %302 : vector<1x8x32xf32> to vector<8x32xf32>
    %304 = vector.shape_cast %285 : vector<8x32xf32> to vector<1x8x32xf32>
    tpu.vector_store %arg15[%301, %c0_90, %c0_91], %304 {strides = array<i32>} : memref<8x8x32xf32, #tpu.memory_space<vmem>>, vector<1x8x32xf32>,
    %305 = arith.index_cast %260 : i32 to index
    %c0_92 = arith.constant 0 : index
    %c0_93 = arith.constant 0 : index
    %306 = vector.load %arg16[%305, %c0_92, %c0_93] : memref<8x8x32xf32, #tpu.memory_space<vmem>>, vector<1x8x32xf32>
    %307 = vector.shape_cast %306 : vector<1x8x32xf32> to vector<8x32xf32>
    %308 = vector.shape_cast %300 : vector<8x32xf32> to vector<1x8x32xf32>
    tpu.vector_store %arg16[%305, %c0_92, %c0_93], %308 {strides = array<i32>} : memref<8x8x32xf32, #tpu.memory_space<vmem>>, vector<1x8x32xf32>,
    %c6_i32 = arith.constant 6 : i32
    %c7_i32_94 = arith.constant 7 : i32
    %309 = arith.subi %c7_i32_94, %c6_i32 : i32
    %310 = arith.index_cast %c6_i32 : i32 to index
    %c0_95 = arith.constant 0 : index
    %c0_96 = arith.constant 0 : index
    %311 = vector.load %arg13[%310, %c0_95, %c0_96] : memref<8x8x128xf32, #tpu.memory_space<vmem>>, vector<1x8x128xf32>
    %312 = vector.shape_cast %311 : vector<1x8x128xf32> to vector<8x128xf32>
    %cst_97 = arith.constant dense<0.000000e+00> : vector<8x128xf32>
    %313 = tpu.matmul %285, %12, %cst_97 {dimension_numbers = #tpu.dot_dimension_numbers<[1], [0], [0], [1], [0, 0, 1, 1], [], []>} : vector<8x32xf32>, vector<32x128xf32>, vector<8x128xf32> -> vector<8x128xf32>
    %314 = arith.addf %312, %313 : vector<8x128xf32>
    %315 = arith.index_cast %309 : i32 to index
    %c0_98 = arith.constant 0 : index
    %c0_99 = arith.constant 0 : index
    %316 = vector.load %arg14[%315, %c0_98, %c0_99] : memref<8x8x128xf32, #tpu.memory_space<vmem>>, vector<1x8x128xf32>
    %317 = vector.shape_cast %316 : vector<1x8x128xf32> to vector<8x128xf32>
    %cst_100 = arith.constant dense<0.000000e+00> : vector<8x128xf32>
    %318 = tpu.matmul %300, %13, %cst_100 {dimension_numbers = #tpu.dot_dimension_numbers<[1], [0], [0], [1], [0, 0, 1, 1], [], []>} : vector<8x32xf32>, vector<32x128xf32>, vector<8x128xf32> -> vector<8x128xf32>
    %319 = arith.addf %317, %318 : vector<8x128xf32>
    %320 = arith.negf %314 : vector<8x128xf32>
    %321 = math.exp %320 : vector<8x128xf32>
    %cst_101 = arith.constant 1.000000e+00 : f32
    %322 = vector.broadcast %cst_101 : f32 to vector<8x128xf32>
    %323 = arith.addf %322, %321 : vector<8x128xf32>
    %324 = arith.divf %322, %323 : vector<8x128xf32>
    %325 = math.tanh %314 : vector<8x128xf32>
    %326 = vector.extract_strided_slice %324 {offsets = [0, 0], sizes = [8, 32], strides = [1, 1]} : vector<8x128xf32> to vector<8x32xf32>
    %327 = vector.extract_strided_slice %324 {offsets = [0, 32], sizes = [8, 32], strides = [1, 1]} : vector<8x128xf32> to vector<8x32xf32>
    %328 = vector.extract_strided_slice %325 {offsets = [0, 64], sizes = [8, 32], strides = [1, 1]} : vector<8x128xf32> to vector<8x32xf32>
    %329 = vector.extract_strided_slice %324 {offsets = [0, 96], sizes = [8, 32], strides = [1, 1]} : vector<8x128xf32> to vector<8x32xf32>
    %330 = arith.mulf %327, %283 : vector<8x32xf32>
    %331 = arith.mulf %326, %328 : vector<8x32xf32>
    %332 = arith.addf %330, %331 : vector<8x32xf32>
    %333 = math.tanh %332 : vector<8x32xf32>
    %334 = arith.mulf %329, %333 : vector<8x32xf32>
    %335 = arith.negf %319 : vector<8x128xf32>
    %336 = math.exp %335 : vector<8x128xf32>
    %cst_102 = arith.constant 1.000000e+00 : f32
    %337 = vector.broadcast %cst_102 : f32 to vector<8x128xf32>
    %338 = arith.addf %337, %336 : vector<8x128xf32>
    %339 = arith.divf %337, %338 : vector<8x128xf32>
    %340 = math.tanh %319 : vector<8x128xf32>
    %341 = vector.extract_strided_slice %339 {offsets = [0, 0], sizes = [8, 32], strides = [1, 1]} : vector<8x128xf32> to vector<8x32xf32>
    %342 = vector.extract_strided_slice %339 {offsets = [0, 32], sizes = [8, 32], strides = [1, 1]} : vector<8x128xf32> to vector<8x32xf32>
    %343 = vector.extract_strided_slice %340 {offsets = [0, 64], sizes = [8, 32], strides = [1, 1]} : vector<8x128xf32> to vector<8x32xf32>
    %344 = vector.extract_strided_slice %339 {offsets = [0, 96], sizes = [8, 32], strides = [1, 1]} : vector<8x128xf32> to vector<8x32xf32>
    %345 = arith.mulf %342, %298 : vector<8x32xf32>
    %346 = arith.mulf %341, %343 : vector<8x32xf32>
    %347 = arith.addf %345, %346 : vector<8x32xf32>
    %348 = math.tanh %347 : vector<8x32xf32>
    %349 = arith.mulf %344, %348 : vector<8x32xf32>
    %350 = arith.index_cast %c6_i32 : i32 to index
    %c0_103 = arith.constant 0 : index
    %c0_104 = arith.constant 0 : index
    %351 = vector.load %arg15[%350, %c0_103, %c0_104] : memref<8x8x32xf32, #tpu.memory_space<vmem>>, vector<1x8x32xf32>
    %352 = vector.shape_cast %351 : vector<1x8x32xf32> to vector<8x32xf32>
    %353 = vector.shape_cast %334 : vector<8x32xf32> to vector<1x8x32xf32>
    tpu.vector_store %arg15[%350, %c0_103, %c0_104], %353 {strides = array<i32>} : memref<8x8x32xf32, #tpu.memory_space<vmem>>, vector<1x8x32xf32>,
    %354 = arith.index_cast %309 : i32 to index
    %c0_105 = arith.constant 0 : index
    %c0_106 = arith.constant 0 : index
    %355 = vector.load %arg16[%354, %c0_105, %c0_106] : memref<8x8x32xf32, #tpu.memory_space<vmem>>, vector<1x8x32xf32>
    %356 = vector.shape_cast %355 : vector<1x8x32xf32> to vector<8x32xf32>
    %357 = vector.shape_cast %349 : vector<8x32xf32> to vector<1x8x32xf32>
    tpu.vector_store %arg16[%354, %c0_105, %c0_106], %357 {strides = array<i32>} : memref<8x8x32xf32, #tpu.memory_space<vmem>>, vector<1x8x32xf32>,
    %c7_i32_107 = arith.constant 7 : i32
    %c7_i32_108 = arith.constant 7 : i32
    %358 = arith.subi %c7_i32_108, %c7_i32_107 : i32
    %359 = arith.index_cast %c7_i32_107 : i32 to index
    %c0_109 = arith.constant 0 : index
    %c0_110 = arith.constant 0 : index
    %360 = vector.load %arg13[%359, %c0_109, %c0_110] : memref<8x8x128xf32, #tpu.memory_space<vmem>>, vector<1x8x128xf32>
    %361 = vector.shape_cast %360 : vector<1x8x128xf32> to vector<8x128xf32>
    %cst_111 = arith.constant dense<0.000000e+00> : vector<8x128xf32>
    %362 = tpu.matmul %334, %12, %cst_111 {dimension_numbers = #tpu.dot_dimension_numbers<[1], [0], [0], [1], [0, 0, 1, 1], [], []>} : vector<8x32xf32>, vector<32x128xf32>, vector<8x128xf32> -> vector<8x128xf32>
    %363 = arith.addf %361, %362 : vector<8x128xf32>
    %364 = arith.index_cast %358 : i32 to index
    %c0_112 = arith.constant 0 : index
    %c0_113 = arith.constant 0 : index
    %365 = vector.load %arg14[%364, %c0_112, %c0_113] : memref<8x8x128xf32, #tpu.memory_space<vmem>>, vector<1x8x128xf32>
    %366 = vector.shape_cast %365 : vector<1x8x128xf32> to vector<8x128xf32>
    %cst_114 = arith.constant dense<0.000000e+00> : vector<8x128xf32>
    %367 = tpu.matmul %349, %13, %cst_114 {dimension_numbers = #tpu.dot_dimension_numbers<[1], [0], [0], [1], [0, 0, 1, 1], [], []>} : vector<8x32xf32>, vector<32x128xf32>, vector<8x128xf32> -> vector<8x128xf32>
    %368 = arith.addf %366, %367 : vector<8x128xf32>
    %369 = arith.negf %363 : vector<8x128xf32>
    %370 = math.exp %369 : vector<8x128xf32>
    %cst_115 = arith.constant 1.000000e+00 : f32
    %371 = vector.broadcast %cst_115 : f32 to vector<8x128xf32>
    %372 = arith.addf %371, %370 : vector<8x128xf32>
    %373 = arith.divf %371, %372 : vector<8x128xf32>
    %374 = math.tanh %363 : vector<8x128xf32>
    %375 = vector.extract_strided_slice %373 {offsets = [0, 0], sizes = [8, 32], strides = [1, 1]} : vector<8x128xf32> to vector<8x32xf32>
    %376 = vector.extract_strided_slice %373 {offsets = [0, 32], sizes = [8, 32], strides = [1, 1]} : vector<8x128xf32> to vector<8x32xf32>
    %377 = vector.extract_strided_slice %374 {offsets = [0, 64], sizes = [8, 32], strides = [1, 1]} : vector<8x128xf32> to vector<8x32xf32>
    %378 = vector.extract_strided_slice %373 {offsets = [0, 96], sizes = [8, 32], strides = [1, 1]} : vector<8x128xf32> to vector<8x32xf32>
    %379 = arith.mulf %376, %332 : vector<8x32xf32>
    %380 = arith.mulf %375, %377 : vector<8x32xf32>
    %381 = arith.addf %379, %380 : vector<8x32xf32>
    %382 = math.tanh %381 : vector<8x32xf32>
    %383 = arith.mulf %378, %382 : vector<8x32xf32>
    %384 = arith.negf %368 : vector<8x128xf32>
    %385 = math.exp %384 : vector<8x128xf32>
    %cst_116 = arith.constant 1.000000e+00 : f32
    %386 = vector.broadcast %cst_116 : f32 to vector<8x128xf32>
    %387 = arith.addf %386, %385 : vector<8x128xf32>
    %388 = arith.divf %386, %387 : vector<8x128xf32>
    %389 = math.tanh %368 : vector<8x128xf32>
    %390 = vector.extract_strided_slice %388 {offsets = [0, 0], sizes = [8, 32], strides = [1, 1]} : vector<8x128xf32> to vector<8x32xf32>
    %391 = vector.extract_strided_slice %388 {offsets = [0, 32], sizes = [8, 32], strides = [1, 1]} : vector<8x128xf32> to vector<8x32xf32>
    %392 = vector.extract_strided_slice %389 {offsets = [0, 64], sizes = [8, 32], strides = [1, 1]} : vector<8x128xf32> to vector<8x32xf32>
    %393 = vector.extract_strided_slice %388 {offsets = [0, 96], sizes = [8, 32], strides = [1, 1]} : vector<8x128xf32> to vector<8x32xf32>
    %394 = arith.mulf %391, %347 : vector<8x32xf32>
    %395 = arith.mulf %390, %392 : vector<8x32xf32>
    %396 = arith.addf %394, %395 : vector<8x32xf32>
    %397 = math.tanh %396 : vector<8x32xf32>
    %398 = arith.mulf %393, %397 : vector<8x32xf32>
    %399 = arith.index_cast %c7_i32_107 : i32 to index
    %c0_117 = arith.constant 0 : index
    %c0_118 = arith.constant 0 : index
    %400 = vector.load %arg15[%399, %c0_117, %c0_118] : memref<8x8x32xf32, #tpu.memory_space<vmem>>, vector<1x8x32xf32>
    %401 = vector.shape_cast %400 : vector<1x8x32xf32> to vector<8x32xf32>
    %402 = vector.shape_cast %383 : vector<8x32xf32> to vector<1x8x32xf32>
    tpu.vector_store %arg15[%399, %c0_117, %c0_118], %402 {strides = array<i32>} : memref<8x8x32xf32, #tpu.memory_space<vmem>>, vector<1x8x32xf32>,
    %403 = arith.index_cast %358 : i32 to index
    %c0_119 = arith.constant 0 : index
    %c0_120 = arith.constant 0 : index
    %404 = vector.load %arg16[%403, %c0_119, %c0_120] : memref<8x8x32xf32, #tpu.memory_space<vmem>>, vector<1x8x32xf32>
    %405 = vector.shape_cast %404 : vector<1x8x32xf32> to vector<8x32xf32>
    %406 = vector.shape_cast %398 : vector<8x32xf32> to vector<1x8x32xf32>
    tpu.vector_store %arg16[%403, %c0_119, %c0_120], %406 {strides = array<i32>} : memref<8x8x32xf32, #tpu.memory_space<vmem>>, vector<1x8x32xf32>,
    %c8_i32 = arith.constant 8 : i32
    %c0_121 = arith.constant 0 : index
    %c0_122 = arith.constant 0 : index
    %c0_123 = arith.constant 0 : index
    %407 = vector.load %arg15[%c0_121, %c0_122, %c0_123] : memref<8x8x32xf32, #tpu.memory_space<vmem>>, vector<8x8x32xf32>
    %408 = vector.shape_cast %407 : vector<8x8x32xf32> to vector<64x32xf32>
    %c0_124 = arith.constant 0 : index
    %c0_125 = arith.constant 0 : index
    %c0_126 = arith.constant 0 : index
    %409 = vector.load %arg16[%c0_124, %c0_125, %c0_126] : memref<8x8x32xf32, #tpu.memory_space<vmem>>, vector<8x8x32xf32>
    %410 = vector.shape_cast %409 : vector<8x8x32xf32> to vector<64x32xf32>
    %c0_127 = arith.constant 0 : index
    %c0_128 = arith.constant 0 : index
    %411 = vector.load %arg6[%c0_127, %c0_128] : memref<64x256xf32, #tpu.memory_space<vmem>>, vector<32x256xf32>
    %cst_129 = arith.constant dense<0.000000e+00> : vector<64x256xf32>
    %412 = tpu.matmul %408, %411, %cst_129 {dimension_numbers = #tpu.dot_dimension_numbers<[1], [0], [0], [1], [0, 0, 1, 1], [], []>} : vector<64x32xf32>, vector<32x256xf32>, vector<64x256xf32> -> vector<64x256xf32>
    %c32 = arith.constant 32 : index
    %c0_130 = arith.constant 0 : index
    %413 = vector.load %arg6[%c32, %c0_130] : memref<64x256xf32, #tpu.memory_space<vmem>>, vector<32x256xf32>
    %cst_131 = arith.constant dense<0.000000e+00> : vector<64x256xf32>
    %414 = tpu.matmul %410, %413, %cst_131 {dimension_numbers = #tpu.dot_dimension_numbers<[1], [0], [0], [1], [0, 0, 1, 1], [], []>} : vector<64x32xf32>, vector<32x256xf32>, vector<64x256xf32> -> vector<64x256xf32>
    %415 = arith.addf %412, %414 : vector<64x256xf32>
    %c0_132 = arith.constant 0 : index
    %c0_133 = arith.constant 0 : index
    %416 = vector.load %arg9[%c0_132, %c0_133] : memref<1x256xf32, #tpu.memory_space<vmem>>, vector<1x256xf32>
    %417 = vector.broadcast %416 : vector<1x256xf32> to vector<64x256xf32>
    %418 = arith.addf %415, %417 : vector<64x256xf32>
    %419 = vector.shape_cast %418 : vector<64x256xf32> to vector<8x8x256xf32>
    %420 = vector.extract_strided_slice %419 {offsets = [0, 0, 0], sizes = [8, 8, 128], strides = [1, 1, 1]} : vector<8x8x256xf32> to vector<8x8x128xf32>
    %c0_134 = arith.constant 0 : index
    %c0_135 = arith.constant 0 : index
    %c0_136 = arith.constant 0 : index
    %421 = vector.load %arg13[%c0_134, %c0_135, %c0_136] : memref<8x8x128xf32, #tpu.memory_space<vmem>>, vector<8x8x128xf32>
    tpu.vector_store %arg13[%c0_134, %c0_135, %c0_136], %420 {strides = array<i32>} : memref<8x8x128xf32, #tpu.memory_space<vmem>>, vector<8x8x128xf32>,
    %422 = vector.extract_strided_slice %419 {offsets = [0, 0, 128], sizes = [8, 8, 128], strides = [1, 1, 1]} : vector<8x8x256xf32> to vector<8x8x128xf32>
    %c0_137 = arith.constant 0 : index
    %c0_138 = arith.constant 0 : index
    %c0_139 = arith.constant 0 : index
    %423 = vector.load %arg14[%c0_137, %c0_138, %c0_139] : memref<8x8x128xf32, #tpu.memory_space<vmem>>, vector<8x8x128xf32>
    tpu.vector_store %arg14[%c0_137, %c0_138, %c0_139], %422 {strides = array<i32>} : memref<8x8x128xf32, #tpu.memory_space<vmem>>, vector<8x8x128xf32>,
    %c0_140 = arith.constant 0 : index
    %c0_141 = arith.constant 0 : index
    %424 = vector.load %arg7[%c0_140, %c0_141] : memref<32x128xf32, #tpu.memory_space<vmem>>, vector<32x128xf32>
    %c0_142 = arith.constant 0 : index
    %c0_143 = arith.constant 0 : index
    %425 = vector.load %arg8[%c0_142, %c0_143] : memref<32x128xf32, #tpu.memory_space<vmem>>, vector<32x128xf32>
    %cst_144 = arith.constant 0.000000e+00 : f32
    %426 = vector.broadcast %cst_144 : f32 to vector<8x32xf32>
    %c0_i32_145 = arith.constant 0 : i32
    %c7_i32_146 = arith.constant 7 : i32
    %427 = arith.subi %c7_i32_146, %c0_i32_145 : i32
    %428 = arith.index_cast %c0_i32_145 : i32 to index
    %c0_147 = arith.constant 0 : index
    %c0_148 = arith.constant 0 : index
    %429 = vector.load %arg13[%428, %c0_147, %c0_148] : memref<8x8x128xf32, #tpu.memory_space<vmem>>, vector<1x8x128xf32>
    %430 = vector.shape_cast %429 : vector<1x8x128xf32> to vector<8x128xf32>
    %cst_149 = arith.constant dense<0.000000e+00> : vector<8x128xf32>
    %431 = tpu.matmul %426, %424, %cst_149 {dimension_numbers = #tpu.dot_dimension_numbers<[1], [0], [0], [1], [0, 0, 1, 1], [], []>} : vector<8x32xf32>, vector<32x128xf32>, vector<8x128xf32> -> vector<8x128xf32>
    %432 = arith.addf %430, %431 : vector<8x128xf32>
    %433 = arith.index_cast %427 : i32 to index
    %c0_150 = arith.constant 0 : index
    %c0_151 = arith.constant 0 : index
    %434 = vector.load %arg14[%433, %c0_150, %c0_151] : memref<8x8x128xf32, #tpu.memory_space<vmem>>, vector<1x8x128xf32>
    %435 = vector.shape_cast %434 : vector<1x8x128xf32> to vector<8x128xf32>
    %cst_152 = arith.constant dense<0.000000e+00> : vector<8x128xf32>
    %436 = tpu.matmul %426, %425, %cst_152 {dimension_numbers = #tpu.dot_dimension_numbers<[1], [0], [0], [1], [0, 0, 1, 1], [], []>} : vector<8x32xf32>, vector<32x128xf32>, vector<8x128xf32> -> vector<8x128xf32>
    %437 = arith.addf %435, %436 : vector<8x128xf32>
    %438 = arith.negf %432 : vector<8x128xf32>
    %439 = math.exp %438 : vector<8x128xf32>
    %cst_153 = arith.constant 1.000000e+00 : f32
    %440 = vector.broadcast %cst_153 : f32 to vector<8x128xf32>
    %441 = arith.addf %440, %439 : vector<8x128xf32>
    %442 = arith.divf %440, %441 : vector<8x128xf32>
    %443 = math.tanh %432 : vector<8x128xf32>
    %444 = vector.extract_strided_slice %442 {offsets = [0, 0], sizes = [8, 32], strides = [1, 1]} : vector<8x128xf32> to vector<8x32xf32>
    %445 = vector.extract_strided_slice %442 {offsets = [0, 32], sizes = [8, 32], strides = [1, 1]} : vector<8x128xf32> to vector<8x32xf32>
    %446 = vector.extract_strided_slice %443 {offsets = [0, 64], sizes = [8, 32], strides = [1, 1]} : vector<8x128xf32> to vector<8x32xf32>
    %447 = vector.extract_strided_slice %442 {offsets = [0, 96], sizes = [8, 32], strides = [1, 1]} : vector<8x128xf32> to vector<8x32xf32>
    %448 = arith.mulf %445, %426 : vector<8x32xf32>
    %449 = arith.mulf %444, %446 : vector<8x32xf32>
    %450 = arith.addf %448, %449 : vector<8x32xf32>
    %451 = math.tanh %450 : vector<8x32xf32>
    %452 = arith.mulf %447, %451 : vector<8x32xf32>
    %453 = arith.negf %437 : vector<8x128xf32>
    %454 = math.exp %453 : vector<8x128xf32>
    %cst_154 = arith.constant 1.000000e+00 : f32
    %455 = vector.broadcast %cst_154 : f32 to vector<8x128xf32>
    %456 = arith.addf %455, %454 : vector<8x128xf32>
    %457 = arith.divf %455, %456 : vector<8x128xf32>
    %458 = math.tanh %437 : vector<8x128xf32>
    %459 = vector.extract_strided_slice %457 {offsets = [0, 0], sizes = [8, 32], strides = [1, 1]} : vector<8x128xf32> to vector<8x32xf32>
    %460 = vector.extract_strided_slice %457 {offsets = [0, 32], sizes = [8, 32], strides = [1, 1]} : vector<8x128xf32> to vector<8x32xf32>
    %461 = vector.extract_strided_slice %458 {offsets = [0, 64], sizes = [8, 32], strides = [1, 1]} : vector<8x128xf32> to vector<8x32xf32>
    %462 = vector.extract_strided_slice %457 {offsets = [0, 96], sizes = [8, 32], strides = [1, 1]} : vector<8x128xf32> to vector<8x32xf32>
    %463 = arith.mulf %460, %426 : vector<8x32xf32>
    %464 = arith.mulf %459, %461 : vector<8x32xf32>
    %465 = arith.addf %463, %464 : vector<8x32xf32>
    %466 = math.tanh %465 : vector<8x32xf32>
    %467 = arith.mulf %462, %466 : vector<8x32xf32>
    %468 = arith.index_cast %c0_i32_145 : i32 to index
    %c0_155 = arith.constant 0 : index
    %c0_156 = arith.constant 0 : index
    %469 = vector.load %arg15[%468, %c0_155, %c0_156] : memref<8x8x32xf32, #tpu.memory_space<vmem>>, vector<1x8x32xf32>
    %470 = vector.shape_cast %469 : vector<1x8x32xf32> to vector<8x32xf32>
    %471 = vector.shape_cast %452 : vector<8x32xf32> to vector<1x8x32xf32>
    tpu.vector_store %arg15[%468, %c0_155, %c0_156], %471 {strides = array<i32>} : memref<8x8x32xf32, #tpu.memory_space<vmem>>, vector<1x8x32xf32>,
    %472 = arith.index_cast %427 : i32 to index
    %c0_157 = arith.constant 0 : index
    %c0_158 = arith.constant 0 : index
    %473 = vector.load %arg16[%472, %c0_157, %c0_158] : memref<8x8x32xf32, #tpu.memory_space<vmem>>, vector<1x8x32xf32>
    %474 = vector.shape_cast %473 : vector<1x8x32xf32> to vector<8x32xf32>
    %475 = vector.shape_cast %467 : vector<8x32xf32> to vector<1x8x32xf32>
    tpu.vector_store %arg16[%472, %c0_157, %c0_158], %475 {strides = array<i32>} : memref<8x8x32xf32, #tpu.memory_space<vmem>>, vector<1x8x32xf32>,
    %c1_i32_159 = arith.constant 1 : i32
    %c7_i32_160 = arith.constant 7 : i32
    %476 = arith.subi %c7_i32_160, %c1_i32_159 : i32
    %477 = arith.index_cast %c1_i32_159 : i32 to index
    %c0_161 = arith.constant 0 : index
    %c0_162 = arith.constant 0 : index
    %478 = vector.load %arg13[%477, %c0_161, %c0_162] : memref<8x8x128xf32, #tpu.memory_space<vmem>>, vector<1x8x128xf32>
    %479 = vector.shape_cast %478 : vector<1x8x128xf32> to vector<8x128xf32>
    %cst_163 = arith.constant dense<0.000000e+00> : vector<8x128xf32>
    %480 = tpu.matmul %452, %424, %cst_163 {dimension_numbers = #tpu.dot_dimension_numbers<[1], [0], [0], [1], [0, 0, 1, 1], [], []>} : vector<8x32xf32>, vector<32x128xf32>, vector<8x128xf32> -> vector<8x128xf32>
    %481 = arith.addf %479, %480 : vector<8x128xf32>
    %482 = arith.index_cast %476 : i32 to index
    %c0_164 = arith.constant 0 : index
    %c0_165 = arith.constant 0 : index
    %483 = vector.load %arg14[%482, %c0_164, %c0_165] : memref<8x8x128xf32, #tpu.memory_space<vmem>>, vector<1x8x128xf32>
    %484 = vector.shape_cast %483 : vector<1x8x128xf32> to vector<8x128xf32>
    %cst_166 = arith.constant dense<0.000000e+00> : vector<8x128xf32>
    %485 = tpu.matmul %467, %425, %cst_166 {dimension_numbers = #tpu.dot_dimension_numbers<[1], [0], [0], [1], [0, 0, 1, 1], [], []>} : vector<8x32xf32>, vector<32x128xf32>, vector<8x128xf32> -> vector<8x128xf32>
    %486 = arith.addf %484, %485 : vector<8x128xf32>
    %487 = arith.negf %481 : vector<8x128xf32>
    %488 = math.exp %487 : vector<8x128xf32>
    %cst_167 = arith.constant 1.000000e+00 : f32
    %489 = vector.broadcast %cst_167 : f32 to vector<8x128xf32>
    %490 = arith.addf %489, %488 : vector<8x128xf32>
    %491 = arith.divf %489, %490 : vector<8x128xf32>
    %492 = math.tanh %481 : vector<8x128xf32>
    %493 = vector.extract_strided_slice %491 {offsets = [0, 0], sizes = [8, 32], strides = [1, 1]} : vector<8x128xf32> to vector<8x32xf32>
    %494 = vector.extract_strided_slice %491 {offsets = [0, 32], sizes = [8, 32], strides = [1, 1]} : vector<8x128xf32> to vector<8x32xf32>
    %495 = vector.extract_strided_slice %492 {offsets = [0, 64], sizes = [8, 32], strides = [1, 1]} : vector<8x128xf32> to vector<8x32xf32>
    %496 = vector.extract_strided_slice %491 {offsets = [0, 96], sizes = [8, 32], strides = [1, 1]} : vector<8x128xf32> to vector<8x32xf32>
    %497 = arith.mulf %494, %450 : vector<8x32xf32>
    %498 = arith.mulf %493, %495 : vector<8x32xf32>
    %499 = arith.addf %497, %498 : vector<8x32xf32>
    %500 = math.tanh %499 : vector<8x32xf32>
    %501 = arith.mulf %496, %500 : vector<8x32xf32>
    %502 = arith.negf %486 : vector<8x128xf32>
    %503 = math.exp %502 : vector<8x128xf32>
    %cst_168 = arith.constant 1.000000e+00 : f32
    %504 = vector.broadcast %cst_168 : f32 to vector<8x128xf32>
    %505 = arith.addf %504, %503 : vector<8x128xf32>
    %506 = arith.divf %504, %505 : vector<8x128xf32>
    %507 = math.tanh %486 : vector<8x128xf32>
    %508 = vector.extract_strided_slice %506 {offsets = [0, 0], sizes = [8, 32], strides = [1, 1]} : vector<8x128xf32> to vector<8x32xf32>
    %509 = vector.extract_strided_slice %506 {offsets = [0, 32], sizes = [8, 32], strides = [1, 1]} : vector<8x128xf32> to vector<8x32xf32>
    %510 = vector.extract_strided_slice %507 {offsets = [0, 64], sizes = [8, 32], strides = [1, 1]} : vector<8x128xf32> to vector<8x32xf32>
    %511 = vector.extract_strided_slice %506 {offsets = [0, 96], sizes = [8, 32], strides = [1, 1]} : vector<8x128xf32> to vector<8x32xf32>
    %512 = arith.mulf %509, %465 : vector<8x32xf32>
    %513 = arith.mulf %508, %510 : vector<8x32xf32>
    %514 = arith.addf %512, %513 : vector<8x32xf32>
    %515 = math.tanh %514 : vector<8x32xf32>
    %516 = arith.mulf %511, %515 : vector<8x32xf32>
    %517 = arith.index_cast %c1_i32_159 : i32 to index
    %c0_169 = arith.constant 0 : index
    %c0_170 = arith.constant 0 : index
    %518 = vector.load %arg15[%517, %c0_169, %c0_170] : memref<8x8x32xf32, #tpu.memory_space<vmem>>, vector<1x8x32xf32>
    %519 = vector.shape_cast %518 : vector<1x8x32xf32> to vector<8x32xf32>
    %520 = vector.shape_cast %501 : vector<8x32xf32> to vector<1x8x32xf32>
    tpu.vector_store %arg15[%517, %c0_169, %c0_170], %520 {strides = array<i32>} : memref<8x8x32xf32, #tpu.memory_space<vmem>>, vector<1x8x32xf32>,
    %521 = arith.index_cast %476 : i32 to index
    %c0_171 = arith.constant 0 : index
    %c0_172 = arith.constant 0 : index
    %522 = vector.load %arg16[%521, %c0_171, %c0_172] : memref<8x8x32xf32, #tpu.memory_space<vmem>>, vector<1x8x32xf32>
    %523 = vector.shape_cast %522 : vector<1x8x32xf32> to vector<8x32xf32>
    %524 = vector.shape_cast %516 : vector<8x32xf32> to vector<1x8x32xf32>
    tpu.vector_store %arg16[%521, %c0_171, %c0_172], %524 {strides = array<i32>} : memref<8x8x32xf32, #tpu.memory_space<vmem>>, vector<1x8x32xf32>,
    %c2_i32_173 = arith.constant 2 : i32
    %c7_i32_174 = arith.constant 7 : i32
    %525 = arith.subi %c7_i32_174, %c2_i32_173 : i32
    %526 = arith.index_cast %c2_i32_173 : i32 to index
    %c0_175 = arith.constant 0 : index
    %c0_176 = arith.constant 0 : index
    %527 = vector.load %arg13[%526, %c0_175, %c0_176] : memref<8x8x128xf32, #tpu.memory_space<vmem>>, vector<1x8x128xf32>
    %528 = vector.shape_cast %527 : vector<1x8x128xf32> to vector<8x128xf32>
    %cst_177 = arith.constant dense<0.000000e+00> : vector<8x128xf32>
    %529 = tpu.matmul %501, %424, %cst_177 {dimension_numbers = #tpu.dot_dimension_numbers<[1], [0], [0], [1], [0, 0, 1, 1], [], []>} : vector<8x32xf32>, vector<32x128xf32>, vector<8x128xf32> -> vector<8x128xf32>
    %530 = arith.addf %528, %529 : vector<8x128xf32>
    %531 = arith.index_cast %525 : i32 to index
    %c0_178 = arith.constant 0 : index
    %c0_179 = arith.constant 0 : index
    %532 = vector.load %arg14[%531, %c0_178, %c0_179] : memref<8x8x128xf32, #tpu.memory_space<vmem>>, vector<1x8x128xf32>
    %533 = vector.shape_cast %532 : vector<1x8x128xf32> to vector<8x128xf32>
    %cst_180 = arith.constant dense<0.000000e+00> : vector<8x128xf32>
    %534 = tpu.matmul %516, %425, %cst_180 {dimension_numbers = #tpu.dot_dimension_numbers<[1], [0], [0], [1], [0, 0, 1, 1], [], []>} : vector<8x32xf32>, vector<32x128xf32>, vector<8x128xf32> -> vector<8x128xf32>
    %535 = arith.addf %533, %534 : vector<8x128xf32>
    %536 = arith.negf %530 : vector<8x128xf32>
    %537 = math.exp %536 : vector<8x128xf32>
    %cst_181 = arith.constant 1.000000e+00 : f32
    %538 = vector.broadcast %cst_181 : f32 to vector<8x128xf32>
    %539 = arith.addf %538, %537 : vector<8x128xf32>
    %540 = arith.divf %538, %539 : vector<8x128xf32>
    %541 = math.tanh %530 : vector<8x128xf32>
    %542 = vector.extract_strided_slice %540 {offsets = [0, 0], sizes = [8, 32], strides = [1, 1]} : vector<8x128xf32> to vector<8x32xf32>
    %543 = vector.extract_strided_slice %540 {offsets = [0, 32], sizes = [8, 32], strides = [1, 1]} : vector<8x128xf32> to vector<8x32xf32>
    %544 = vector.extract_strided_slice %541 {offsets = [0, 64], sizes = [8, 32], strides = [1, 1]} : vector<8x128xf32> to vector<8x32xf32>
    %545 = vector.extract_strided_slice %540 {offsets = [0, 96], sizes = [8, 32], strides = [1, 1]} : vector<8x128xf32> to vector<8x32xf32>
    %546 = arith.mulf %543, %499 : vector<8x32xf32>
    %547 = arith.mulf %542, %544 : vector<8x32xf32>
    %548 = arith.addf %546, %547 : vector<8x32xf32>
    %549 = math.tanh %548 : vector<8x32xf32>
    %550 = arith.mulf %545, %549 : vector<8x32xf32>
    %551 = arith.negf %535 : vector<8x128xf32>
    %552 = math.exp %551 : vector<8x128xf32>
    %cst_182 = arith.constant 1.000000e+00 : f32
    %553 = vector.broadcast %cst_182 : f32 to vector<8x128xf32>
    %554 = arith.addf %553, %552 : vector<8x128xf32>
    %555 = arith.divf %553, %554 : vector<8x128xf32>
    %556 = math.tanh %535 : vector<8x128xf32>
    %557 = vector.extract_strided_slice %555 {offsets = [0, 0], sizes = [8, 32], strides = [1, 1]} : vector<8x128xf32> to vector<8x32xf32>
    %558 = vector.extract_strided_slice %555 {offsets = [0, 32], sizes = [8, 32], strides = [1, 1]} : vector<8x128xf32> to vector<8x32xf32>
    %559 = vector.extract_strided_slice %556 {offsets = [0, 64], sizes = [8, 32], strides = [1, 1]} : vector<8x128xf32> to vector<8x32xf32>
    %560 = vector.extract_strided_slice %555 {offsets = [0, 96], sizes = [8, 32], strides = [1, 1]} : vector<8x128xf32> to vector<8x32xf32>
    %561 = arith.mulf %558, %514 : vector<8x32xf32>
    %562 = arith.mulf %557, %559 : vector<8x32xf32>
    %563 = arith.addf %561, %562 : vector<8x32xf32>
    %564 = math.tanh %563 : vector<8x32xf32>
    %565 = arith.mulf %560, %564 : vector<8x32xf32>
    %566 = arith.index_cast %c2_i32_173 : i32 to index
    %c0_183 = arith.constant 0 : index
    %c0_184 = arith.constant 0 : index
    %567 = vector.load %arg15[%566, %c0_183, %c0_184] : memref<8x8x32xf32, #tpu.memory_space<vmem>>, vector<1x8x32xf32>
    %568 = vector.shape_cast %567 : vector<1x8x32xf32> to vector<8x32xf32>
    %569 = vector.shape_cast %550 : vector<8x32xf32> to vector<1x8x32xf32>
    tpu.vector_store %arg15[%566, %c0_183, %c0_184], %569 {strides = array<i32>} : memref<8x8x32xf32, #tpu.memory_space<vmem>>, vector<1x8x32xf32>,
    %570 = arith.index_cast %525 : i32 to index
    %c0_185 = arith.constant 0 : index
    %c0_186 = arith.constant 0 : index
    %571 = vector.load %arg16[%570, %c0_185, %c0_186] : memref<8x8x32xf32, #tpu.memory_space<vmem>>, vector<1x8x32xf32>
    %572 = vector.shape_cast %571 : vector<1x8x32xf32> to vector<8x32xf32>
    %573 = vector.shape_cast %565 : vector<8x32xf32> to vector<1x8x32xf32>
    tpu.vector_store %arg16[%570, %c0_185, %c0_186], %573 {strides = array<i32>} : memref<8x8x32xf32, #tpu.memory_space<vmem>>, vector<1x8x32xf32>,
    %c3_i32_187 = arith.constant 3 : i32
    %c7_i32_188 = arith.constant 7 : i32
    %574 = arith.subi %c7_i32_188, %c3_i32_187 : i32
    %575 = arith.index_cast %c3_i32_187 : i32 to index
    %c0_189 = arith.constant 0 : index
    %c0_190 = arith.constant 0 : index
    %576 = vector.load %arg13[%575, %c0_189, %c0_190] : memref<8x8x128xf32, #tpu.memory_space<vmem>>, vector<1x8x128xf32>
    %577 = vector.shape_cast %576 : vector<1x8x128xf32> to vector<8x128xf32>
    %cst_191 = arith.constant dense<0.000000e+00> : vector<8x128xf32>
    %578 = tpu.matmul %550, %424, %cst_191 {dimension_numbers = #tpu.dot_dimension_numbers<[1], [0], [0], [1], [0, 0, 1, 1], [], []>} : vector<8x32xf32>, vector<32x128xf32>, vector<8x128xf32> -> vector<8x128xf32>
    %579 = arith.addf %577, %578 : vector<8x128xf32>
    %580 = arith.index_cast %574 : i32 to index
    %c0_192 = arith.constant 0 : index
    %c0_193 = arith.constant 0 : index
    %581 = vector.load %arg14[%580, %c0_192, %c0_193] : memref<8x8x128xf32, #tpu.memory_space<vmem>>, vector<1x8x128xf32>
    %582 = vector.shape_cast %581 : vector<1x8x128xf32> to vector<8x128xf32>
    %cst_194 = arith.constant dense<0.000000e+00> : vector<8x128xf32>
    %583 = tpu.matmul %565, %425, %cst_194 {dimension_numbers = #tpu.dot_dimension_numbers<[1], [0], [0], [1], [0, 0, 1, 1], [], []>} : vector<8x32xf32>, vector<32x128xf32>, vector<8x128xf32> -> vector<8x128xf32>
    %584 = arith.addf %582, %583 : vector<8x128xf32>
    %585 = arith.negf %579 : vector<8x128xf32>
    %586 = math.exp %585 : vector<8x128xf32>
    %cst_195 = arith.constant 1.000000e+00 : f32
    %587 = vector.broadcast %cst_195 : f32 to vector<8x128xf32>
    %588 = arith.addf %587, %586 : vector<8x128xf32>
    %589 = arith.divf %587, %588 : vector<8x128xf32>
    %590 = math.tanh %579 : vector<8x128xf32>
    %591 = vector.extract_strided_slice %589 {offsets = [0, 0], sizes = [8, 32], strides = [1, 1]} : vector<8x128xf32> to vector<8x32xf32>
    %592 = vector.extract_strided_slice %589 {offsets = [0, 32], sizes = [8, 32], strides = [1, 1]} : vector<8x128xf32> to vector<8x32xf32>
    %593 = vector.extract_strided_slice %590 {offsets = [0, 64], sizes = [8, 32], strides = [1, 1]} : vector<8x128xf32> to vector<8x32xf32>
    %594 = vector.extract_strided_slice %589 {offsets = [0, 96], sizes = [8, 32], strides = [1, 1]} : vector<8x128xf32> to vector<8x32xf32>
    %595 = arith.mulf %592, %548 : vector<8x32xf32>
    %596 = arith.mulf %591, %593 : vector<8x32xf32>
    %597 = arith.addf %595, %596 : vector<8x32xf32>
    %598 = math.tanh %597 : vector<8x32xf32>
    %599 = arith.mulf %594, %598 : vector<8x32xf32>
    %600 = arith.negf %584 : vector<8x128xf32>
    %601 = math.exp %600 : vector<8x128xf32>
    %cst_196 = arith.constant 1.000000e+00 : f32
    %602 = vector.broadcast %cst_196 : f32 to vector<8x128xf32>
    %603 = arith.addf %602, %601 : vector<8x128xf32>
    %604 = arith.divf %602, %603 : vector<8x128xf32>
    %605 = math.tanh %584 : vector<8x128xf32>
    %606 = vector.extract_strided_slice %604 {offsets = [0, 0], sizes = [8, 32], strides = [1, 1]} : vector<8x128xf32> to vector<8x32xf32>
    %607 = vector.extract_strided_slice %604 {offsets = [0, 32], sizes = [8, 32], strides = [1, 1]} : vector<8x128xf32> to vector<8x32xf32>
    %608 = vector.extract_strided_slice %605 {offsets = [0, 64], sizes = [8, 32], strides = [1, 1]} : vector<8x128xf32> to vector<8x32xf32>
    %609 = vector.extract_strided_slice %604 {offsets = [0, 96], sizes = [8, 32], strides = [1, 1]} : vector<8x128xf32> to vector<8x32xf32>
    %610 = arith.mulf %607, %563 : vector<8x32xf32>
    %611 = arith.mulf %606, %608 : vector<8x32xf32>
    %612 = arith.addf %610, %611 : vector<8x32xf32>
    %613 = math.tanh %612 : vector<8x32xf32>
    %614 = arith.mulf %609, %613 : vector<8x32xf32>
    %615 = arith.index_cast %c3_i32_187 : i32 to index
    %c0_197 = arith.constant 0 : index
    %c0_198 = arith.constant 0 : index
    %616 = vector.load %arg15[%615, %c0_197, %c0_198] : memref<8x8x32xf32, #tpu.memory_space<vmem>>, vector<1x8x32xf32>
    %617 = vector.shape_cast %616 : vector<1x8x32xf32> to vector<8x32xf32>
    %618 = vector.shape_cast %599 : vector<8x32xf32> to vector<1x8x32xf32>
    tpu.vector_store %arg15[%615, %c0_197, %c0_198], %618 {strides = array<i32>} : memref<8x8x32xf32, #tpu.memory_space<vmem>>, vector<1x8x32xf32>,
    %619 = arith.index_cast %574 : i32 to index
    %c0_199 = arith.constant 0 : index
    %c0_200 = arith.constant 0 : index
    %620 = vector.load %arg16[%619, %c0_199, %c0_200] : memref<8x8x32xf32, #tpu.memory_space<vmem>>, vector<1x8x32xf32>
    %621 = vector.shape_cast %620 : vector<1x8x32xf32> to vector<8x32xf32>
    %622 = vector.shape_cast %614 : vector<8x32xf32> to vector<1x8x32xf32>
    tpu.vector_store %arg16[%619, %c0_199, %c0_200], %622 {strides = array<i32>} : memref<8x8x32xf32, #tpu.memory_space<vmem>>, vector<1x8x32xf32>,
    %c4_i32_201 = arith.constant 4 : i32
    %c7_i32_202 = arith.constant 7 : i32
    %623 = arith.subi %c7_i32_202, %c4_i32_201 : i32
    %624 = arith.index_cast %c4_i32_201 : i32 to index
    %c0_203 = arith.constant 0 : index
    %c0_204 = arith.constant 0 : index
    %625 = vector.load %arg13[%624, %c0_203, %c0_204] : memref<8x8x128xf32, #tpu.memory_space<vmem>>, vector<1x8x128xf32>
    %626 = vector.shape_cast %625 : vector<1x8x128xf32> to vector<8x128xf32>
    %cst_205 = arith.constant dense<0.000000e+00> : vector<8x128xf32>
    %627 = tpu.matmul %599, %424, %cst_205 {dimension_numbers = #tpu.dot_dimension_numbers<[1], [0], [0], [1], [0, 0, 1, 1], [], []>} : vector<8x32xf32>, vector<32x128xf32>, vector<8x128xf32> -> vector<8x128xf32>
    %628 = arith.addf %626, %627 : vector<8x128xf32>
    %629 = arith.index_cast %623 : i32 to index
    %c0_206 = arith.constant 0 : index
    %c0_207 = arith.constant 0 : index
    %630 = vector.load %arg14[%629, %c0_206, %c0_207] : memref<8x8x128xf32, #tpu.memory_space<vmem>>, vector<1x8x128xf32>
    %631 = vector.shape_cast %630 : vector<1x8x128xf32> to vector<8x128xf32>
    %cst_208 = arith.constant dense<0.000000e+00> : vector<8x128xf32>
    %632 = tpu.matmul %614, %425, %cst_208 {dimension_numbers = #tpu.dot_dimension_numbers<[1], [0], [0], [1], [0, 0, 1, 1], [], []>} : vector<8x32xf32>, vector<32x128xf32>, vector<8x128xf32> -> vector<8x128xf32>
    %633 = arith.addf %631, %632 : vector<8x128xf32>
    %634 = arith.negf %628 : vector<8x128xf32>
    %635 = math.exp %634 : vector<8x128xf32>
    %cst_209 = arith.constant 1.000000e+00 : f32
    %636 = vector.broadcast %cst_209 : f32 to vector<8x128xf32>
    %637 = arith.addf %636, %635 : vector<8x128xf32>
    %638 = arith.divf %636, %637 : vector<8x128xf32>
    %639 = math.tanh %628 : vector<8x128xf32>
    %640 = vector.extract_strided_slice %638 {offsets = [0, 0], sizes = [8, 32], strides = [1, 1]} : vector<8x128xf32> to vector<8x32xf32>
    %641 = vector.extract_strided_slice %638 {offsets = [0, 32], sizes = [8, 32], strides = [1, 1]} : vector<8x128xf32> to vector<8x32xf32>
    %642 = vector.extract_strided_slice %639 {offsets = [0, 64], sizes = [8, 32], strides = [1, 1]} : vector<8x128xf32> to vector<8x32xf32>
    %643 = vector.extract_strided_slice %638 {offsets = [0, 96], sizes = [8, 32], strides = [1, 1]} : vector<8x128xf32> to vector<8x32xf32>
    %644 = arith.mulf %641, %597 : vector<8x32xf32>
    %645 = arith.mulf %640, %642 : vector<8x32xf32>
    %646 = arith.addf %644, %645 : vector<8x32xf32>
    %647 = math.tanh %646 : vector<8x32xf32>
    %648 = arith.mulf %643, %647 : vector<8x32xf32>
    %649 = arith.negf %633 : vector<8x128xf32>
    %650 = math.exp %649 : vector<8x128xf32>
    %cst_210 = arith.constant 1.000000e+00 : f32
    %651 = vector.broadcast %cst_210 : f32 to vector<8x128xf32>
    %652 = arith.addf %651, %650 : vector<8x128xf32>
    %653 = arith.divf %651, %652 : vector<8x128xf32>
    %654 = math.tanh %633 : vector<8x128xf32>
    %655 = vector.extract_strided_slice %653 {offsets = [0, 0], sizes = [8, 32], strides = [1, 1]} : vector<8x128xf32> to vector<8x32xf32>
    %656 = vector.extract_strided_slice %653 {offsets = [0, 32], sizes = [8, 32], strides = [1, 1]} : vector<8x128xf32> to vector<8x32xf32>
    %657 = vector.extract_strided_slice %654 {offsets = [0, 64], sizes = [8, 32], strides = [1, 1]} : vector<8x128xf32> to vector<8x32xf32>
    %658 = vector.extract_strided_slice %653 {offsets = [0, 96], sizes = [8, 32], strides = [1, 1]} : vector<8x128xf32> to vector<8x32xf32>
    %659 = arith.mulf %656, %612 : vector<8x32xf32>
    %660 = arith.mulf %655, %657 : vector<8x32xf32>
    %661 = arith.addf %659, %660 : vector<8x32xf32>
    %662 = math.tanh %661 : vector<8x32xf32>
    %663 = arith.mulf %658, %662 : vector<8x32xf32>
    %664 = arith.index_cast %c4_i32_201 : i32 to index
    %c0_211 = arith.constant 0 : index
    %c0_212 = arith.constant 0 : index
    %665 = vector.load %arg15[%664, %c0_211, %c0_212] : memref<8x8x32xf32, #tpu.memory_space<vmem>>, vector<1x8x32xf32>
    %666 = vector.shape_cast %665 : vector<1x8x32xf32> to vector<8x32xf32>
    %667 = vector.shape_cast %648 : vector<8x32xf32> to vector<1x8x32xf32>
    tpu.vector_store %arg15[%664, %c0_211, %c0_212], %667 {strides = array<i32>} : memref<8x8x32xf32, #tpu.memory_space<vmem>>, vector<1x8x32xf32>,
    %668 = arith.index_cast %623 : i32 to index
    %c0_213 = arith.constant 0 : index
    %c0_214 = arith.constant 0 : index
    %669 = vector.load %arg16[%668, %c0_213, %c0_214] : memref<8x8x32xf32, #tpu.memory_space<vmem>>, vector<1x8x32xf32>
    %670 = vector.shape_cast %669 : vector<1x8x32xf32> to vector<8x32xf32>
    %671 = vector.shape_cast %663 : vector<8x32xf32> to vector<1x8x32xf32>
    tpu.vector_store %arg16[%668, %c0_213, %c0_214], %671 {strides = array<i32>} : memref<8x8x32xf32, #tpu.memory_space<vmem>>, vector<1x8x32xf32>,
    %c5_i32_215 = arith.constant 5 : i32
    %c7_i32_216 = arith.constant 7 : i32
    %672 = arith.subi %c7_i32_216, %c5_i32_215 : i32
    %673 = arith.index_cast %c5_i32_215 : i32 to index
    %c0_217 = arith.constant 0 : index
    %c0_218 = arith.constant 0 : index
    %674 = vector.load %arg13[%673, %c0_217, %c0_218] : memref<8x8x128xf32, #tpu.memory_space<vmem>>, vector<1x8x128xf32>
    %675 = vector.shape_cast %674 : vector<1x8x128xf32> to vector<8x128xf32>
    %cst_219 = arith.constant dense<0.000000e+00> : vector<8x128xf32>
    %676 = tpu.matmul %648, %424, %cst_219 {dimension_numbers = #tpu.dot_dimension_numbers<[1], [0], [0], [1], [0, 0, 1, 1], [], []>} : vector<8x32xf32>, vector<32x128xf32>, vector<8x128xf32> -> vector<8x128xf32>
    %677 = arith.addf %675, %676 : vector<8x128xf32>
    %678 = arith.index_cast %672 : i32 to index
    %c0_220 = arith.constant 0 : index
    %c0_221 = arith.constant 0 : index
    %679 = vector.load %arg14[%678, %c0_220, %c0_221] : memref<8x8x128xf32, #tpu.memory_space<vmem>>, vector<1x8x128xf32>
    %680 = vector.shape_cast %679 : vector<1x8x128xf32> to vector<8x128xf32>
    %cst_222 = arith.constant dense<0.000000e+00> : vector<8x128xf32>
    %681 = tpu.matmul %663, %425, %cst_222 {dimension_numbers = #tpu.dot_dimension_numbers<[1], [0], [0], [1], [0, 0, 1, 1], [], []>} : vector<8x32xf32>, vector<32x128xf32>, vector<8x128xf32> -> vector<8x128xf32>
    %682 = arith.addf %680, %681 : vector<8x128xf32>
    %683 = arith.negf %677 : vector<8x128xf32>
    %684 = math.exp %683 : vector<8x128xf32>
    %cst_223 = arith.constant 1.000000e+00 : f32
    %685 = vector.broadcast %cst_223 : f32 to vector<8x128xf32>
    %686 = arith.addf %685, %684 : vector<8x128xf32>
    %687 = arith.divf %685, %686 : vector<8x128xf32>
    %688 = math.tanh %677 : vector<8x128xf32>
    %689 = vector.extract_strided_slice %687 {offsets = [0, 0], sizes = [8, 32], strides = [1, 1]} : vector<8x128xf32> to vector<8x32xf32>
    %690 = vector.extract_strided_slice %687 {offsets = [0, 32], sizes = [8, 32], strides = [1, 1]} : vector<8x128xf32> to vector<8x32xf32>
    %691 = vector.extract_strided_slice %688 {offsets = [0, 64], sizes = [8, 32], strides = [1, 1]} : vector<8x128xf32> to vector<8x32xf32>
    %692 = vector.extract_strided_slice %687 {offsets = [0, 96], sizes = [8, 32], strides = [1, 1]} : vector<8x128xf32> to vector<8x32xf32>
    %693 = arith.mulf %690, %646 : vector<8x32xf32>
    %694 = arith.mulf %689, %691 : vector<8x32xf32>
    %695 = arith.addf %693, %694 : vector<8x32xf32>
    %696 = math.tanh %695 : vector<8x32xf32>
    %697 = arith.mulf %692, %696 : vector<8x32xf32>
    %698 = arith.negf %682 : vector<8x128xf32>
    %699 = math.exp %698 : vector<8x128xf32>
    %cst_224 = arith.constant 1.000000e+00 : f32
    %700 = vector.broadcast %cst_224 : f32 to vector<8x128xf32>
    %701 = arith.addf %700, %699 : vector<8x128xf32>
    %702 = arith.divf %700, %701 : vector<8x128xf32>
    %703 = math.tanh %682 : vector<8x128xf32>
    %704 = vector.extract_strided_slice %702 {offsets = [0, 0], sizes = [8, 32], strides = [1, 1]} : vector<8x128xf32> to vector<8x32xf32>
    %705 = vector.extract_strided_slice %702 {offsets = [0, 32], sizes = [8, 32], strides = [1, 1]} : vector<8x128xf32> to vector<8x32xf32>
    %706 = vector.extract_strided_slice %703 {offsets = [0, 64], sizes = [8, 32], strides = [1, 1]} : vector<8x128xf32> to vector<8x32xf32>
    %707 = vector.extract_strided_slice %702 {offsets = [0, 96], sizes = [8, 32], strides = [1, 1]} : vector<8x128xf32> to vector<8x32xf32>
    %708 = arith.mulf %705, %661 : vector<8x32xf32>
    %709 = arith.mulf %704, %706 : vector<8x32xf32>
    %710 = arith.addf %708, %709 : vector<8x32xf32>
    %711 = math.tanh %710 : vector<8x32xf32>
    %712 = arith.mulf %707, %711 : vector<8x32xf32>
    %713 = arith.index_cast %c5_i32_215 : i32 to index
    %c0_225 = arith.constant 0 : index
    %c0_226 = arith.constant 0 : index
    %714 = vector.load %arg15[%713, %c0_225, %c0_226] : memref<8x8x32xf32, #tpu.memory_space<vmem>>, vector<1x8x32xf32>
    %715 = vector.shape_cast %714 : vector<1x8x32xf32> to vector<8x32xf32>
    %716 = vector.shape_cast %697 : vector<8x32xf32> to vector<1x8x32xf32>
    tpu.vector_store %arg15[%713, %c0_225, %c0_226], %716 {strides = array<i32>} : memref<8x8x32xf32, #tpu.memory_space<vmem>>, vector<1x8x32xf32>,
    %717 = arith.index_cast %672 : i32 to index
    %c0_227 = arith.constant 0 : index
    %c0_228 = arith.constant 0 : index
    %718 = vector.load %arg16[%717, %c0_227, %c0_228] : memref<8x8x32xf32, #tpu.memory_space<vmem>>, vector<1x8x32xf32>
    %719 = vector.shape_cast %718 : vector<1x8x32xf32> to vector<8x32xf32>
    %720 = vector.shape_cast %712 : vector<8x32xf32> to vector<1x8x32xf32>
    tpu.vector_store %arg16[%717, %c0_227, %c0_228], %720 {strides = array<i32>} : memref<8x8x32xf32, #tpu.memory_space<vmem>>, vector<1x8x32xf32>,
    %c6_i32_229 = arith.constant 6 : i32
    %c7_i32_230 = arith.constant 7 : i32
    %721 = arith.subi %c7_i32_230, %c6_i32_229 : i32
    %722 = arith.index_cast %c6_i32_229 : i32 to index
    %c0_231 = arith.constant 0 : index
    %c0_232 = arith.constant 0 : index
    %723 = vector.load %arg13[%722, %c0_231, %c0_232] : memref<8x8x128xf32, #tpu.memory_space<vmem>>, vector<1x8x128xf32>
    %724 = vector.shape_cast %723 : vector<1x8x128xf32> to vector<8x128xf32>
    %cst_233 = arith.constant dense<0.000000e+00> : vector<8x128xf32>
    %725 = tpu.matmul %697, %424, %cst_233 {dimension_numbers = #tpu.dot_dimension_numbers<[1], [0], [0], [1], [0, 0, 1, 1], [], []>} : vector<8x32xf32>, vector<32x128xf32>, vector<8x128xf32> -> vector<8x128xf32>
    %726 = arith.addf %724, %725 : vector<8x128xf32>
    %727 = arith.index_cast %721 : i32 to index
    %c0_234 = arith.constant 0 : index
    %c0_235 = arith.constant 0 : index
    %728 = vector.load %arg14[%727, %c0_234, %c0_235] : memref<8x8x128xf32, #tpu.memory_space<vmem>>, vector<1x8x128xf32>
    %729 = vector.shape_cast %728 : vector<1x8x128xf32> to vector<8x128xf32>
    %cst_236 = arith.constant dense<0.000000e+00> : vector<8x128xf32>
    %730 = tpu.matmul %712, %425, %cst_236 {dimension_numbers = #tpu.dot_dimension_numbers<[1], [0], [0], [1], [0, 0, 1, 1], [], []>} : vector<8x32xf32>, vector<32x128xf32>, vector<8x128xf32> -> vector<8x128xf32>
    %731 = arith.addf %729, %730 : vector<8x128xf32>
    %732 = arith.negf %726 : vector<8x128xf32>
    %733 = math.exp %732 : vector<8x128xf32>
    %cst_237 = arith.constant 1.000000e+00 : f32
    %734 = vector.broadcast %cst_237 : f32 to vector<8x128xf32>
    %735 = arith.addf %734, %733 : vector<8x128xf32>
    %736 = arith.divf %734, %735 : vector<8x128xf32>
    %737 = math.tanh %726 : vector<8x128xf32>
    %738 = vector.extract_strided_slice %736 {offsets = [0, 0], sizes = [8, 32], strides = [1, 1]} : vector<8x128xf32> to vector<8x32xf32>
    %739 = vector.extract_strided_slice %736 {offsets = [0, 32], sizes = [8, 32], strides = [1, 1]} : vector<8x128xf32> to vector<8x32xf32>
    %740 = vector.extract_strided_slice %737 {offsets = [0, 64], sizes = [8, 32], strides = [1, 1]} : vector<8x128xf32> to vector<8x32xf32>
    %741 = vector.extract_strided_slice %736 {offsets = [0, 96], sizes = [8, 32], strides = [1, 1]} : vector<8x128xf32> to vector<8x32xf32>
    %742 = arith.mulf %739, %695 : vector<8x32xf32>
    %743 = arith.mulf %738, %740 : vector<8x32xf32>
    %744 = arith.addf %742, %743 : vector<8x32xf32>
    %745 = math.tanh %744 : vector<8x32xf32>
    %746 = arith.mulf %741, %745 : vector<8x32xf32>
    %747 = arith.negf %731 : vector<8x128xf32>
    %748 = math.exp %747 : vector<8x128xf32>
    %cst_238 = arith.constant 1.000000e+00 : f32
    %749 = vector.broadcast %cst_238 : f32 to vector<8x128xf32>
    %750 = arith.addf %749, %748 : vector<8x128xf32>
    %751 = arith.divf %749, %750 : vector<8x128xf32>
    %752 = math.tanh %731 : vector<8x128xf32>
    %753 = vector.extract_strided_slice %751 {offsets = [0, 0], sizes = [8, 32], strides = [1, 1]} : vector<8x128xf32> to vector<8x32xf32>
    %754 = vector.extract_strided_slice %751 {offsets = [0, 32], sizes = [8, 32], strides = [1, 1]} : vector<8x128xf32> to vector<8x32xf32>
    %755 = vector.extract_strided_slice %752 {offsets = [0, 64], sizes = [8, 32], strides = [1, 1]} : vector<8x128xf32> to vector<8x32xf32>
    %756 = vector.extract_strided_slice %751 {offsets = [0, 96], sizes = [8, 32], strides = [1, 1]} : vector<8x128xf32> to vector<8x32xf32>
    %757 = arith.mulf %754, %710 : vector<8x32xf32>
    %758 = arith.mulf %753, %755 : vector<8x32xf32>
    %759 = arith.addf %757, %758 : vector<8x32xf32>
    %760 = math.tanh %759 : vector<8x32xf32>
    %761 = arith.mulf %756, %760 : vector<8x32xf32>
    %762 = arith.index_cast %c6_i32_229 : i32 to index
    %c0_239 = arith.constant 0 : index
    %c0_240 = arith.constant 0 : index
    %763 = vector.load %arg15[%762, %c0_239, %c0_240] : memref<8x8x32xf32, #tpu.memory_space<vmem>>, vector<1x8x32xf32>
    %764 = vector.shape_cast %763 : vector<1x8x32xf32> to vector<8x32xf32>
    %765 = vector.shape_cast %746 : vector<8x32xf32> to vector<1x8x32xf32>
    tpu.vector_store %arg15[%762, %c0_239, %c0_240], %765 {strides = array<i32>} : memref<8x8x32xf32, #tpu.memory_space<vmem>>, vector<1x8x32xf32>,
    %766 = arith.index_cast %721 : i32 to index
    %c0_241 = arith.constant 0 : index
    %c0_242 = arith.constant 0 : index
    %767 = vector.load %arg16[%766, %c0_241, %c0_242] : memref<8x8x32xf32, #tpu.memory_space<vmem>>, vector<1x8x32xf32>
    %768 = vector.shape_cast %767 : vector<1x8x32xf32> to vector<8x32xf32>
    %769 = vector.shape_cast %761 : vector<8x32xf32> to vector<1x8x32xf32>
    tpu.vector_store %arg16[%766, %c0_241, %c0_242], %769 {strides = array<i32>} : memref<8x8x32xf32, #tpu.memory_space<vmem>>, vector<1x8x32xf32>,
    %c7_i32_243 = arith.constant 7 : i32
    %c7_i32_244 = arith.constant 7 : i32
    %770 = arith.subi %c7_i32_244, %c7_i32_243 : i32
    %771 = arith.index_cast %c7_i32_243 : i32 to index
    %c0_245 = arith.constant 0 : index
    %c0_246 = arith.constant 0 : index
    %772 = vector.load %arg13[%771, %c0_245, %c0_246] : memref<8x8x128xf32, #tpu.memory_space<vmem>>, vector<1x8x128xf32>
    %773 = vector.shape_cast %772 : vector<1x8x128xf32> to vector<8x128xf32>
    %cst_247 = arith.constant dense<0.000000e+00> : vector<8x128xf32>
    %774 = tpu.matmul %746, %424, %cst_247 {dimension_numbers = #tpu.dot_dimension_numbers<[1], [0], [0], [1], [0, 0, 1, 1], [], []>} : vector<8x32xf32>, vector<32x128xf32>, vector<8x128xf32> -> vector<8x128xf32>
    %775 = arith.addf %773, %774 : vector<8x128xf32>
    %776 = arith.index_cast %770 : i32 to index
    %c0_248 = arith.constant 0 : index
    %c0_249 = arith.constant 0 : index
    %777 = vector.load %arg14[%776, %c0_248, %c0_249] : memref<8x8x128xf32, #tpu.memory_space<vmem>>, vector<1x8x128xf32>
    %778 = vector.shape_cast %777 : vector<1x8x128xf32> to vector<8x128xf32>
    %cst_250 = arith.constant dense<0.000000e+00> : vector<8x128xf32>
    %779 = tpu.matmul %761, %425, %cst_250 {dimension_numbers = #tpu.dot_dimension_numbers<[1], [0], [0], [1], [0, 0, 1, 1], [], []>} : vector<8x32xf32>, vector<32x128xf32>, vector<8x128xf32> -> vector<8x128xf32>
    %780 = arith.addf %778, %779 : vector<8x128xf32>
    %781 = arith.negf %775 : vector<8x128xf32>
    %782 = math.exp %781 : vector<8x128xf32>
    %cst_251 = arith.constant 1.000000e+00 : f32
    %783 = vector.broadcast %cst_251 : f32 to vector<8x128xf32>
    %784 = arith.addf %783, %782 : vector<8x128xf32>
    %785 = arith.divf %783, %784 : vector<8x128xf32>
    %786 = math.tanh %775 : vector<8x128xf32>
    %787 = vector.extract_strided_slice %785 {offsets = [0, 0], sizes = [8, 32], strides = [1, 1]} : vector<8x128xf32> to vector<8x32xf32>
    %788 = vector.extract_strided_slice %785 {offsets = [0, 32], sizes = [8, 32], strides = [1, 1]} : vector<8x128xf32> to vector<8x32xf32>
    %789 = vector.extract_strided_slice %786 {offsets = [0, 64], sizes = [8, 32], strides = [1, 1]} : vector<8x128xf32> to vector<8x32xf32>
    %790 = vector.extract_strided_slice %785 {offsets = [0, 96], sizes = [8, 32], strides = [1, 1]} : vector<8x128xf32> to vector<8x32xf32>
    %791 = arith.mulf %788, %744 : vector<8x32xf32>
    %792 = arith.mulf %787, %789 : vector<8x32xf32>
    %793 = arith.addf %791, %792 : vector<8x32xf32>
    %794 = math.tanh %793 : vector<8x32xf32>
    %795 = arith.mulf %790, %794 : vector<8x32xf32>
    %796 = arith.negf %780 : vector<8x128xf32>
    %797 = math.exp %796 : vector<8x128xf32>
    %cst_252 = arith.constant 1.000000e+00 : f32
    %798 = vector.broadcast %cst_252 : f32 to vector<8x128xf32>
    %799 = arith.addf %798, %797 : vector<8x128xf32>
    %800 = arith.divf %798, %799 : vector<8x128xf32>
    %801 = math.tanh %780 : vector<8x128xf32>
    %802 = vector.extract_strided_slice %800 {offsets = [0, 0], sizes = [8, 32], strides = [1, 1]} : vector<8x128xf32> to vector<8x32xf32>
    %803 = vector.extract_strided_slice %800 {offsets = [0, 32], sizes = [8, 32], strides = [1, 1]} : vector<8x128xf32> to vector<8x32xf32>
    %804 = vector.extract_strided_slice %801 {offsets = [0, 64], sizes = [8, 32], strides = [1, 1]} : vector<8x128xf32> to vector<8x32xf32>
    %805 = vector.extract_strided_slice %800 {offsets = [0, 96], sizes = [8, 32], strides = [1, 1]} : vector<8x128xf32> to vector<8x32xf32>
    %806 = arith.mulf %803, %759 : vector<8x32xf32>
    %807 = arith.mulf %802, %804 : vector<8x32xf32>
    %808 = arith.addf %806, %807 : vector<8x32xf32>
    %809 = math.tanh %808 : vector<8x32xf32>
    %810 = arith.mulf %805, %809 : vector<8x32xf32>
    %811 = arith.index_cast %c7_i32_243 : i32 to index
    %c0_253 = arith.constant 0 : index
    %c0_254 = arith.constant 0 : index
    %812 = vector.load %arg15[%811, %c0_253, %c0_254] : memref<8x8x32xf32, #tpu.memory_space<vmem>>, vector<1x8x32xf32>
    %813 = vector.shape_cast %812 : vector<1x8x32xf32> to vector<8x32xf32>
    %814 = vector.shape_cast %795 : vector<8x32xf32> to vector<1x8x32xf32>
    tpu.vector_store %arg15[%811, %c0_253, %c0_254], %814 {strides = array<i32>} : memref<8x8x32xf32, #tpu.memory_space<vmem>>, vector<1x8x32xf32>,
    %815 = arith.index_cast %770 : i32 to index
    %c0_255 = arith.constant 0 : index
    %c0_256 = arith.constant 0 : index
    %816 = vector.load %arg16[%815, %c0_255, %c0_256] : memref<8x8x32xf32, #tpu.memory_space<vmem>>, vector<1x8x32xf32>
    %817 = vector.shape_cast %816 : vector<1x8x32xf32> to vector<8x32xf32>
    %818 = vector.shape_cast %810 : vector<8x32xf32> to vector<1x8x32xf32>
    tpu.vector_store %arg16[%815, %c0_255, %c0_256], %818 {strides = array<i32>} : memref<8x8x32xf32, #tpu.memory_space<vmem>>, vector<1x8x32xf32>,
    %c8_i32_257 = arith.constant 8 : i32
    %c0_258 = arith.constant 0 : index
    %c0_259 = arith.constant 0 : index
    %819 = vector.load %arg10[%c0_258, %c0_259] : memref<64x1xf32, #tpu.memory_space<vmem>>, vector<32x1xf32>
    %cst_260 = arith.constant dense<0.000000e+00> : vector<8x1xf32>
    %820 = tpu.matmul %795, %819, %cst_260 {dimension_numbers = #tpu.dot_dimension_numbers<[1], [0], [0], [1], [0, 0, 1, 1], [], []>} : vector<8x32xf32>, vector<32x1xf32>, vector<8x1xf32> -> vector<8x1xf32>
    %c7 = arith.constant 7 : index
    %c0_261 = arith.constant 0 : index
    %c0_262 = arith.constant 0 : index
    %821 = vector.load %arg16[%c7, %c0_261, %c0_262] : memref<8x8x32xf32, #tpu.memory_space<vmem>>, vector<1x8x32xf32>
    %822 = vector.shape_cast %821 : vector<1x8x32xf32> to vector<8x32xf32>
    %c32_263 = arith.constant 32 : index
    %c0_264 = arith.constant 0 : index
    %823 = vector.load %arg10[%c32_263, %c0_264] : memref<64x1xf32, #tpu.memory_space<vmem>>, vector<32x1xf32>
    %cst_265 = arith.constant dense<0.000000e+00> : vector<8x1xf32>
    %824 = tpu.matmul %822, %823, %cst_265 {dimension_numbers = #tpu.dot_dimension_numbers<[1], [0], [0], [1], [0, 0, 1, 1], [], []>} : vector<8x32xf32>, vector<32x1xf32>, vector<8x1xf32> -> vector<8x1xf32>
    %825 = arith.addf %820, %824 : vector<8x1xf32>
    %c0_266 = arith.constant 0 : index
    %c0_267 = arith.constant 0 : index
    %826 = vector.load %arg11[%c0_266, %c0_267] : memref<1x1xf32, #tpu.memory_space<vmem>>, vector<1x1xf32>
    %827 = vector.broadcast %826 : vector<1x1xf32> to vector<8x1xf32>
    %828 = arith.addf %825, %827 : vector<8x1xf32>
    %c0_268 = arith.constant 0 : index
    %c0_269 = arith.constant 0 : index
    %829 = vector.load %arg12[%c0_268, %c0_269] : memref<8x1xf32, #tpu.memory_space<vmem>>, vector<8x1xf32>
    tpu.vector_store %arg12[%c0_268, %c0_269], %828 {strides = array<i32>} : memref<8x1xf32, #tpu.memory_space<vmem>>, vector<8x1xf32>,
    return
  }
  func.func @transform_0(%arg0: i32) -> (i32, i32, i32) {
    %c0_i32 = arith.constant 0 : i32
    %c0_i32_0 = arith.constant 0 : i32
    %c0_i32_1 = arith.constant 0 : i32
    %c0_i32_2 = arith.constant 0 : i32
    return %c0_i32, %c0_i32_0, %c0_i32_1 : i32, i32, i32
  }
  func.func @transform_1(%arg0: i32) -> (i32, i32) {
    %c0_i32 = arith.constant 0 : i32
    %c0_i32_0 = arith.constant 0 : i32
    %c0_i32_1 = arith.constant 0 : i32
    return %c0_i32, %c0_i32_0 : i32, i32
  }
  func.func @transform_2(%arg0: i32) -> (i32, i32) {
    %c0_i32 = arith.constant 0 : i32
    %c0_i32_0 = arith.constant 0 : i32
    %c0_i32_1 = arith.constant 0 : i32
    return %c0_i32, %c0_i32_0 : i32, i32
  }
  func.func @transform_3(%arg0: i32) -> (i32, i32) {
    %c0_i32 = arith.constant 0 : i32
    %c0_i32_0 = arith.constant 0 : i32
    %c0_i32_1 = arith.constant 0 : i32
    return %c0_i32, %c0_i32_0 : i32, i32
  }
  func.func @transform_4(%arg0: i32) -> (i32, i32) {
    %c0_i32 = arith.constant 0 : i32
    %c0_i32_0 = arith.constant 0 : i32
    %c0_i32_1 = arith.constant 0 : i32
    return %c0_i32, %c0_i32_0 : i32, i32
  }
  func.func @transform_5(%arg0: i32) -> (i32, i32) {
    %c0_i32 = arith.constant 0 : i32
    %c0_i32_0 = arith.constant 0 : i32
    %c0_i32_1 = arith.constant 0 : i32
    return %c0_i32, %c0_i32_0 : i32, i32
  }
  func.func @transform_6(%arg0: i32) -> (i32, i32) {
    %c0_i32 = arith.constant 0 : i32
    %c0_i32_0 = arith.constant 0 : i32
    %c0_i32_1 = arith.constant 0 : i32
    return %c0_i32, %c0_i32_0 : i32, i32
  }
  func.func @transform_7(%arg0: i32) -> (i32, i32) {
    %c0_i32 = arith.constant 0 : i32
    %c0_i32_0 = arith.constant 0 : i32
    %c0_i32_1 = arith.constant 0 : i32
    return %c0_i32, %c0_i32_0 : i32, i32
  }
  func.func @transform_8(%arg0: i32) -> (i32, i32) {
    %c0_i32 = arith.constant 0 : i32
    %c0_i32_0 = arith.constant 0 : i32
    %c0_i32_1 = arith.constant 0 : i32
    return %c0_i32, %c0_i32_0 : i32, i32
  }
  func.func @transform_9(%arg0: i32) -> (i32, i32) {
    %c0_i32 = arith.constant 0 : i32
    %c0_i32_0 = arith.constant 0 : i32
    %c0_i32_1 = arith.constant 0 : i32
    return %c0_i32, %c0_i32_0 : i32, i32
  }
  func.func @transform_10(%arg0: i32) -> (i32, i32) {
    %c0_i32 = arith.constant 0 : i32
    %c0_i32_0 = arith.constant 0 : i32
    %c0_i32_1 = arith.constant 0 : i32
    return %c0_i32, %c0_i32_0 : i32, i32
  }
  func.func @transform_11(%arg0: i32) -> (i32, i32) {
    %c0_i32 = arith.constant 0 : i32
    %c0_i32_0 = arith.constant 0 : i32
    %c0_i32_1 = arith.constant 0 : i32
    return %c0_i32, %c0_i32_0 : i32, i32
  }
}

</mosaic_0001>

<llo_original>
// kernel: tpu_custom_call.1
$region0: #{tpu_custom_call.1}
  #allocation0 [shape = 'u32[]', space=smem, size = 0x4, offset = 0x4, fixed_abs, tag = 'smem constant byte address 0x4 - core index']
  #allocation1 [shape = 'u32[144,128]{1,0:T(1,128)}', space=vmem, size = 0x12000, scoped, tag = 'internal scratch']
  #allocation2 [shape = 'f32[8,8,128]{2,1,0:T(8,128)}', space=vmem, size = 0x8000, scoped, tag = 'scratch operand']
  #allocation3 [shape = 'f32[8,8,128]{2,1,0:T(8,128)}', space=vmem, size = 0x8000, scoped, tag = 'scratch operand']
  #allocation4 [shape = 'f32[8,8,32]{2,1,0:T(8,128)}', space=vmem, size = 0x8000, scoped, tag = 'scratch operand']
  #allocation5 [shape = 'f32[8,8,32]{2,1,0:T(8,128)}', space=vmem, size = 0x8000, scoped, tag = 'scratch operand']
  #allocation6 [shape = 'f32[1,1]{1,0:T(1,128)S(1)}', space=vmem, size = 0x200, scoped, tag = 'scoped memory for tpu_custom_call.1']
  %s0 = inlined_call_operand.vmem [shape: f32[8,8,4], index: 0, kind: input, shape index: {}]
  %s1 = inlined_call_operand.vmem [shape: f32[4,256], index: 1, kind: input, shape index: {}]
  %s2 = inlined_call_operand.vmem [shape: f32[32,128], index: 2, kind: input, shape index: {}]
  %s3 = inlined_call_operand.hbm [shape: f32[32,128], index: 3, kind: input, shape index: {}]
  %s4 = inlined_call_operand.vmem [shape: f32[1,256], index: 4, kind: input, shape index: {}]
  %s5 = inlined_call_operand.vmem [shape: f32[64,256], index: 5, kind: input, shape index: {}]
  %s6 = inlined_call_operand.hbm [shape: f32[32,128], index: 6, kind: input, shape index: {}]
  %s7 = inlined_call_operand.hbm [shape: f32[32,128], index: 7, kind: input, shape index: {}]
  %s8 = inlined_call_operand.vmem [shape: f32[1,256], index: 8, kind: input, shape index: {}]
  %s9 = inlined_call_operand.vmem [shape: f32[64,1], index: 9, kind: input, shape index: {}]
  %s10 = inlined_call_operand.<no memory space> [shape: f32[1,1], index: 10, kind: input, shape index: {}]
  %s11 = inlined_call_operand.vmem [shape: f32[8,1], index: 11, kind: output, shape index: {}]
  %s12 = sld [smem:[#allocation0]]
  $region66: #{tpu_custom_call.1} parent=0
    _
  %s14 = ssub.s32 1, %s12
  %s15 = scalar_select 0, %s14, %s12
  %v16 = vstv %s10
  %17 = vst [vmem:[#allocation6] sm:$0x1] %v16
  $region1: #{tpu_custom_call.1} parent=0
    #allocation7 [shape = 'u8[16384]{0}', space=vmem, size = 0x4000, scoped, tag = 'input window, operand 3, single buffered']
    #allocation8 [shape = 's32[1]{0}', space=sflag, size = 0x4, scoped, tag = 'scoped memory for tpu_custom_call.1']
    #allocation9 [shape = 'u8[16384]{0}', space=vmem, size = 0x4000, scoped, tag = 'input window, operand 6, single buffered']
    #allocation10 [shape = 's32[1]{0}', space=sflag, size = 0x4, scoped, tag = 'scoped memory for tpu_custom_call.1']
    #allocation11 [shape = 'u8[16384]{0}', space=vmem, size = 0x4000, scoped, tag = 'input window, operand 7, single buffered']
    %18 = vsyncpa [#allocation8], 0
    %19 = vsyncpa [#allocation10], 0
    // Predicated region
    $region2: #{tpu_custom_call.1} parent=1 // pred_check
      _
    $region3: #{tpu_custom_call.1} parent=1 // pred_check_branch
      %21 = sbr.rel (0) target = $region5
    $region4: #{tpu_custom_call.1} parent=1 // pred_region
      _
    $region5: #{tpu_custom_call.1} parent=1 // pred_fallthru
      _
    // Predicated region
    $region6: #{tpu_custom_call.1} parent=1 // pred_check
      _
    $region7: #{tpu_custom_call.1} parent=1 // pred_check_branch
      %23 = sbr.rel (0) target = $region9
    $region8: #{tpu_custom_call.1} parent=1 // pred_region
      _
    $region9: #{tpu_custom_call.1} parent=1 // pred_fallthru
      _
    // Predicated region
    $region10: #{tpu_custom_call.1} parent=1 // pred_check
      _
    $region11: #{tpu_custom_call.1} parent=1 // pred_check_branch
      %25 = sbr.rel (0) target = $region13
    $region12: #{tpu_custom_call.1} parent=1 // pred_region
      _
    $region13: #{tpu_custom_call.1} parent=1 // pred_fallthru
      _
    // Predicated region
    $region14: #{tpu_custom_call.1} parent=1 // pred_check
      _
    $region15: #{tpu_custom_call.1} parent=1 // pred_check_branch
      %27 = sbr.rel (0) target = $region17
    $region16: #{tpu_custom_call.1} parent=1 // pred_region
      %s29 = ssub.s32 512, 512
      %30 = vsyncadd [#allocation8], %s29
      %s31 = sshll.u32 [#allocation7], 4
      %s32 = int_to_ptr.vmem [resolvable:$true] %s31
      %37 = dma.hbm_to_vmem [thread:$0]  %s3, 512, %s32, [#allocation8], 128, 128, 8
    $region17: #{tpu_custom_call.1} parent=1 // pred_fallthru
      _
    // Predicated region
    $region18: #{tpu_custom_call.1} parent=1 // pred_check
      _
    $region19: #{tpu_custom_call.1} parent=1 // pred_check_branch
      %39 = sbr.rel (0) target = $region21
    $region20: #{tpu_custom_call.1} parent=1 // pred_region
      _
    $region21: #{tpu_custom_call.1} parent=1 // pred_fallthru
      _
    // Predicated region
    $region22: #{tpu_custom_call.1} parent=1 // pred_check
      _
    $region23: #{tpu_custom_call.1} parent=1 // pred_check_branch
      %41 = sbr.rel (0) target = $region25
    $region24: #{tpu_custom_call.1} parent=1 // pred_region
      _
    $region25: #{tpu_custom_call.1} parent=1 // pred_fallthru
      _
    // Predicated region
    $region26: #{tpu_custom_call.1} parent=1 // pred_check
      _
    $region27: #{tpu_custom_call.1} parent=1 // pred_check_branch
      %43 = sbr.rel (0) target = $region29
    $region28: #{tpu_custom_call.1} parent=1 // pred_region
      %s45 = ssub.s32 512, 512
      %46 = vsyncadd [#allocation10], %s45
      %s47 = sshll.u32 [#allocation9], 4
      %s48 = int_to_ptr.vmem [resolvable:$true] %s47
      %53 = dma.hbm_to_vmem [thread:$0]  %s6, 512, %s48, [#allocation10], 128, 128, 8
    $region29: #{tpu_custom_call.1} parent=1 // pred_fallthru
      _
    // Predicated region
    $region30: #{tpu_custom_call.1} parent=1 // pred_check
      _
    $region31: #{tpu_custom_call.1} parent=1 // pred_check_branch
      %55 = sbr.rel (0) target = $region33
    $region32: #{tpu_custom_call.1} parent=1 // pred_region
      %s57 = ssub.s32 512, 512
      %58 = vsyncadd [#allocation10], %s57
      %s59 = sshll.u32 [#allocation11], 4
      %s60 = int_to_ptr.vmem [resolvable:$true] %s59
      %65 = dma.hbm_to_vmem [thread:$0]  %s7, 512, %s60, [#allocation10], 128, 128, 8
    $region33: #{tpu_custom_call.1} parent=1 // pred_fallthru
      _
    // Predicated region
    $region34: #{tpu_custom_call.1} parent=1 // pred_check
      _
    $region35: #{tpu_custom_call.1} parent=1 // pred_check_branch
      %67 = sbr.rel (0) target = $region37
    $region36: #{tpu_custom_call.1} parent=1 // pred_region
      _
    $region37: #{tpu_custom_call.1} parent=1 // pred_fallthru
      _
    // Predicated region
    $region38: #{tpu_custom_call.1} parent=1 // pred_check
      _
    $region39: #{tpu_custom_call.1} parent=1 // pred_check_branch
      %69 = sbr.rel (0) target = $region41
    $region40: #{tpu_custom_call.1} parent=1 // pred_region
      _
    $region41: #{tpu_custom_call.1} parent=1 // pred_fallthru
      _
    // Predicated region
    $region42: #{tpu_custom_call.1} parent=1 // pred_check
      _
    $region43: #{tpu_custom_call.1} parent=1 // pred_check_branch
      %71 = sbr.rel (0) target = $region45
    $region44: #{tpu_custom_call.1} parent=1 // pred_region
      _
    $region45: #{tpu_custom_call.1} parent=1 // pred_fallthru
      _
    // Predicated region
    $region46: #{tpu_custom_call.1} parent=1 // pred_check
      _
    $region47: #{tpu_custom_call.1} parent=1 // pred_check_branch
      %73 = sbr.rel (0) target = $region49
    $region48: #{tpu_custom_call.1} parent=1 // pred_region
      %74 = dma.done [#allocation8], 512
    $region49: #{tpu_custom_call.1} parent=1 // pred_fallthru
      _
    // Predicated region
    $region50: #{tpu_custom_call.1} parent=1 // pred_check
      _
    $region51: #{tpu_custom_call.1} parent=1 // pred_check_branch
      %76 = sbr.rel (0) target = $region53
    $region52: #{tpu_custom_call.1} parent=1 // pred_region
      %77 = dma.done [#allocation10], 512
    $region53: #{tpu_custom_call.1} parent=1 // pred_fallthru
      _
    // Predicated region
    $region54: #{tpu_custom_call.1} parent=1 // pred_check
      _
    $region55: #{tpu_custom_call.1} parent=1 // pred_check_branch
      %79 = sbr.rel (0) target = $region57
    $region56: #{tpu_custom_call.1} parent=1 // pred_region
      %80 = dma.done [#allocation10], 512
    $region57: #{tpu_custom_call.1} parent=1 // pred_fallthru
      _
    %v81 = vld [vmem:[%s0] sm:$0xff]
    %v82 = vld [vmem:[%s0 + $0x8] sm:$0xff]
    %v83 = vld [vmem:[%s0 + $0x10] sm:$0xff]
    %v84 = vld [vmem:[%s0 + $0x18] sm:$0xff]
    %v85 = vld [vmem:[%s0 + $0x20] sm:$0xff]
    %v86 = vld [vmem:[%s0 + $0x28] sm:$0xff]
    %v87 = vld [vmem:[%s0 + $0x30] sm:$0xff]
    %v88 = vld [vmem:[%s0 + $0x38] sm:$0xff]
    %v89 = vld [vmem:[%s1] sm:$0xff]
    %v90 = vld [vmem:[%s4] sm:$0x3]
    %v92 = vlaneseq
    %v93 = vshrl.u32 %v92, 7
    %v94 = vsub.s32 0, %v93
    %v95 = vrot.slane %v90, %v94
    %v96 = vlaneseq
    %v97 = vshrl.u32 %v96, 7
    %v98 = vsub.s32 1, %v97
    %v99 = vrot.slane %v90, %v98
    %v103 = vcombine.high %v89, %v89
    %vm104 = vcmask 31744
    %v106 = vsel %vm104, %v81, 0
    %v109 = vsel %vm104, %v82, 0
    %v112 = vsel %vm104, %v83, 0
    %v115 = vsel %vm104, %v84, 0
    %v118 = vsel %vm104, %v85, 0
    %v121 = vsel %vm104, %v86, 0
    %v124 = vsel %vm104, %v87, 0
    %v127 = vsel %vm104, %v88, 0
    %vm129 = vcmask 1043456
    %v130 = vsel %vm129, %v89, 0
    %v132 = vsel %vm129, %v103, 0
    %134 = vmatprep.subr.mxu0 %v132
    %135 = vmatpush1.msra.mxu0 %v130
    %136 = vmatprep.subr.mxu0 0.0
    %137 = vmatpush1.msra.mxu0 0.0
    %138 = vmatprep.subr.mxu0 0.0
    %139 = vmatpush1.msra.mxu0 0.0
    %140 = vmatprep.subr.mxu0 0.0
    %141 = vmatpush1.msra.mxu0 0.0
    %142 = vmatprep.subr.mxu0 0.0
    %143 = vmatpush1.msra.mxu0 0.0
    %144 = vmatprep.subr.mxu0 0.0
    %145 = vmatpush1.msra.mxu0 0.0
    %146 = vmatprep.subr.mxu0 0.0
    %147 = vmatpush1.msra.mxu0 0.0
    %148 = vmatprep.subr.mxu0 0.0
    %149 = vmatpush1.msra.mxu0 0.0
    %150 = vmatprep.subr.mxu0 0.0
    %151 = vmatpush1.msra.mxu0 0.0
    %152 = vmatprep.subr.mxu0 0.0
    %153 = vmatpush1.msra.mxu0 0.0
    %154 = vmatprep.subr.mxu0 0.0
    %155 = vmatpush1.msra.mxu0 0.0
    %156 = vmatprep.subr.mxu0 0.0
    %157 = vmatpush1.msra.mxu0 0.0
    %158 = vmatprep.subr.mxu0 0.0
    %159 = vmatpush1.msra.mxu0 0.0
    %160 = vmatprep.subr.mxu0 0.0
    %161 = vmatpush1.msra.mxu0 0.0
    %162 = vmatprep.subr.mxu0 0.0
    %163 = vmatpush1.msra.mxu0 0.0
    %164 = vmatprep.subr.mxu0 0.0
    %165 = vmatpush1.msra.mxu0 0.0
    %166 = vmatprep.subr.mxu0 0.0
    %167 = vmatpush1.msra.mxu0 0.0
    %168 = vmatprep.subr.mxu0 0.0
    %169 = vmatpush1.msra.mxu0 0.0
    %170 = vmatprep.subr.mxu0 0.0
    %171 = vmatpush1.msra.mxu0 0.0
    %172 = vmatprep.subr.mxu0 0.0
    %173 = vmatpush1.msra.mxu0 0.0
    %174 = vmatprep.subr.mxu0 0.0
    %175 = vmatpush1.msra.mxu0 0.0
    %176 = vmatprep.subr.mxu0 0.0
    %177 = vmatpush1.msra.mxu0 0.0
    %178 = vmatprep.subr.mxu0 0.0
    %179 = vmatpush1.msra.mxu0 0.0
    %180 = vmatprep.subr.mxu0 0.0
    %181 = vmatpush1.msra.mxu0 0.0
    %182 = vmatprep.subr.mxu0 0.0
    %183 = vmatpush1.msra.mxu0 0.0
    %184 = vmatprep.subr.mxu0 0.0
    %185 = vmatpush1.msra.mxu0 0.0
    %186 = vmatprep.subr.mxu0 0.0
    %187 = vmatpush1.msra.mxu0 0.0
    %188 = vmatprep.subr.mxu0 0.0
    %189 = vmatpush1.msra.mxu0 0.0
    %190 = vmatprep.subr.mxu0 0.0
    %191 = vmatpush1.msra.mxu0 0.0
    %192 = vmatprep.subr.mxu0 0.0
    %193 = vmatpush1.msra.mxu0 0.0
    %194 = vmatprep.subr.mxu0 0.0
    %195 = vmatpush1.msra.mxu0 0.0
    %196 = vmatprep.subr.mxu0 0.0
    %197 = vmatpush1.msra.mxu0 0.0
    %198 = vmatprep.mubr.f32.mxu0 0.0
    %199 = vmatmul.mubr.f32.gmra.mrb[0].mxu0 %v106
    %v200 = vpop.f32.mrb[0].mxu0
    %v201 = vadd.f32 %v95, %v200
    %v202 = vpop.f32.mrb[0].mxu0
    %v203 = vadd.f32 %v99, %v202
    %204 = vmatprep.mubr.f32.mxu0 0.0
    %205 = vmatmul.mubr.f32.gmra.mrb[0].mxu0 %v109
    %v206 = vpop.f32.mrb[0].mxu0
    %v207 = vadd.f32 %v95, %v206
    %v208 = vpop.f32.mrb[0].mxu0
    %v209 = vadd.f32 %v99, %v208
    %210 = vmatprep.mubr.f32.mxu0 0.0
    %211 = vmatmul.mubr.f32.gmra.mrb[0].mxu0 %v112
    %v212 = vpop.f32.mrb[0].mxu0
    %v213 = vadd.f32 %v95, %v212
    %v214 = vpop.f32.mrb[0].mxu0
    %v215 = vadd.f32 %v99, %v214
    %216 = vmatprep.mubr.f32.mxu0 0.0
    %217 = vmatmul.mubr.f32.gmra.mrb[0].mxu0 %v115
    %v218 = vpop.f32.mrb[0].mxu0
    %v219 = vadd.f32 %v95, %v218
    %v220 = vpop.f32.mrb[0].mxu0
    %v221 = vadd.f32 %v99, %v220
    %222 = vmatprep.mubr.f32.mxu0 0.0
    %223 = vmatmul.mubr.f32.gmra.mrb[0].mxu0 %v118
    %v224 = vpop.f32.mrb[0].mxu0
    %v225 = vadd.f32 %v95, %v224
    %v226 = vpop.f32.mrb[0].mxu0
    %v227 = vadd.f32 %v99, %v226
    %228 = vmatprep.mubr.f32.mxu0 0.0
    %229 = vmatmul.mubr.f32.gmra.mrb[0].mxu0 %v121
    %v230 = vpop.f32.mrb[0].mxu0
    %v231 = vadd.f32 %v95, %v230
    %v232 = vpop.f32.mrb[0].mxu0
    %v233 = vadd.f32 %v99, %v232
    %234 = vmatprep.mubr.f32.mxu0 0.0
    %235 = vmatmul.mubr.f32.gmra.mrb[0].mxu0 %v124
    %v236 = vpop.f32.mrb[0].mxu0
    %v237 = vadd.f32 %v95, %v236
    %v238 = vpop.f32.mrb[0].mxu0
    %v239 = vadd.f32 %v99, %v238
    %240 = vmatprep.mubr.f32.mxu0 0.0
    %241 = vmatmul.mubr.f32.gmra.mrb[0].mxu0 %v127
    %v242 = vpop.f32.mrb[0].mxu0
    %v243 = vadd.f32 %v95, %v242
    %v244 = vpop.f32.mrb[0].mxu0
    %v245 = vadd.f32 %v99, %v244
    %246 = vdwg.mxu0
    %247 = vst [vmem:[#allocation2] sm:$0xff] %v201
    %248 = vst [vmem:[#allocation2 + $0x8] sm:$0xff] %v207
    %249 = vst [vmem:[#allocation2 + $0x10] sm:$0xff] %v213
    %250 = vst [vmem:[#allocation2 + $0x18] sm:$0xff] %v219
    %251 = vst [vmem:[#allocation2 + $0x20] sm:$0xff] %v225
    %252 = vst [vmem:[#allocation2 + $0x28] sm:$0xff] %v231
    %253 = vst [vmem:[#allocation2 + $0x30] sm:$0xff] %v237
    %254 = vst [vmem:[#allocation2 + $0x38] sm:$0xff] %v243
    %255 = vst [vmem:[#allocation3] sm:$0xff] %v203
    %256 = vst [vmem:[#allocation3 + $0x8] sm:$0xff] %v209
    %257 = vst [vmem:[#allocation3 + $0x10] sm:$0xff] %v215
    %258 = vst [vmem:[#allocation3 + $0x18] sm:$0xff] %v221
    %259 = vst [vmem:[#allocation3 + $0x20] sm:$0xff] %v227
    %260 = vst [vmem:[#allocation3 + $0x28] sm:$0xff] %v233
    %261 = vst [vmem:[#allocation3 + $0x30] sm:$0xff] %v239
    %262 = vst [vmem:[#allocation3 + $0x38] sm:$0xff] %v245
    %v263 = vld [vmem:[%s2] sm:$0xff]
    %v264 = vld [vmem:[%s2 + $0x8] sm:$0xff]
    %v265 = vld [vmem:[%s2 + $0x10] sm:$0xff]
    %v266 = vld [vmem:[%s2 + $0x18] sm:$0xff]
    %v267 = vld [vmem:[#allocation7] sm:$0xff]
    %v268 = vld [vmem:[#allocation7 + $0x8] sm:$0xff]
    %v269 = vld [vmem:[#allocation7 + $0x10] sm:$0xff]
    %v270 = vld [vmem:[#allocation7 + $0x18] sm:$0xff]
    %v271 = vld [vmem:[#allocation2] sm:$0xff]
    %vm272 = vcmask 261120
    %v274 = vsel %vm272, 0.0, 0
    %276 = vmatprep.subr.mxu0 0.0
    %277 = vmatpush1.msra.mxu0 %v263
    %278 = vmatprep.subr.mxu0 0.0
    %279 = vmatpush1.msra.mxu0 %v264
    %280 = vmatprep.subr.mxu0 0.0
    %281 = vmatpush1.msra.mxu0 %v265
    %282 = vmatprep.subr.mxu0 0.0
    %283 = vmatpush1.msra.mxu0 %v266
    %284 = vmatprep.subr.mxu0 0.0
    %285 = vmatpush1.msra.mxu0 0.0
    %286 = vmatprep.subr.mxu0 0.0
    %287 = vmatpush1.msra.mxu0 0.0
    %288 = vmatprep.subr.mxu0 0.0
    %289 = vmatpush1.msra.mxu0 0.0
    %290 = vmatprep.subr.mxu0 0.0
    %291 = vmatpush1.msra.mxu0 0.0
    %292 = vmatprep.subr.mxu0 0.0
    %293 = vmatpush1.msra.mxu0 0.0
    %294 = vmatprep.subr.mxu0 0.0
    %295 = vmatpush1.msra.mxu0 0.0
    %296 = vmatprep.subr.mxu0 0.0
    %297 = vmatpush1.msra.mxu0 0.0
    %298 = vmatprep.subr.mxu0 0.0
    %299 = vmatpush1.msra.mxu0 0.0
    %300 = vmatprep.subr.mxu0 0.0
    %301 = vmatpush1.msra.mxu0 0.0
    %302 = vmatprep.subr.mxu0 0.0
    %303 = vmatpush1.msra.mxu0 0.0
    %304 = vmatprep.subr.mxu0 0.0
    %305 = vmatpush1.msra.mxu0 0.0
    %306 = vmatprep.subr.mxu0 0.0
    %307 = vmatpush1.msra.mxu0 0.0
    %308 = vmatprep.subr.mxu0 0.0
    %309 = vmatpush1.msra.mxu0 0.0
    %310 = vmatprep.subr.mxu0 0.0
    %311 = vmatpush1.msra.mxu0 0.0
    %312 = vmatprep.subr.mxu0 0.0
    %313 = vmatpush1.msra.mxu0 0.0
    %314 = vmatprep.subr.mxu0 0.0
    %315 = vmatpush1.msra.mxu0 0.0
    %316 = vmatprep.subr.mxu0 0.0
    %317 = vmatpush1.msra.mxu0 0.0
    %318 = vmatprep.subr.mxu0 0.0
    %319 = vmatpush1.msra.mxu0 0.0
    %320 = vmatprep.subr.mxu0 0.0
    %321 = vmatpush1.msra.mxu0 0.0
    %322 = vmatprep.subr.mxu0 0.0
    %323 = vmatpush1.msra.mxu0 0.0
    %324 = vmatprep.subr.mxu0 0.0
    %325 = vmatpush1.msra.mxu0 0.0
    %326 = vmatprep.subr.mxu0 0.0
    %327 = vmatpush1.msra.mxu0 0.0
    %328 = vmatprep.subr.mxu0 0.0
    %329 = vmatpush1.msra.mxu0 0.0
    %330 = vmatprep.subr.mxu0 0.0
    %331 = vmatpush1.msra.mxu0 0.0
    %332 = vmatprep.subr.mxu0 0.0
    %333 = vmatpush1.msra.mxu0 0.0
    %334 = vmatprep.subr.mxu0 0.0
    %335 = vmatpush1.msra.mxu0 0.0
    %336 = vmatprep.subr.mxu0 0.0
    %337 = vmatpush1.msra.mxu0 0.0
    %338 = vmatprep.subr.mxu0 0.0
    %339 = vmatpush1.msra.mxu0 0.0
    %340 = vmatprep.mubr.f32.mxu0 0.0
    %341 = vmatmul.mubr.f32.gmra.mrb[0].mxu0 %v274
    %v342 = vpop.f32.mrb[0].mxu0
    %v343 = vadd.f32 0.0, %v342
    %v344 = vpop.f32.mrb[0].mxu0
    %345 = vdwg.mxu0
    %v346 = vadd.f32 %v271, %v343
    %s347 = scalar_lea.vmem [#allocation3], 56
    %v348 = vld [vmem:[%s347] sm:$0xff]
    %349 = vmatprep.subr.mxu0 0.0
    %350 = vmatpush1.msra.mxu0 %v267
    %351 = vmatprep.subr.mxu0 0.0
    %352 = vmatpush1.msra.mxu0 %v268
    %353 = vmatprep.subr.mxu0 0.0
    %354 = vmatpush1.msra.mxu0 %v269
    %355 = vmatprep.subr.mxu0 0.0
    %356 = vmatpush1.msra.mxu0 %v270
    %357 = vmatprep.subr.mxu0 0.0
    %358 = vmatpush1.msra.mxu0 0.0
    %359 = vmatprep.subr.mxu0 0.0
    %360 = vmatpush1.msra.mxu0 0.0
    %361 = vmatprep.subr.mxu0 0.0
    %362 = vmatpush1.msra.mxu0 0.0
    %363 = vmatprep.subr.mxu0 0.0
    %364 = vmatpush1.msra.mxu0 0.0
    %365 = vmatprep.subr.mxu0 0.0
    %366 = vmatpush1.msra.mxu0 0.0
    %367 = vmatprep.subr.mxu0 0.0
    %368 = vmatpush1.msra.mxu0 0.0
    %369 = vmatprep.subr.mxu0 0.0
    %370 = vmatpush1.msra.mxu0 0.0
    %371 = vmatprep.subr.mxu0 0.0
    %372 = vmatpush1.msra.mxu0 0.0
    %373 = vmatprep.subr.mxu0 0.0
    %374 = vmatpush1.msra.mxu0 0.0
    %375 = vmatprep.subr.mxu0 0.0
    %376 = vmatpush1.msra.mxu0 0.0
    %377 = vmatprep.subr.mxu0 0.0
    %378 = vmatpush1.msra.mxu0 0.0
    %379 = vmatprep.subr.mxu0 0.0
    %380 = vmatpush1.msra.mxu0 0.0
    %381 = vmatprep.subr.mxu0 0.0
    %382 = vmatpush1.msra.mxu0 0.0
    %383 = vmatprep.subr.mxu0 0.0
    %384 = vmatpush1.msra.mxu0 0.0
    %385 = vmatprep.subr.mxu0 0.0
    %386 = vmatpush1.msra.mxu0 0.0
    %387 = vmatprep.subr.mxu0 0.0
    %388 = vmatpush1.msra.mxu0 0.0
    %389 = vmatprep.subr.mxu0 0.0
    %390 = vmatpush1.msra.mxu0 0.0
    %391 = vmatprep.subr.mxu0 0.0
    %392 = vmatpush1.msra.mxu0 0.0
    %393 = vmatprep.subr.mxu0 0.0
    %394 = vmatpush1.msra.mxu0 0.0
    %395 = vmatprep.subr.mxu0 0.0
    %396 = vmatpush1.msra.mxu0 0.0
    %397 = vmatprep.subr.mxu0 0.0
    %398 = vmatpush1.msra.mxu0 0.0
    %399 = vmatprep.subr.mxu0 0.0
    %400 = vmatpush1.msra.mxu0 0.0
    %401 = vmatprep.subr.mxu0 0.0
    %402 = vmatpush1.msra.mxu0 0.0
    %403 = vmatprep.subr.mxu0 0.0
    %404 = vmatpush1.msra.mxu0 0.0
    %405 = vmatprep.subr.mxu0 0.0
    %406 = vmatpush1.msra.mxu0 0.0
    %407 = vmatprep.subr.mxu0 0.0
    %408 = vmatpush1.msra.mxu0 0.0
    %409 = vmatprep.subr.mxu0 0.0
    %410 = vmatpush1.msra.mxu0 0.0
    %411 = vmatprep.subr.mxu0 0.0
    %412 = vmatpush1.msra.mxu0 0.0
    %413 = vmatprep.mubr.f32.mxu0 0.0
    %414 = vmatmul.mubr.f32.gmra.mrb[0].mxu0 %v274
    %v415 = vpop.f32.mrb[0].mxu0
    %v416 = vadd.f32 0.0, %v415
    %v417 = vpop.f32.mrb[0].mxu0
    %418 = vdwg.mxu0
    %v419 = vadd.f32 %v348, %v416
    %v420 = vxor.u32 %v346, 2147483648
    %v421 = vmul.f32 %v420, 1.442695
    %v422 = vpow.pop %v421
    %v423 = vadd.f32 %v422, 1.0
    %v424 = vrcp.pop %v423
    %v425 = vmul.f32 1.0, %v424
    %v426 = vtanh.pop %v346
    %v427 = vmul.f32 %v425, 0.0
    %429 = vrot.lane.b32.xlu0 %v426, 64
    %v430 = vpop.permute.xlu0 %429
    %v432 = vmul.f32 %v425, %v430
    %434 = vrot.lane.b32.xlu0 %v432, 32
    %v435 = vpop.permute.xlu0 %434
    %v437 = vadd.f32 %v427, %v435
    %v438 = vtanh.pop %v437
    %440 = vrot.lane.b32.xlu0 %v438, 64
    %v441 = vpop.permute.xlu0 %440
    %v443 = vmul.f32 %v425, %v441
    %v444 = vxor.u32 %v419, 2147483648
    %v445 = vmul.f32 %v444, 1.442695
    %v446 = vpow.pop %v445
    %v447 = vadd.f32 %v446, 1.0
    %v448 = vrcp.pop %v447
    %v449 = vmul.f32 1.0, %v448
    %v450 = vtanh.pop %v419
    %v451 = vmul.f32 %v449, 0.0
    %453 = vrot.lane.b32.xlu0 %v450, 64
    %v454 = vpop.permute.xlu0 %453
    %v456 = vmul.f32 %v449, %v454
    %458 = vrot.lane.b32.xlu0 %v456, 32
    %v459 = vpop.permute.xlu0 %458
    %v461 = vadd.f32 %v451, %v459
    %v462 = vtanh.pop %v461
    %464 = vrot.lane.b32.xlu0 %v462, 64
    %v465 = vpop.permute.xlu0 %464
    %v467 = vmul.f32 %v449, %v465
    %469 = vrot.lane.b32.xlu0 %v443, 32
    %v470 = vpop.permute.xlu0 %469
    %472 = vst.msk [vmem:[#allocation4] sm:$0xff] %vm272, %v470
    %474 = vrot.lane.b32.xlu0 %v467, 32
    %v475 = vpop.permute.xlu0 %474
    %s477 = scalar_lea.vmem [#allocation5], 56
    %478 = vst.msk [vmem:[%s477] sm:$0xff] %vm272, %v475
    %s479 = scalar_lea.vmem [#allocation2], 8
    %v480 = vld [vmem:[%s479] sm:$0xff]
    %v481 = vsel %vm272, %v470, 0
    %483 = vmatprep.subr.mxu0 0.0
    %484 = vmatpush1.msra.mxu0 %v263
    %485 = vmatprep.subr.mxu0 0.0
    %486 = vmatpush1.msra.mxu0 %v264
    %487 = vmatprep.subr.mxu0 0.0
    %488 = vmatpush1.msra.mxu0 %v265
    %489 = vmatprep.subr.mxu0 0.0
    %490 = vmatpush1.msra.mxu0 %v266
    %491 = vmatprep.subr.mxu0 0.0
    %492 = vmatpush1.msra.mxu0 0.0
    %493 = vmatprep.subr.mxu0 0.0
    %494 = vmatpush1.msra.mxu0 0.0
    %495 = vmatprep.subr.mxu0 0.0
    %496 = vmatpush1.msra.mxu0 0.0
    %497 = vmatprep.subr.mxu0 0.0
    %498 = vmatpush1.msra.mxu0 0.0
    %499 = vmatprep.subr.mxu0 0.0
    %500 = vmatpush1.msra.mxu0 0.0
    %501 = vmatprep.subr.mxu0 0.0
    %502 = vmatpush1.msra.mxu0 0.0
    %503 = vmatprep.subr.mxu0 0.0
    %504 = vmatpush1.msra.mxu0 0.0
    %505 = vmatprep.subr.mxu0 0.0
    %506 = vmatpush1.msra.mxu0 0.0
    %507 = vmatprep.subr.mxu0 0.0
    %508 = vmatpush1.msra.mxu0 0.0
    %509 = vmatprep.subr.mxu0 0.0
    %510 = vmatpush1.msra.mxu0 0.0
    %511 = vmatprep.subr.mxu0 0.0
    %512 = vmatpush1.msra.mxu0 0.0
    %513 = vmatprep.subr.mxu0 0.0
    %514 = vmatpush1.msra.mxu0 0.0
    %515 = vmatprep.subr.mxu0 0.0
    %516 = vmatpush1.msra.mxu0 0.0
    %517 = vmatprep.subr.mxu0 0.0
    %518 = vmatpush1.msra.mxu0 0.0
    %519 = vmatprep.subr.mxu0 0.0
    %520 = vmatpush1.msra.mxu0 0.0
    %521 = vmatprep.subr.mxu0 0.0
    %522 = vmatpush1.msra.mxu0 0.0
    %523 = vmatprep.subr.mxu0 0.0
    %524 = vmatpush1.msra.mxu0 0.0
    %525 = vmatprep.subr.mxu0 0.0
    %526 = vmatpush1.msra.mxu0 0.0
    %527 = vmatprep.subr.mxu0 0.0
    %528 = vmatpush1.msra.mxu0 0.0
    %529 = vmatprep.subr.mxu0 0.0
    %530 = vmatpush1.msra.mxu0 0.0
    %531 = vmatprep.subr.mxu0 0.0
    %532 = vmatpush1.msra.mxu0 0.0
    %533 = vmatprep.subr.mxu0 0.0
    %534 = vmatpush1.msra.mxu0 0.0
    %535 = vmatprep.subr.mxu0 0.0
    %536 = vmatpush1.msra.mxu0 0.0
    %537 = vmatprep.subr.mxu0 0.0
    %538 = vmatpush1.msra.mxu0 0.0
    %539 = vmatprep.subr.mxu0 0.0
    %540 = vmatpush1.msra.mxu0 0.0
    %541 = vmatprep.subr.mxu0 0.0
    %542 = vmatpush1.msra.mxu0 0.0
    %543 = vmatprep.subr.mxu0 0.0
    %544 = vmatpush1.msra.mxu0 0.0
    %545 = vmatprep.subr.mxu0 0.0
    %546 = vmatpush1.msra.mxu0 0.0
    %547 = vmatprep.mubr.f32.mxu0 0.0
    %548 = vmatmul.mubr.f32.gmra.mrb[0].mxu0 %v481
    %v549 = vpop.f32.mrb[0].mxu0
    %v550 = vadd.f32 0.0, %v549
    %v551 = vpop.f32.mrb[0].mxu0
    %552 = vdwg.mxu0
    %v553 = vadd.f32 %v480, %v550
    %s554 = scalar_lea.vmem [#allocation3], 48
    %v555 = vld [vmem:[%s554] sm:$0xff]
    %v556 = vsel %vm272, %v475, 0
    %558 = vmatprep.subr.mxu0 0.0
    %559 = vmatpush1.msra.mxu0 %v267
    %560 = vmatprep.subr.mxu0 0.0
    %561 = vmatpush1.msra.mxu0 %v268
    %562 = vmatprep.subr.mxu0 0.0
    %563 = vmatpush1.msra.mxu0 %v269
    %564 = vmatprep.subr.mxu0 0.0
    %565 = vmatpush1.msra.mxu0 %v270
    %566 = vmatprep.subr.mxu0 0.0
    %567 = vmatpush1.msra.mxu0 0.0
    %568 = vmatprep.subr.mxu0 0.0
    %569 = vmatpush1.msra.mxu0 0.0
    %570 = vmatprep.subr.mxu0 0.0
    %571 = vmatpush1.msra.mxu0 0.0
    %572 = vmatprep.subr.mxu0 0.0
    %573 = vmatpush1.msra.mxu0 0.0
    %574 = vmatprep.subr.mxu0 0.0
    %575 = vmatpush1.msra.mxu0 0.0
    %576 = vmatprep.subr.mxu0 0.0
    %577 = vmatpush1.msra.mxu0 0.0
    %578 = vmatprep.subr.mxu0 0.0
    %579 = vmatpush1.msra.mxu0 0.0
    %580 = vmatprep.subr.mxu0 0.0
    %581 = vmatpush1.msra.mxu0 0.0
    %582 = vmatprep.subr.mxu0 0.0
    %583 = vmatpush1.msra.mxu0 0.0
    %584 = vmatprep.subr.mxu0 0.0
    %585 = vmatpush1.msra.mxu0 0.0
    %586 = vmatprep.subr.mxu0 0.0
    %587 = vmatpush1.msra.mxu0 0.0
    %588 = vmatprep.subr.mxu0 0.0
    %589 = vmatpush1.msra.mxu0 0.0
    %590 = vmatprep.subr.mxu0 0.0
    %591 = vmatpush1.msra.mxu0 0.0
    %592 = vmatprep.subr.mxu0 0.0
    %593 = vmatpush1.msra.mxu0 0.0
    %594 = vmatprep.subr.mxu0 0.0
    %595 = vmatpush1.msra.mxu0 0.0
    %596 = vmatprep.subr.mxu0 0.0
    %597 = vmatpush1.msra.mxu0 0.0
    %598 = vmatprep.subr.mxu0 0.0
    %599 = vmatpush1.msra.mxu0 0.0
    %600 = vmatprep.subr.mxu0 0.0
    %601 = vmatpush1.msra.mxu0 0.0
    %602 = vmatprep.subr.mxu0 0.0
    %603 = vmatpush1.msra.mxu0 0.0
    %604 = vmatprep.subr.mxu0 0.0
    %605 = vmatpush1.msra.mxu0 0.0
    %606 = vmatprep.subr.mxu0 0.0
    %607 = vmatpush1.msra.mxu0 0.0
    %608 = vmatprep.subr.mxu0 0.0
    %609 = vmatpush1.msra.mxu0 0.0
    %610 = vmatprep.subr.mxu0 0.0
    %611 = vmatpush1.msra.mxu0 0.0
    %612 = vmatprep.subr.mxu0 0.0
    %613 = vmatpush1.msra.mxu0 0.0
    %614 = vmatprep.subr.mxu0 0.0
    %615 = vmatpush1.msra.mxu0 0.0
    %616 = vmatprep.subr.mxu0 0.0
    %617 = vmatpush1.msra.mxu0 0.0
    %618 = vmatprep.subr.mxu0 0.0
    %619 = vmatpush1.msra.mxu0 0.0
    %620 = vmatprep.subr.mxu0 0.0
    %621 = vmatpush1.msra.mxu0 0.0
    %622 = vmatprep.mubr.f32.mxu0 0.0
    %623 = vmatmul.mubr.f32.gmra.mrb[0].mxu0 %v556
    %v624 = vpop.f32.mrb[0].mxu0
    %v625 = vadd.f32 0.0, %v624
    %v626 = vpop.f32.mrb[0].mxu0
    %627 = vdwg.mxu0
    %v628 = vadd.f32 %v555, %v625
    %v629 = vxor.u32 %v553, 2147483648
    %v630 = vmul.f32 %v629, 1.442695
    %v631 = vpow.pop %v630
    %v632 = vadd.f32 %v631, 1.0
    %v633 = vrcp.pop %v632
    %v634 = vmul.f32 1.0, %v633
    %v635 = vtanh.pop %v553
    %v636 = vmul.f32 %v634, %v437
    %638 = vrot.lane.b32.xlu0 %v635, 64
    %v639 = vpop.permute.xlu0 %638
    %v641 = vmul.f32 %v634, %v639
    %643 = vrot.lane.b32.xlu0 %v641, 32
    %v644 = vpop.permute.xlu0 %643
    %v646 = vadd.f32 %v636, %v644
    %v647 = vtanh.pop %v646
    %649 = vrot.lane.b32.xlu0 %v647, 64
    %v650 = vpop.permute.xlu0 %649
    %v652 = vmul.f32 %v634, %v650
    %v653 = vxor.u32 %v628, 2147483648
    %v654 = vmul.f32 %v653, 1.442695
    %v655 = vpow.pop %v654
    %v656 = vadd.f32 %v655, 1.0
    %v657 = vrcp.pop %v656
    %v658 = vmul.f32 1.0, %v657
    %v659 = vtanh.pop %v628
    %v660 = vmul.f32 %v658, %v461
    %662 = vrot.lane.b32.xlu0 %v659, 64
    %v663 = vpop.permute.xlu0 %662
    %v665 = vmul.f32 %v658, %v663
    %667 = vrot.lane.b32.xlu0 %v665, 32
    %v668 = vpop.permute.xlu0 %667
    %v670 = vadd.f32 %v660, %v668
    %v671 = vtanh.pop %v670
    %673 = vrot.lane.b32.xlu0 %v671, 64
    %v674 = vpop.permute.xlu0 %673
    %v676 = vmul.f32 %v658, %v674
    %678 = vrot.lane.b32.xlu0 %v652, 32
    %v679 = vpop.permute.xlu0 %678
    %s681 = scalar_lea.vmem [#allocation4], 8
    %682 = vst.msk [vmem:[%s681] sm:$0xff] %vm272, %v679
    %684 = vrot.lane.b32.xlu0 %v676, 32
    %v685 = vpop.permute.xlu0 %684
    %s687 = scalar_lea.vmem [#allocation5], 48
    %688 = vst.msk [vmem:[%s687] sm:$0xff] %vm272, %v685
    %s689 = scalar_lea.vmem [#allocation2], 16
    %v690 = vld [vmem:[%s689] sm:$0xff]
    %v691 = vsel %vm272, %v679, 0
    %693 = vmatprep.subr.mxu0 0.0
    %694 = vmatpush1.msra.mxu0 %v263
    %695 = vmatprep.subr.mxu0 0.0
    %696 = vmatpush1.msra.mxu0 %v264
    %697 = vmatprep.subr.mxu0 0.0
    %698 = vmatpush1.msra.mxu0 %v265
    %699 = vmatprep.subr.mxu0 0.0
    %700 = vmatpush1.msra.mxu0 %v266
    %701 = vmatprep.subr.mxu0 0.0
    %702 = vmatpush1.msra.mxu0 0.0
    %703 = vmatprep.subr.mxu0 0.0
    %704 = vmatpush1.msra.mxu0 0.0
    %705 = vmatprep.subr.mxu0 0.0
    %706 = vmatpush1.msra.mxu0 0.0
    %707 = vmatprep.subr.mxu0 0.0
    %708 = vmatpush1.msra.mxu0 0.0
    %709 = vmatprep.subr.mxu0 0.0
    %710 = vmatpush1.msra.mxu0 0.0
    %711 = vmatprep.subr.mxu0 0.0
    %712 = vmatpush1.msra.mxu0 0.0
    %713 = vmatprep.subr.mxu0 0.0
    %714 = vmatpush1.msra.mxu0 0.0
    %715 = vmatprep.subr.mxu0 0.0
    %716 = vmatpush1.msra.mxu0 0.0
    %717 = vmatprep.subr.mxu0 0.0
    %718 = vmatpush1.msra.mxu0 0.0
    %719 = vmatprep.subr.mxu0 0.0
    %720 = vmatpush1.msra.mxu0 0.0
    %721 = vmatprep.subr.mxu0 0.0
    %722 = vmatpush1.msra.mxu0 0.0
    %723 = vmatprep.subr.mxu0 0.0
    %724 = vmatpush1.msra.mxu0 0.0
    %725 = vmatprep.subr.mxu0 0.0
    %726 = vmatpush1.msra.mxu0 0.0
    %727 = vmatprep.subr.mxu0 0.0
    %728 = vmatpush1.msra.mxu0 0.0
    %729 = vmatprep.subr.mxu0 0.0
    %730 = vmatpush1.msra.mxu0 0.0
    %731 = vmatprep.subr.mxu0 0.0
    %732 = vmatpush1.msra.mxu0 0.0
    %733 = vmatprep.subr.mxu0 0.0
    %734 = vmatpush1.msra.mxu0 0.0
    %735 = vmatprep.subr.mxu0 0.0
    %736 = vmatpush1.msra.mxu0 0.0
    %737 = vmatprep.subr.mxu0 0.0
    %738 = vmatpush1.msra.mxu0 0.0
    %739 = vmatprep.subr.mxu0 0.0
    %740 = vmatpush1.msra.mxu0 0.0
    %741 = vmatprep.subr.mxu0 0.0
    %742 = vmatpush1.msra.mxu0 0.0
    %743 = vmatprep.subr.mxu0 0.0
    %744 = vmatpush1.msra.mxu0 0.0
    %745 = vmatprep.subr.mxu0 0.0
    %746 = vmatpush1.msra.mxu0 0.0
    %747 = vmatprep.subr.mxu0 0.0
    %748 = vmatpush1.msra.mxu0 0.0
    %749 = vmatprep.subr.mxu0 0.0
    %750 = vmatpush1.msra.mxu0 0.0
    %751 = vmatprep.subr.mxu0 0.0
    %752 = vmatpush1.msra.mxu0 0.0
    %753 = vmatprep.subr.mxu0 0.0
    %754 = vmatpush1.msra.mxu0 0.0
    %755 = vmatprep.subr.mxu0 0.0
    %756 = vmatpush1.msra.mxu0 0.0
    %757 = vmatprep.mubr.f32.mxu0 0.0
    %758 = vmatmul.mubr.f32.gmra.mrb[0].mxu0 %v691
    %v759 = vpop.f32.mrb[0].mxu0
    %v760 = vadd.f32 0.0, %v759
    %v761 = vpop.f32.mrb[0].mxu0
    %762 = vdwg.mxu0
    %v763 = vadd.f32 %v690, %v760
    %s764 = scalar_lea.vmem [#allocation3], 40
    %v765 = vld [vmem:[%s764] sm:$0xff]
    %v766 = vsel %vm272, %v685, 0
    %768 = vmatprep.subr.mxu0 0.0
    %769 = vmatpush1.msra.mxu0 %v267
    %770 = vmatprep.subr.mxu0 0.0
    %771 = vmatpush1.msra.mxu0 %v268
    %772 = vmatprep.subr.mxu0 0.0
    %773 = vmatpush1.msra.mxu0 %v269
    %774 = vmatprep.subr.mxu0 0.0
    %775 = vmatpush1.msra.mxu0 %v270
    %776 = vmatprep.subr.mxu0 0.0
    %777 = vmatpush1.msra.mxu0 0.0
    %778 = vmatprep.subr.mxu0 0.0
    %779 = vmatpush1.msra.mxu0 0.0
    %780 = vmatprep.subr.mxu0 0.0
    %781 = vmatpush1.msra.mxu0 0.0
    %782 = vmatprep.subr.mxu0 0.0
    %783 = vmatpush1.msra.mxu0 0.0
    %784 = vmatprep.subr.mxu0 0.0
    %785 = vmatpush1.msra.mxu0 0.0
    %786 = vmatprep.subr.mxu0 0.0
    %787 = vmatpush1.msra.mxu0 0.0
    %788 = vmatprep.subr.mxu0 0.0
    %789 = vmatpush1.msra.mxu0 0.0
    %790 = vmatprep.subr.mxu0 0.0
    %791 = vmatpush1.msra.mxu0 0.0
    %792 = vmatprep.subr.mxu0 0.0
    %793 = vmatpush1.msra.mxu0 0.0
    %794 = vmatprep.subr.mxu0 0.0
    %795 = vmatpush1.msra.mxu0 0.0
    %796 = vmatprep.subr.mxu0 0.0
    %797 = vmatpush1.msra.mxu0 0.0
    %798 = vmatprep.subr.mxu0 0.0
    %799 = vmatpush1.msra.mxu0 0.0
    %800 = vmatprep.subr.mxu0 0.0
    %801 = vmatpush1.msra.mxu0 0.0
    %802 = vmatprep.subr.mxu0 0.0
    %803 = vmatpush1.msra.mxu0 0.0
    %804 = vmatprep.subr.mxu0 0.0
    %805 = vmatpush1.msra.mxu0 0.0
    %806 = vmatprep.subr.mxu0 0.0
    %807 = vmatpush1.msra.mxu0 0.0
    %808 = vmatprep.subr.mxu0 0.0
    %809 = vmatpush1.msra.mxu0 0.0
    %810 = vmatprep.subr.mxu0 0.0
    %811 = vmatpush1.msra.mxu0 0.0
    %812 = vmatprep.subr.mxu0 0.0
    %813 = vmatpush1.msra.mxu0 0.0
    %814 = vmatprep.subr.mxu0 0.0
    %815 = vmatpush1.msra.mxu0 0.0
    %816 = vmatprep.subr.mxu0 0.0
    %817 = vmatpush1.msra.mxu0 0.0
    %818 = vmatprep.subr.mxu0 0.0
    %819 = vmatpush1.msra.mxu0 0.0
    %820 = vmatprep.subr.mxu0 0.0
    %821 = vmatpush1.msra.mxu0 0.0
    %822 = vmatprep.subr.mxu0 0.0
    %823 = vmatpush1.msra.mxu0 0.0
    %824 = vmatprep.subr.mxu0 0.0
    %825 = vmatpush1.msra.mxu0 0.0
    %826 = vmatprep.subr.mxu0 0.0
    %827 = vmatpush1.msra.mxu0 0.0
    %828 = vmatprep.subr.mxu0 0.0
    %829 = vmatpush1.msra.mxu0 0.0
    %830 = vmatprep.subr.mxu0 0.0
    %831 = vmatpush1.msra.mxu0 0.0
    %832 = vmatprep.mubr.f32.mxu0 0.0
    %833 = vmatmul.mubr.f32.gmra.mrb[0].mxu0 %v766
    %v834 = vpop.f32.mrb[0].mxu0
    %v835 = vadd.f32 0.0, %v834
    %v836 = vpop.f32.mrb[0].mxu0
    %837 = vdwg.mxu0
    %v838 = vadd.f32 %v765, %v835
    %v839 = vxor.u32 %v763, 2147483648
    %v840 = vmul.f32 %v839, 1.442695
    %v841 = vpow.pop %v840
    %v842 = vadd.f32 %v841, 1.0
    %v843 = vrcp.pop %v842
    %v844 = vmul.f32 1.0, %v843
    %v845 = vtanh.pop %v763
    %v846 = vmul.f32 %v844, %v646
    %848 = vrot.lane.b32.xlu0 %v845, 64
    %v849 = vpop.permute.xlu0 %848
    %v851 = vmul.f32 %v844, %v849
    %853 = vrot.lane.b32.xlu0 %v851, 32
    %v854 = vpop.permute.xlu0 %853
    %v856 = vadd.f32 %v846, %v854
    %v857 = vtanh.pop %v856
    %859 = vrot.lane.b32.xlu0 %v857, 64
    %v860 = vpop.permute.xlu0 %859
    %v862 = vmul.f32 %v844, %v860
    %v863 = vxor.u32 %v838, 2147483648
    %v864 = vmul.f32 %v863, 1.442695
    %v865 = vpow.pop %v864
    %v866 = vadd.f32 %v865, 1.0
    %v867 = vrcp.pop %v866
    %v868 = vmul.f32 1.0, %v867
    %v869 = vtanh.pop %v838
    %v870 = vmul.f32 %v868, %v670
    %872 = vrot.lane.b32.xlu0 %v869, 64
    %v873 = vpop.permute.xlu0 %872
    %v875 = vmul.f32 %v868, %v873
    %877 = vrot.lane.b32.xlu0 %v875, 32
    %v878 = vpop.permute.xlu0 %877
    %v880 = vadd.f32 %v870, %v878
    %v881 = vtanh.pop %v880
    %883 = vrot.lane.b32.xlu0 %v881, 64
    %v884 = vpop.permute.xlu0 %883
    %v886 = vmul.f32 %v868, %v884
    %888 = vrot.lane.b32.xlu0 %v862, 32
    %v889 = vpop.permute.xlu0 %888
    %s891 = scalar_lea.vmem [#allocation4], 16
    %892 = vst.msk [vmem:[%s891] sm:$0xff] %vm272, %v889
    %894 = vrot.lane.b32.xlu0 %v886, 32
    %v895 = vpop.permute.xlu0 %894
    %s897 = scalar_lea.vmem [#allocation5], 40
    %898 = vst.msk [vmem:[%s897] sm:$0xff] %vm272, %v895
    %s899 = scalar_lea.vmem [#allocation2], 24
    %v900 = vld [vmem:[%s899] sm:$0xff]
    %v901 = vsel %vm272, %v889, 0
    %903 = vmatprep.subr.mxu0 0.0
    %904 = vmatpush1.msra.mxu0 %v263
    %905 = vmatprep.subr.mxu0 0.0
    %906 = vmatpush1.msra.mxu0 %v264
    %907 = vmatprep.subr.mxu0 0.0
    %908 = vmatpush1.msra.mxu0 %v265
    %909 = vmatprep.subr.mxu0 0.0
    %910 = vmatpush1.msra.mxu0 %v266
    %911 = vmatprep.subr.mxu0 0.0
    %912 = vmatpush1.msra.mxu0 0.0
    %913 = vmatprep.subr.mxu0 0.0
    %914 = vmatpush1.msra.mxu0 0.0
    %915 = vmatprep.subr.mxu0 0.0
    %916 = vmatpush1.msra.mxu0 0.0
    %917 = vmatprep.subr.mxu0 0.0
    %918 = vmatpush1.msra.mxu0 0.0
    %919 = vmatprep.subr.mxu0 0.0
    %920 = vmatpush1.msra.mxu0 0.0
    %921 = vmatprep.subr.mxu0 0.0
    %922 = vmatpush1.msra.mxu0 0.0
    %923 = vmatprep.subr.mxu0 0.0
    %924 = vmatpush1.msra.mxu0 0.0
    %925 = vmatprep.subr.mxu0 0.0
    %926 = vmatpush1.msra.mxu0 0.0
    %927 = vmatprep.subr.mxu0 0.0
    %928 = vmatpush1.msra.mxu0 0.0
    %929 = vmatprep.subr.mxu0 0.0
    %930 = vmatpush1.msra.mxu0 0.0
    %931 = vmatprep.subr.mxu0 0.0
    %932 = vmatpush1.msra.mxu0 0.0
    %933 = vmatprep.subr.mxu0 0.0
    %934 = vmatpush1.msra.mxu0 0.0
    %935 = vmatprep.subr.mxu0 0.0
    %936 = vmatpush1.msra.mxu0 0.0
    %937 = vmatprep.subr.mxu0 0.0
    %938 = vmatpush1.msra.mxu0 0.0
    %939 = vmatprep.subr.mxu0 0.0
    %940 = vmatpush1.msra.mxu0 0.0
    %941 = vmatprep.subr.mxu0 0.0
    %942 = vmatpush1.msra.mxu0 0.0
    %943 = vmatprep.subr.mxu0 0.0
    %944 = vmatpush1.msra.mxu0 0.0
    %945 = vmatprep.subr.mxu0 0.0
    %946 = vmatpush1.msra.mxu0 0.0
    %947 = vmatprep.subr.mxu0 0.0
    %948 = vmatpush1.msra.mxu0 0.0
    %949 = vmatprep.subr.mxu0 0.0
    %950 = vmatpush1.msra.mxu0 0.0
    %951 = vmatprep.subr.mxu0 0.0
    %952 = vmatpush1.msra.mxu0 0.0
    %953 = vmatprep.subr.mxu0 0.0
    %954 = vmatpush1.msra.mxu0 0.0
    %955 = vmatprep.subr.mxu0 0.0
    %956 = vmatpush1.msra.mxu0 0.0
    %957 = vmatprep.subr.mxu0 0.0
    %958 = vmatpush1.msra.mxu0 0.0
    %959 = vmatprep.subr.mxu0 0.0
    %960 = vmatpush1.msra.mxu0 0.0
    %961 = vmatprep.subr.mxu0 0.0
    %962 = vmatpush1.msra.mxu0 0.0
    %963 = vmatprep.subr.mxu0 0.0
    %964 = vmatpush1.msra.mxu0 0.0
    %965 = vmatprep.subr.mxu0 0.0
    %966 = vmatpush1.msra.mxu0 0.0
    %967 = vmatprep.mubr.f32.mxu0 0.0
    %968 = vmatmul.mubr.f32.gmra.mrb[0].mxu0 %v901
    %v969 = vpop.f32.mrb[0].mxu0
    %v970 = vadd.f32 0.0, %v969
    %v971 = vpop.f32.mrb[0].mxu0
    %972 = vdwg.mxu0
    %v973 = vadd.f32 %v900, %v970
    %s974 = scalar_lea.vmem [#allocation3], 32
    %v975 = vld [vmem:[%s974] sm:$0xff]
    %v976 = vsel %vm272, %v895, 0
    %978 = vmatprep.subr.mxu0 0.0
    %979 = vmatpush1.msra.mxu0 %v267
    %980 = vmatprep.subr.mxu0 0.0
    %981 = vmatpush1.msra.mxu0 %v268
    %982 = vmatprep.subr.mxu0 0.0
    %983 = vmatpush1.msra.mxu0 %v269
    %984 = vmatprep.subr.mxu0 0.0
    %985 = vmatpush1.msra.mxu0 %v270
    %986 = vmatprep.subr.mxu0 0.0
    %987 = vmatpush1.msra.mxu0 0.0
    %988 = vmatprep.subr.mxu0 0.0
    %989 = vmatpush1.msra.mxu0 0.0
    %990 = vmatprep.subr.mxu0 0.0
    %991 = vmatpush1.msra.mxu0 0.0
    %992 = vmatprep.subr.mxu0 0.0
    %993 = vmatpush1.msra.mxu0 0.0
    %994 = vmatprep.subr.mxu0 0.0
    %995 = vmatpush1.msra.mxu0 0.0
    %996 = vmatprep.subr.mxu0 0.0
    %997 = vmatpush1.msra.mxu0 0.0
    %998 = vmatprep.subr.mxu0 0.0
    %999 = vmatpush1.msra.mxu0 0.0
    %1000 = vmatprep.subr.mxu0 0.0
    %1001 = vmatpush1.msra.mxu0 0.0
    %1002 = vmatprep.subr.mxu0 0.0
    %1003 = vmatpush1.msra.mxu0 0.0
    %1004 = vmatprep.subr.mxu0 0.0
    %1005 = vmatpush1.msra.mxu0 0.0
    %1006 = vmatprep.subr.mxu0 0.0
    %1007 = vmatpush1.msra.mxu0 0.0
    %1008 = vmatprep.subr.mxu0 0.0
    %1009 = vmatpush1.msra.mxu0 0.0
    %1010 = vmatprep.subr.mxu0 0.0
    %1011 = vmatpush1.msra.mxu0 0.0
    %1012 = vmatprep.subr.mxu0 0.0
    %1013 = vmatpush1.msra.mxu0 0.0
    %1014 = vmatprep.subr.mxu0 0.0
    %1015 = vmatpush1.msra.mxu0 0.0
    %1016 = vmatprep.subr.mxu0 0.0
    %1017 = vmatpush1.msra.mxu0 0.0
    %1018 = vmatprep.subr.mxu0 0.0
    %1019 = vmatpush1.msra.mxu0 0.0
    %1020 = vmatprep.subr.mxu0 0.0
    %1021 = vmatpush1.msra.mxu0 0.0
    %1022 = vmatprep.subr.mxu0 0.0
    %1023 = vmatpush1.msra.mxu0 0.0
    %1024 = vmatprep.subr.mxu0 0.0
    %1025 = vmatpush1.msra.mxu0 0.0
    %1026 = vmatprep.subr.mxu0 0.0
    %1027 = vmatpush1.msra.mxu0 0.0
    %1028 = vmatprep.subr.mxu0 0.0
    %1029 = vmatpush1.msra.mxu0 0.0
    %1030 = vmatprep.subr.mxu0 0.0
    %1031 = vmatpush1.msra.mxu0 0.0
    %1032 = vmatprep.subr.mxu0 0.0
    %1033 = vmatpush1.msra.mxu0 0.0
    %1034 = vmatprep.subr.mxu0 0.0
    %1035 = vmatpush1.msra.mxu0 0.0
    %1036 = vmatprep.subr.mxu0 0.0
    %1037 = vmatpush1.msra.mxu0 0.0
    %1038 = vmatprep.subr.mxu0 0.0
    %1039 = vmatpush1.msra.mxu0 0.0
    %1040 = vmatprep.subr.mxu0 0.0
    %1041 = vmatpush1.msra.mxu0 0.0
    %1042 = vmatprep.mubr.f32.mxu0 0.0
    %1043 = vmatmul.mubr.f32.gmra.mrb[0].mxu0 %v976
    %v1044 = vpop.f32.mrb[0].mxu0
    %v1045 = vadd.f32 0.0, %v1044
    %v1046 = vpop.f32.mrb[0].mxu0
    %1047 = vdwg.mxu0
    %v1048 = vadd.f32 %v975, %v1045
    %v1049 = vxor.u32 %v973, 2147483648
    %v1050 = vmul.f32 %v1049, 1.442695
    %v1051 = vpow.pop %v1050
    %v1052 = vadd.f32 %v1051, 1.0
    %v1053 = vrcp.pop %v1052
    %v1054 = vmul.f32 1.0, %v1053
    %v1055 = vtanh.pop %v973
    %v1056 = vmul.f32 %v1054, %v856
    %1058 = vrot.lane.b32.xlu0 %v1055, 64
    %v1059 = vpop.permute.xlu0 %1058
    %v1061 = vmul.f32 %v1054, %v1059
    %1063 = vrot.lane.b32.xlu0 %v1061, 32
    %v1064 = vpop.permute.xlu0 %1063
    %v1066 = vadd.f32 %v1056, %v1064
    %v1067 = vtanh.pop %v1066
    %1069 = vrot.lane.b32.xlu0 %v1067, 64
    %v1070 = vpop.permute.xlu0 %1069
    %v1072 = vmul.f32 %v1054, %v1070
    %v1073 = vxor.u32 %v1048, 2147483648
    %v1074 = vmul.f32 %v1073, 1.442695
    %v1075 = vpow.pop %v1074
    %v1076 = vadd.f32 %v1075, 1.0
    %v1077 = vrcp.pop %v1076
    %v1078 = vmul.f32 1.0, %v1077
    %v1079 = vtanh.pop %v1048
    %v1080 = vmul.f32 %v1078, %v880
    %1082 = vrot.lane.b32.xlu0 %v1079, 64
    %v1083 = vpop.permute.xlu0 %1082
    %v1085 = vmul.f32 %v1078, %v1083
    %1087 = vrot.lane.b32.xlu0 %v1085, 32
    %v1088 = vpop.permute.xlu0 %1087
    %v1090 = vadd.f32 %v1080, %v1088
    %v1091 = vtanh.pop %v1090
    %1093 = vrot.lane.b32.xlu0 %v1091, 64
    %v1094 = vpop.permute.xlu0 %1093
    %v1096 = vmul.f32 %v1078, %v1094
    %1098 = vrot.lane.b32.xlu0 %v1072, 32
    %v1099 = vpop.permute.xlu0 %1098
    %s1101 = scalar_lea.vmem [#allocation4], 24
    %1102 = vst.msk [vmem:[%s1101] sm:$0xff] %vm272, %v1099
    %1104 = vrot.lane.b32.xlu0 %v1096, 32
    %v1105 = vpop.permute.xlu0 %1104
    %s1107 = scalar_lea.vmem [#allocation5], 32
    %1108 = vst.msk [vmem:[%s1107] sm:$0xff] %vm272, %v1105
    %s1109 = scalar_lea.vmem [#allocation2], 32
    %v1110 = vld [vmem:[%s1109] sm:$0xff]
    %v1111 = vsel %vm272, %v1099, 0
    %1113 = vmatprep.subr.mxu0 0.0
    %1114 = vmatpush1.msra.mxu0 %v263
    %1115 = vmatprep.subr.mxu0 0.0
    %1116 = vmatpush1.msra.mxu0 %v264
    %1117 = vmatprep.subr.mxu0 0.0
    %1118 = vmatpush1.msra.mxu0 %v265
    %1119 = vmatprep.subr.mxu0 0.0
    %1120 = vmatpush1.msra.mxu0 %v266
    %1121 = vmatprep.subr.mxu0 0.0
    %1122 = vmatpush1.msra.mxu0 0.0
    %1123 = vmatprep.subr.mxu0 0.0
    %1124 = vmatpush1.msra.mxu0 0.0
    %1125 = vmatprep.subr.mxu0 0.0
    %1126 = vmatpush1.msra.mxu0 0.0
    %1127 = vmatprep.subr.mxu0 0.0
    %1128 = vmatpush1.msra.mxu0 0.0
    %1129 = vmatprep.subr.mxu0 0.0
    %1130 = vmatpush1.msra.mxu0 0.0
    %1131 = vmatprep.subr.mxu0 0.0
    %1132 = vmatpush1.msra.mxu0 0.0
    %1133 = vmatprep.subr.mxu0 0.0
    %1134 = vmatpush1.msra.mxu0 0.0
    %1135 = vmatprep.subr.mxu0 0.0
    %1136 = vmatpush1.msra.mxu0 0.0
    %1137 = vmatprep.subr.mxu0 0.0
    %1138 = vmatpush1.msra.mxu0 0.0
    %1139 = vmatprep.subr.mxu0 0.0
    %1140 = vmatpush1.msra.mxu0 0.0
    %1141 = vmatprep.subr.mxu0 0.0
    %1142 = vmatpush1.msra.mxu0 0.0
    %1143 = vmatprep.subr.mxu0 0.0
    %1144 = vmatpush1.msra.mxu0 0.0
    %1145 = vmatprep.subr.mxu0 0.0
    %1146 = vmatpush1.msra.mxu0 0.0
    %1147 = vmatprep.subr.mxu0 0.0
    %1148 = vmatpush1.msra.mxu0 0.0
    %1149 = vmatprep.subr.mxu0 0.0
    %1150 = vmatpush1.msra.mxu0 0.0
    %1151 = vmatprep.subr.mxu0 0.0
    %1152 = vmatpush1.msra.mxu0 0.0
    %1153 = vmatprep.subr.mxu0 0.0
    %1154 = vmatpush1.msra.mxu0 0.0
    %1155 = vmatprep.subr.mxu0 0.0
    %1156 = vmatpush1.msra.mxu0 0.0
    %1157 = vmatprep.subr.mxu0 0.0
    %1158 = vmatpush1.msra.mxu0 0.0
    %1159 = vmatprep.subr.mxu0 0.0
    %1160 = vmatpush1.msra.mxu0 0.0
    %1161 = vmatprep.subr.mxu0 0.0
    %1162 = vmatpush1.msra.mxu0 0.0
    %1163 = vmatprep.subr.mxu0 0.0
    %1164 = vmatpush1.msra.mxu0 0.0
    %1165 = vmatprep.subr.mxu0 0.0
    %1166 = vmatpush1.msra.mxu0 0.0
    %1167 = vmatprep.subr.mxu0 0.0
    %1168 = vmatpush1.msra.mxu0 0.0
    %1169 = vmatprep.subr.mxu0 0.0
    %1170 = vmatpush1.msra.mxu0 0.0
    %1171 = vmatprep.subr.mxu0 0.0
    %1172 = vmatpush1.msra.mxu0 0.0
    %1173 = vmatprep.subr.mxu0 0.0
    %1174 = vmatpush1.msra.mxu0 0.0
    %1175 = vmatprep.subr.mxu0 0.0
    %1176 = vmatpush1.msra.mxu0 0.0
    %1177 = vmatprep.mubr.f32.mxu0 0.0
    %1178 = vmatmul.mubr.f32.gmra.mrb[0].mxu0 %v1111
    %v1179 = vpop.f32.mrb[0].mxu0
    %v1180 = vadd.f32 0.0, %v1179
    %v1181 = vpop.f32.mrb[0].mxu0
    %1182 = vdwg.mxu0
    %v1183 = vadd.f32 %v1110, %v1180
    %s1184 = scalar_lea.vmem [#allocation3], 24
    %v1185 = vld [vmem:[%s1184] sm:$0xff]
    %v1186 = vsel %vm272, %v1105, 0
    %1188 = vmatprep.subr.mxu0 0.0
    %1189 = vmatpush1.msra.mxu0 %v267
    %1190 = vmatprep.subr.mxu0 0.0
    %1191 = vmatpush1.msra.mxu0 %v268
    %1192 = vmatprep.subr.mxu0 0.0
    %1193 = vmatpush1.msra.mxu0 %v269
    %1194 = vmatprep.subr.mxu0 0.0
    %1195 = vmatpush1.msra.mxu0 %v270
    %1196 = vmatprep.subr.mxu0 0.0
    %1197 = vmatpush1.msra.mxu0 0.0
    %1198 = vmatprep.subr.mxu0 0.0
    %1199 = vmatpush1.msra.mxu0 0.0
    %1200 = vmatprep.subr.mxu0 0.0
    %1201 = vmatpush1.msra.mxu0 0.0
    %1202 = vmatprep.subr.mxu0 0.0
    %1203 = vmatpush1.msra.mxu0 0.0
    %1204 = vmatprep.subr.mxu0 0.0
    %1205 = vmatpush1.msra.mxu0 0.0
    %1206 = vmatprep.subr.mxu0 0.0
    %1207 = vmatpush1.msra.mxu0 0.0
    %1208 = vmatprep.subr.mxu0 0.0
    %1209 = vmatpush1.msra.mxu0 0.0
    %1210 = vmatprep.subr.mxu0 0.0
    %1211 = vmatpush1.msra.mxu0 0.0
    %1212 = vmatprep.subr.mxu0 0.0
    %1213 = vmatpush1.msra.mxu0 0.0
    %1214 = vmatprep.subr.mxu0 0.0
    %1215 = vmatpush1.msra.mxu0 0.0
    %1216 = vmatprep.subr.mxu0 0.0
    %1217 = vmatpush1.msra.mxu0 0.0
    %1218 = vmatprep.subr.mxu0 0.0
    %1219 = vmatpush1.msra.mxu0 0.0
    %1220 = vmatprep.subr.mxu0 0.0
    %1221 = vmatpush1.msra.mxu0 0.0
    %1222 = vmatprep.subr.mxu0 0.0
    %1223 = vmatpush1.msra.mxu0 0.0
    %1224 = vmatprep.subr.mxu0 0.0
    %1225 = vmatpush1.msra.mxu0 0.0
    %1226 = vmatprep.subr.mxu0 0.0
    %1227 = vmatpush1.msra.mxu0 0.0
    %1228 = vmatprep.subr.mxu0 0.0
    %1229 = vmatpush1.msra.mxu0 0.0
    %1230 = vmatprep.subr.mxu0 0.0
    %1231 = vmatpush1.msra.mxu0 0.0
    %1232 = vmatprep.subr.mxu0 0.0
    %1233 = vmatpush1.msra.mxu0 0.0
    %1234 = vmatprep.subr.mxu0 0.0
    %1235 = vmatpush1.msra.mxu0 0.0
    %1236 = vmatprep.subr.mxu0 0.0
    %1237 = vmatpush1.msra.mxu0 0.0
    %1238 = vmatprep.subr.mxu0 0.0
    %1239 = vmatpush1.msra.mxu0 0.0
    %1240 = vmatprep.subr.mxu0 0.0
    %1241 = vmatpush1.msra.mxu0 0.0
    %1242 = vmatprep.subr.mxu0 0.0
    %1243 = vmatpush1.msra.mxu0 0.0
    %1244 = vmatprep.subr.mxu0 0.0
    %1245 = vmatpush1.msra.mxu0 0.0
    %1246 = vmatprep.subr.mxu0 0.0
    %1247 = vmatpush1.msra.mxu0 0.0
    %1248 = vmatprep.subr.mxu0 0.0
    %1249 = vmatpush1.msra.mxu0 0.0
    %1250 = vmatprep.subr.mxu0 0.0
    %1251 = vmatpush1.msra.mxu0 0.0
    %1252 = vmatprep.mubr.f32.mxu0 0.0
    %1253 = vmatmul.mubr.f32.gmra.mrb[0].mxu0 %v1186
    %v1254 = vpop.f32.mrb[0].mxu0
    %v1255 = vadd.f32 0.0, %v1254
    %v1256 = vpop.f32.mrb[0].mxu0
    %1257 = vdwg.mxu0
    %v1258 = vadd.f32 %v1185, %v1255
    %v1259 = vxor.u32 %v1183, 2147483648
    %v1260 = vmul.f32 %v1259, 1.442695
    %v1261 = vpow.pop %v1260
    %v1262 = vadd.f32 %v1261, 1.0
    %v1263 = vrcp.pop %v1262
    %v1264 = vmul.f32 1.0, %v1263
    %v1265 = vtanh.pop %v1183
    %v1266 = vmul.f32 %v1264, %v1066
    %1268 = vrot.lane.b32.xlu0 %v1265, 64
    %v1269 = vpop.permute.xlu0 %1268
    %v1271 = vmul.f32 %v1264, %v1269
    %1273 = vrot.lane.b32.xlu0 %v1271, 32
    %v1274 = vpop.permute.xlu0 %1273
    %v1276 = vadd.f32 %v1266, %v1274
    %v1277 = vtanh.pop %v1276
    %1279 = vrot.lane.b32.xlu0 %v1277, 64
    %v1280 = vpop.permute.xlu0 %1279
    %v1282 = vmul.f32 %v1264, %v1280
    %v1283 = vxor.u32 %v1258, 2147483648
    %v1284 = vmul.f32 %v1283, 1.442695
    %v1285 = vpow.pop %v1284
    %v1286 = vadd.f32 %v1285, 1.0
    %v1287 = vrcp.pop %v1286
    %v1288 = vmul.f32 1.0, %v1287
    %v1289 = vtanh.pop %v1258
    %v1290 = vmul.f32 %v1288, %v1090
    %1292 = vrot.lane.b32.xlu0 %v1289, 64
    %v1293 = vpop.permute.xlu0 %1292
    %v1295 = vmul.f32 %v1288, %v1293
    %1297 = vrot.lane.b32.xlu0 %v1295, 32
    %v1298 = vpop.permute.xlu0 %1297
    %v1300 = vadd.f32 %v1290, %v1298
    %v1301 = vtanh.pop %v1300
    %1303 = vrot.lane.b32.xlu0 %v1301, 64
    %v1304 = vpop.permute.xlu0 %1303
    %v1306 = vmul.f32 %v1288, %v1304
    %1308 = vrot.lane.b32.xlu0 %v1282, 32
    %v1309 = vpop.permute.xlu0 %1308
    %s1311 = scalar_lea.vmem [#allocation4], 32
    %1312 = vst.msk [vmem:[%s1311] sm:$0xff] %vm272, %v1309
    %1314 = vrot.lane.b32.xlu0 %v1306, 32
    %v1315 = vpop.permute.xlu0 %1314
    %s1317 = scalar_lea.vmem [#allocation5], 24
    %1318 = vst.msk [vmem:[%s1317] sm:$0xff] %vm272, %v1315
    %s1319 = scalar_lea.vmem [#allocation2], 40
    %v1320 = vld [vmem:[%s1319] sm:$0xff]
    %v1321 = vsel %vm272, %v1309, 0
    %1323 = vmatprep.subr.mxu0 0.0
    %1324 = vmatpush1.msra.mxu0 %v263
    %1325 = vmatprep.subr.mxu0 0.0
    %1326 = vmatpush1.msra.mxu0 %v264
    %1327 = vmatprep.subr.mxu0 0.0
    %1328 = vmatpush1.msra.mxu0 %v265
    %1329 = vmatprep.subr.mxu0 0.0
    %1330 = vmatpush1.msra.mxu0 %v266
    %1331 = vmatprep.subr.mxu0 0.0
    %1332 = vmatpush1.msra.mxu0 0.0
    %1333 = vmatprep.subr.mxu0 0.0
    %1334 = vmatpush1.msra.mxu0 0.0
    %1335 = vmatprep.subr.mxu0 0.0
    %1336 = vmatpush1.msra.mxu0 0.0
    %1337 = vmatprep.subr.mxu0 0.0
    %1338 = vmatpush1.msra.mxu0 0.0
    %1339 = vmatprep.subr.mxu0 0.0
    %1340 = vmatpush1.msra.mxu0 0.0
    %1341 = vmatprep.subr.mxu0 0.0
    %1342 = vmatpush1.msra.mxu0 0.0
    %1343 = vmatprep.subr.mxu0 0.0
    %1344 = vmatpush1.msra.mxu0 0.0
    %1345 = vmatprep.subr.mxu0 0.0
    %1346 = vmatpush1.msra.mxu0 0.0
    %1347 = vmatprep.subr.mxu0 0.0
    %1348 = vmatpush1.msra.mxu0 0.0
    %1349 = vmatprep.subr.mxu0 0.0
    %1350 = vmatpush1.msra.mxu0 0.0
    %1351 = vmatprep.subr.mxu0 0.0
    %1352 = vmatpush1.msra.mxu0 0.0
    %1353 = vmatprep.subr.mxu0 0.0
    %1354 = vmatpush1.msra.mxu0 0.0
    %1355 = vmatprep.subr.mxu0 0.0
    %1356 = vmatpush1.msra.mxu0 0.0
    %1357 = vmatprep.subr.mxu0 0.0
    %1358 = vmatpush1.msra.mxu0 0.0
    %1359 = vmatprep.subr.mxu0 0.0
    %1360 = vmatpush1.msra.mxu0 0.0
    %1361 = vmatprep.subr.mxu0 0.0
    %1362 = vmatpush1.msra.mxu0 0.0
    %1363 = vmatprep.subr.mxu0 0.0
    %1364 = vmatpush1.msra.mxu0 0.0
    %1365 = vmatprep.subr.mxu0 0.0
    %1366 = vmatpush1.msra.mxu0 0.0
    %1367 = vmatprep.subr.mxu0 0.0
    %1368 = vmatpush1.msra.mxu0 0.0
    %1369 = vmatprep.subr.mxu0 0.0
    %1370 = vmatpush1.msra.mxu0 0.0
    %1371 = vmatprep.subr.mxu0 0.0
    %1372 = vmatpush1.msra.mxu0 0.0
    %1373 = vmatprep.subr.mxu0 0.0
    %1374 = vmatpush1.msra.mxu0 0.0
    %1375 = vmatprep.subr.mxu0 0.0
    %1376 = vmatpush1.msra.mxu0 0.0
    %1377 = vmatprep.subr.mxu0 0.0
    %1378 = vmatpush1.msra.mxu0 0.0
    %1379 = vmatprep.subr.mxu0 0.0
    %1380 = vmatpush1.msra.mxu0 0.0
    %1381 = vmatprep.subr.mxu0 0.0
    %1382 = vmatpush1.msra.mxu0 0.0
    %1383 = vmatprep.subr.mxu0 0.0
    %1384 = vmatpush1.msra.mxu0 0.0
    %1385 = vmatprep.subr.mxu0 0.0
    %1386 = vmatpush1.msra.mxu0 0.0
    %1387 = vmatprep.mubr.f32.mxu0 0.0
    %1388 = vmatmul.mubr.f32.gmra.mrb[0].mxu0 %v1321
    %v1389 = vpop.f32.mrb[0].mxu0
    %v1390 = vadd.f32 0.0, %v1389
    %v1391 = vpop.f32.mrb[0].mxu0
    %1392 = vdwg.mxu0
    %v1393 = vadd.f32 %v1320, %v1390
    %s1394 = scalar_lea.vmem [#allocation3], 16
    %v1395 = vld [vmem:[%s1394] sm:$0xff]
    %v1396 = vsel %vm272, %v1315, 0
    %1398 = vmatprep.subr.mxu0 0.0
    %1399 = vmatpush1.msra.mxu0 %v267
    %1400 = vmatprep.subr.mxu0 0.0
    %1401 = vmatpush1.msra.mxu0 %v268
    %1402 = vmatprep.subr.mxu0 0.0
    %1403 = vmatpush1.msra.mxu0 %v269
    %1404 = vmatprep.subr.mxu0 0.0
    %1405 = vmatpush1.msra.mxu0 %v270
    %1406 = vmatprep.subr.mxu0 0.0
    %1407 = vmatpush1.msra.mxu0 0.0
    %1408 = vmatprep.subr.mxu0 0.0
    %1409 = vmatpush1.msra.mxu0 0.0
    %1410 = vmatprep.subr.mxu0 0.0
    %1411 = vmatpush1.msra.mxu0 0.0
    %1412 = vmatprep.subr.mxu0 0.0
    %1413 = vmatpush1.msra.mxu0 0.0
    %1414 = vmatprep.subr.mxu0 0.0
    %1415 = vmatpush1.msra.mxu0 0.0
    %1416 = vmatprep.subr.mxu0 0.0
    %1417 = vmatpush1.msra.mxu0 0.0
    %1418 = vmatprep.subr.mxu0 0.0
    %1419 = vmatpush1.msra.mxu0 0.0
    %1420 = vmatprep.subr.mxu0 0.0
    %1421 = vmatpush1.msra.mxu0 0.0
    %1422 = vmatprep.subr.mxu0 0.0
    %1423 = vmatpush1.msra.mxu0 0.0
    %1424 = vmatprep.subr.mxu0 0.0
    %1425 = vmatpush1.msra.mxu0 0.0
    %1426 = vmatprep.subr.mxu0 0.0
    %1427 = vmatpush1.msra.mxu0 0.0
    %1428 = vmatprep.subr.mxu0 0.0
    %1429 = vmatpush1.msra.mxu0 0.0
    %1430 = vmatprep.subr.mxu0 0.0
    %1431 = vmatpush1.msra.mxu0 0.0
    %1432 = vmatprep.subr.mxu0 0.0
    %1433 = vmatpush1.msra.mxu0 0.0
    %1434 = vmatprep.subr.mxu0 0.0
    %1435 = vmatpush1.msra.mxu0 0.0
    %1436 = vmatprep.subr.mxu0 0.0
    %1437 = vmatpush1.msra.mxu0 0.0
    %1438 = vmatprep.subr.mxu0 0.0
    %1439 = vmatpush1.msra.mxu0 0.0
    %1440 = vmatprep.subr.mxu0 0.0
    %1441 = vmatpush1.msra.mxu0 0.0
    %1442 = vmatprep.subr.mxu0 0.0
    %1443 = vmatpush1.msra.mxu0 0.0
    %1444 = vmatprep.subr.mxu0 0.0
    %1445 = vmatpush1.msra.mxu0 0.0
    %1446 = vmatprep.subr.mxu0 0.0
    %1447 = vmatpush1.msra.mxu0 0.0
    %1448 = vmatprep.subr.mxu0 0.0
    %1449 = vmatpush1.msra.mxu0 0.0
    %1450 = vmatprep.subr.mxu0 0.0
    %1451 = vmatpush1.msra.mxu0 0.0
    %1452 = vmatprep.subr.mxu0 0.0
    %1453 = vmatpush1.msra.mxu0 0.0
    %1454 = vmatprep.subr.mxu0 0.0
    %1455 = vmatpush1.msra.mxu0 0.0
    %1456 = vmatprep.subr.mxu0 0.0
    %1457 = vmatpush1.msra.mxu0 0.0
    %1458 = vmatprep.subr.mxu0 0.0
    %1459 = vmatpush1.msra.mxu0 0.0
    %1460 = vmatprep.subr.mxu0 0.0
    %1461 = vmatpush1.msra.mxu0 0.0
    %1462 = vmatprep.mubr.f32.mxu0 0.0
    %1463 = vmatmul.mubr.f32.gmra.mrb[0].mxu0 %v1396
    %v1464 = vpop.f32.mrb[0].mxu0
    %v1465 = vadd.f32 0.0, %v1464
    %v1466 = vpop.f32.mrb[0].mxu0
    %1467 = vdwg.mxu0
    %v1468 = vadd.f32 %v1395, %v1465
    %v1469 = vxor.u32 %v1393, 2147483648
    %v1470 = vmul.f32 %v1469, 1.442695
    %v1471 = vpow.pop %v1470
    %v1472 = vadd.f32 %v1471, 1.0
    %v1473 = vrcp.pop %v1472
    %v1474 = vmul.f32 1.0, %v1473
    %v1475 = vtanh.pop %v1393
    %v1476 = vmul.f32 %v1474, %v1276
    %1478 = vrot.lane.b32.xlu0 %v1475, 64
    %v1479 = vpop.permute.xlu0 %1478
    %v1481 = vmul.f32 %v1474, %v1479
    %1483 = vrot.lane.b32.xlu0 %v1481, 32
    %v1484 = vpop.permute.xlu0 %1483
    %v1486 = vadd.f32 %v1476, %v1484
    %v1487 = vtanh.pop %v1486
    %1489 = vrot.lane.b32.xlu0 %v1487, 64
    %v1490 = vpop.permute.xlu0 %1489
    %v1492 = vmul.f32 %v1474, %v1490
    %v1493 = vxor.u32 %v1468, 2147483648
    %v1494 = vmul.f32 %v1493, 1.442695
    %v1495 = vpow.pop %v1494
    %v1496 = vadd.f32 %v1495, 1.0
    %v1497 = vrcp.pop %v1496
    %v1498 = vmul.f32 1.0, %v1497
    %v1499 = vtanh.pop %v1468
    %v1500 = vmul.f32 %v1498, %v1300
    %1502 = vrot.lane.b32.xlu0 %v1499, 64
    %v1503 = vpop.permute.xlu0 %1502
    %v1505 = vmul.f32 %v1498, %v1503
    %1507 = vrot.lane.b32.xlu0 %v1505, 32
    %v1508 = vpop.permute.xlu0 %1507
    %v1510 = vadd.f32 %v1500, %v1508
    %v1511 = vtanh.pop %v1510
    %1513 = vrot.lane.b32.xlu0 %v1511, 64
    %v1514 = vpop.permute.xlu0 %1513
    %v1516 = vmul.f32 %v1498, %v1514
    %1518 = vrot.lane.b32.xlu0 %v1492, 32
    %v1519 = vpop.permute.xlu0 %1518
    %s1521 = scalar_lea.vmem [#allocation4], 40
    %1522 = vst.msk [vmem:[%s1521] sm:$0xff] %vm272, %v1519
    %1524 = vrot.lane.b32.xlu0 %v1516, 32
    %v1525 = vpop.permute.xlu0 %1524
    %s1527 = scalar_lea.vmem [#allocation5], 16
    %1528 = vst.msk [vmem:[%s1527] sm:$0xff] %vm272, %v1525
    %s1529 = scalar_lea.vmem [#allocation2], 48
    %v1530 = vld [vmem:[%s1529] sm:$0xff]
    %v1531 = vsel %vm272, %v1519, 0
    %1533 = vmatprep.subr.mxu0 0.0
    %1534 = vmatpush1.msra.mxu0 %v263
    %1535 = vmatprep.subr.mxu0 0.0
    %1536 = vmatpush1.msra.mxu0 %v264
    %1537 = vmatprep.subr.mxu0 0.0
    %1538 = vmatpush1.msra.mxu0 %v265
    %1539 = vmatprep.subr.mxu0 0.0
    %1540 = vmatpush1.msra.mxu0 %v266
    %1541 = vmatprep.subr.mxu0 0.0
    %1542 = vmatpush1.msra.mxu0 0.0
    %1543 = vmatprep.subr.mxu0 0.0
    %1544 = vmatpush1.msra.mxu0 0.0
    %1545 = vmatprep.subr.mxu0 0.0
    %1546 = vmatpush1.msra.mxu0 0.0
    %1547 = vmatprep.subr.mxu0 0.0
    %1548 = vmatpush1.msra.mxu0 0.0
    %1549 = vmatprep.subr.mxu0 0.0
    %1550 = vmatpush1.msra.mxu0 0.0
    %1551 = vmatprep.subr.mxu0 0.0
    %1552 = vmatpush1.msra.mxu0 0.0
    %1553 = vmatprep.subr.mxu0 0.0
    %1554 = vmatpush1.msra.mxu0 0.0
    %1555 = vmatprep.subr.mxu0 0.0
    %1556 = vmatpush1.msra.mxu0 0.0
    %1557 = vmatprep.subr.mxu0 0.0
    %1558 = vmatpush1.msra.mxu0 0.0
    %1559 = vmatprep.subr.mxu0 0.0
    %1560 = vmatpush1.msra.mxu0 0.0
    %1561 = vmatprep.subr.mxu0 0.0
    %1562 = vmatpush1.msra.mxu0 0.0
    %1563 = vmatprep.subr.mxu0 0.0
    %1564 = vmatpush1.msra.mxu0 0.0
    %1565 = vmatprep.subr.mxu0 0.0
    %1566 = vmatpush1.msra.mxu0 0.0
    %1567 = vmatprep.subr.mxu0 0.0
    %1568 = vmatpush1.msra.mxu0 0.0
    %1569 = vmatprep.subr.mxu0 0.0
    %1570 = vmatpush1.msra.mxu0 0.0
    %1571 = vmatprep.subr.mxu0 0.0
    %1572 = vmatpush1.msra.mxu0 0.0
    %1573 = vmatprep.subr.mxu0 0.0
    %1574 = vmatpush1.msra.mxu0 0.0
    %1575 = vmatprep.subr.mxu0 0.0
    %1576 = vmatpush1.msra.mxu0 0.0
    %1577 = vmatprep.subr.mxu0 0.0
    %1578 = vmatpush1.msra.mxu0 0.0
    %1579 = vmatprep.subr.mxu0 0.0
    %1580 = vmatpush1.msra.mxu0 0.0
    %1581 = vmatprep.subr.mxu0 0.0
    %1582 = vmatpush1.msra.mxu0 0.0
    %1583 = vmatprep.subr.mxu0 0.0
    %1584 = vmatpush1.msra.mxu0 0.0
    %1585 = vmatprep.subr.mxu0 0.0
    %1586 = vmatpush1.msra.mxu0 0.0
    %1587 = vmatprep.subr.mxu0 0.0
    %1588 = vmatpush1.msra.mxu0 0.0
    %1589 = vmatprep.subr.mxu0 0.0
    %1590 = vmatpush1.msra.mxu0 0.0
    %1591 = vmatprep.subr.mxu0 0.0
    %1592 = vmatpush1.msra.mxu0 0.0
    %1593 = vmatprep.subr.mxu0 0.0
    %1594 = vmatpush1.msra.mxu0 0.0
    %1595 = vmatprep.subr.mxu0 0.0
    %1596 = vmatpush1.msra.mxu0 0.0
    %1597 = vmatprep.mubr.f32.mxu0 0.0
    %1598 = vmatmul.mubr.f32.gmra.mrb[0].mxu0 %v1531
    %v1599 = vpop.f32.mrb[0].mxu0
    %v1600 = vadd.f32 0.0, %v1599
    %v1601 = vpop.f32.mrb[0].mxu0
    %1602 = vdwg.mxu0
    %v1603 = vadd.f32 %v1530, %v1600
    %s1604 = scalar_lea.vmem [#allocation3], 8
    %v1605 = vld [vmem:[%s1604] sm:$0xff]
    %v1606 = vsel %vm272, %v1525, 0
    %1608 = vmatprep.subr.mxu0 0.0
    %1609 = vmatpush1.msra.mxu0 %v267
    %1610 = vmatprep.subr.mxu0 0.0
    %1611 = vmatpush1.msra.mxu0 %v268
    %1612 = vmatprep.subr.mxu0 0.0
    %1613 = vmatpush1.msra.mxu0 %v269
    %1614 = vmatprep.subr.mxu0 0.0
    %1615 = vmatpush1.msra.mxu0 %v270
    %1616 = vmatprep.subr.mxu0 0.0
    %1617 = vmatpush1.msra.mxu0 0.0
    %1618 = vmatprep.subr.mxu0 0.0
    %1619 = vmatpush1.msra.mxu0 0.0
    %1620 = vmatprep.subr.mxu0 0.0
    %1621 = vmatpush1.msra.mxu0 0.0
    %1622 = vmatprep.subr.mxu0 0.0
    %1623 = vmatpush1.msra.mxu0 0.0
    %1624 = vmatprep.subr.mxu0 0.0
    %1625 = vmatpush1.msra.mxu0 0.0
    %1626 = vmatprep.subr.mxu0 0.0
    %1627 = vmatpush1.msra.mxu0 0.0
    %1628 = vmatprep.subr.mxu0 0.0
    %1629 = vmatpush1.msra.mxu0 0.0
    %1630 = vmatprep.subr.mxu0 0.0
    %1631 = vmatpush1.msra.mxu0 0.0
    %1632 = vmatprep.subr.mxu0 0.0
    %1633 = vmatpush1.msra.mxu0 0.0
    %1634 = vmatprep.subr.mxu0 0.0
    %1635 = vmatpush1.msra.mxu0 0.0
    %1636 = vmatprep.subr.mxu0 0.0
    %1637 = vmatpush1.msra.mxu0 0.0
    %1638 = vmatprep.subr.mxu0 0.0
    %1639 = vmatpush1.msra.mxu0 0.0
    %1640 = vmatprep.subr.mxu0 0.0
    %1641 = vmatpush1.msra.mxu0 0.0
    %1642 = vmatprep.subr.mxu0 0.0
    %1643 = vmatpush1.msra.mxu0 0.0
    %1644 = vmatprep.subr.mxu0 0.0
    %1645 = vmatpush1.msra.mxu0 0.0
    %1646 = vmatprep.subr.mxu0 0.0
    %1647 = vmatpush1.msra.mxu0 0.0
    %1648 = vmatprep.subr.mxu0 0.0
    %1649 = vmatpush1.msra.mxu0 0.0
    %1650 = vmatprep.subr.mxu0 0.0
    %1651 = vmatpush1.msra.mxu0 0.0
    %1652 = vmatprep.subr.mxu0 0.0
    %1653 = vmatpush1.msra.mxu0 0.0
    %1654 = vmatprep.subr.mxu0 0.0
    %1655 = vmatpush1.msra.mxu0 0.0
    %1656 = vmatprep.subr.mxu0 0.0
    %1657 = vmatpush1.msra.mxu0 0.0
    %1658 = vmatprep.subr.mxu0 0.0
    %1659 = vmatpush1.msra.mxu0 0.0
    %1660 = vmatprep.subr.mxu0 0.0
    %1661 = vmatpush1.msra.mxu0 0.0
    %1662 = vmatprep.subr.mxu0 0.0
    %1663 = vmatpush1.msra.mxu0 0.0
    %1664 = vmatprep.subr.mxu0 0.0
    %1665 = vmatpush1.msra.mxu0 0.0
    %1666 = vmatprep.subr.mxu0 0.0
    %1667 = vmatpush1.msra.mxu0 0.0
    %1668 = vmatprep.subr.mxu0 0.0
    %1669 = vmatpush1.msra.mxu0 0.0
    %1670 = vmatprep.subr.mxu0 0.0
    %1671 = vmatpush1.msra.mxu0 0.0
    %1672 = vmatprep.mubr.f32.mxu0 0.0
    %1673 = vmatmul.mubr.f32.gmra.mrb[0].mxu0 %v1606
    %v1674 = vpop.f32.mrb[0].mxu0
    %v1675 = vadd.f32 0.0, %v1674
    %v1676 = vpop.f32.mrb[0].mxu0
    %1677 = vdwg.mxu0
    %v1678 = vadd.f32 %v1605, %v1675
    %v1679 = vxor.u32 %v1603, 2147483648
    %v1680 = vmul.f32 %v1679, 1.442695
    %v1681 = vpow.pop %v1680
    %v1682 = vadd.f32 %v1681, 1.0
    %v1683 = vrcp.pop %v1682
    %v1684 = vmul.f32 1.0, %v1683
    %v1685 = vtanh.pop %v1603
    %v1686 = vmul.f32 %v1684, %v1486
    %1688 = vrot.lane.b32.xlu0 %v1685, 64
    %v1689 = vpop.permute.xlu0 %1688
    %v1691 = vmul.f32 %v1684, %v1689
    %1693 = vrot.lane.b32.xlu0 %v1691, 32
    %v1694 = vpop.permute.xlu0 %1693
    %v1696 = vadd.f32 %v1686, %v1694
    %v1697 = vtanh.pop %v1696
    %1699 = vrot.lane.b32.xlu0 %v1697, 64
    %v1700 = vpop.permute.xlu0 %1699
    %v1702 = vmul.f32 %v1684, %v1700
    %v1703 = vxor.u32 %v1678, 2147483648
    %v1704 = vmul.f32 %v1703, 1.442695
    %v1705 = vpow.pop %v1704
    %v1706 = vadd.f32 %v1705, 1.0
    %v1707 = vrcp.pop %v1706
    %v1708 = vmul.f32 1.0, %v1707
    %v1709 = vtanh.pop %v1678
    %v1710 = vmul.f32 %v1708, %v1510
    %1712 = vrot.lane.b32.xlu0 %v1709, 64
    %v1713 = vpop.permute.xlu0 %1712
    %v1715 = vmul.f32 %v1708, %v1713
    %1717 = vrot.lane.b32.xlu0 %v1715, 32
    %v1718 = vpop.permute.xlu0 %1717
    %v1720 = vadd.f32 %v1710, %v1718
    %v1721 = vtanh.pop %v1720
    %1723 = vrot.lane.b32.xlu0 %v1721, 64
    %v1724 = vpop.permute.xlu0 %1723
    %v1726 = vmul.f32 %v1708, %v1724
    %1728 = vrot.lane.b32.xlu0 %v1702, 32
    %v1729 = vpop.permute.xlu0 %1728
    %s1731 = scalar_lea.vmem [#allocation4], 48
    %1732 = vst.msk [vmem:[%s1731] sm:$0xff] %vm272, %v1729
    %1734 = vrot.lane.b32.xlu0 %v1726, 32
    %v1735 = vpop.permute.xlu0 %1734
    %s1737 = scalar_lea.vmem [#allocation5], 8
    %1738 = vst.msk [vmem:[%s1737] sm:$0xff] %vm272, %v1735
    %s1739 = scalar_lea.vmem [#allocation2], 56
    %v1740 = vld [vmem:[%s1739] sm:$0xff]
    %v1741 = vsel %vm272, %v1729, 0
    %1743 = vmatprep.subr.mxu0 0.0
    %1744 = vmatpush1.msra.mxu0 %v263
    %1745 = vmatprep.subr.mxu0 0.0
    %1746 = vmatpush1.msra.mxu0 %v264
    %1747 = vmatprep.subr.mxu0 0.0
    %1748 = vmatpush1.msra.mxu0 %v265
    %1749 = vmatprep.subr.mxu0 0.0
    %1750 = vmatpush1.msra.mxu0 %v266
    %1751 = vmatprep.subr.mxu0 0.0
    %1752 = vmatpush1.msra.mxu0 0.0
    %1753 = vmatprep.subr.mxu0 0.0
    %1754 = vmatpush1.msra.mxu0 0.0
    %1755 = vmatprep.subr.mxu0 0.0
    %1756 = vmatpush1.msra.mxu0 0.0
    %1757 = vmatprep.subr.mxu0 0.0
    %1758 = vmatpush1.msra.mxu0 0.0
    %1759 = vmatprep.subr.mxu0 0.0
    %1760 = vmatpush1.msra.mxu0 0.0
    %1761 = vmatprep.subr.mxu0 0.0
    %1762 = vmatpush1.msra.mxu0 0.0
    %1763 = vmatprep.subr.mxu0 0.0
    %1764 = vmatpush1.msra.mxu0 0.0
    %1765 = vmatprep.subr.mxu0 0.0
    %1766 = vmatpush1.msra.mxu0 0.0
    %1767 = vmatprep.subr.mxu0 0.0
    %1768 = vmatpush1.msra.mxu0 0.0
    %1769 = vmatprep.subr.mxu0 0.0
    %1770 = vmatpush1.msra.mxu0 0.0
    %1771 = vmatprep.subr.mxu0 0.0
    %1772 = vmatpush1.msra.mxu0 0.0
    %1773 = vmatprep.subr.mxu0 0.0
    %1774 = vmatpush1.msra.mxu0 0.0
    %1775 = vmatprep.subr.mxu0 0.0
    %1776 = vmatpush1.msra.mxu0 0.0
    %1777 = vmatprep.subr.mxu0 0.0
    %1778 = vmatpush1.msra.mxu0 0.0
    %1779 = vmatprep.subr.mxu0 0.0
    %1780 = vmatpush1.msra.mxu0 0.0
    %1781 = vmatprep.subr.mxu0 0.0
    %1782 = vmatpush1.msra.mxu0 0.0
    %1783 = vmatprep.subr.mxu0 0.0
    %1784 = vmatpush1.msra.mxu0 0.0
    %1785 = vmatprep.subr.mxu0 0.0
    %1786 = vmatpush1.msra.mxu0 0.0
    %1787 = vmatprep.subr.mxu0 0.0
    %1788 = vmatpush1.msra.mxu0 0.0
    %1789 = vmatprep.subr.mxu0 0.0
    %1790 = vmatpush1.msra.mxu0 0.0
    %1791 = vmatprep.subr.mxu0 0.0
    %1792 = vmatpush1.msra.mxu0 0.0
    %1793 = vmatprep.subr.mxu0 0.0
    %1794 = vmatpush1.msra.mxu0 0.0
    %1795 = vmatprep.subr.mxu0 0.0
    %1796 = vmatpush1.msra.mxu0 0.0
    %1797 = vmatprep.subr.mxu0 0.0
    %1798 = vmatpush1.msra.mxu0 0.0
    %1799 = vmatprep.subr.mxu0 0.0
    %1800 = vmatpush1.msra.mxu0 0.0
    %1801 = vmatprep.subr.mxu0 0.0
    %1802 = vmatpush1.msra.mxu0 0.0
    %1803 = vmatprep.subr.mxu0 0.0
    %1804 = vmatpush1.msra.mxu0 0.0
    %1805 = vmatprep.subr.mxu0 0.0
    %1806 = vmatpush1.msra.mxu0 0.0
    %1807 = vmatprep.mubr.f32.mxu0 0.0
    %1808 = vmatmul.mubr.f32.gmra.mrb[0].mxu0 %v1741
    %v1809 = vpop.f32.mrb[0].mxu0
    %v1810 = vadd.f32 0.0, %v1809
    %v1811 = vpop.f32.mrb[0].mxu0
    %1812 = vdwg.mxu0
    %v1813 = vadd.f32 %v1740, %v1810
    %v1814 = vld [vmem:[#allocation3] sm:$0xff]
    %v1815 = vsel %vm272, %v1735, 0
    %1817 = vmatprep.subr.mxu0 0.0
    %1818 = vmatpush1.msra.mxu0 %v267
    %1819 = vmatprep.subr.mxu0 0.0
    %1820 = vmatpush1.msra.mxu0 %v268
    %1821 = vmatprep.subr.mxu0 0.0
    %1822 = vmatpush1.msra.mxu0 %v269
    %1823 = vmatprep.subr.mxu0 0.0
    %1824 = vmatpush1.msra.mxu0 %v270
    %1825 = vmatprep.subr.mxu0 0.0
    %1826 = vmatpush1.msra.mxu0 0.0
    %1827 = vmatprep.subr.mxu0 0.0
    %1828 = vmatpush1.msra.mxu0 0.0
    %1829 = vmatprep.subr.mxu0 0.0
    %1830 = vmatpush1.msra.mxu0 0.0
    %1831 = vmatprep.subr.mxu0 0.0
    %1832 = vmatpush1.msra.mxu0 0.0
    %1833 = vmatprep.subr.mxu0 0.0
    %1834 = vmatpush1.msra.mxu0 0.0
    %1835 = vmatprep.subr.mxu0 0.0
    %1836 = vmatpush1.msra.mxu0 0.0
    %1837 = vmatprep.subr.mxu0 0.0
    %1838 = vmatpush1.msra.mxu0 0.0
    %1839 = vmatprep.subr.mxu0 0.0
    %1840 = vmatpush1.msra.mxu0 0.0
    %1841 = vmatprep.subr.mxu0 0.0
    %1842 = vmatpush1.msra.mxu0 0.0
    %1843 = vmatprep.subr.mxu0 0.0
    %1844 = vmatpush1.msra.mxu0 0.0
    %1845 = vmatprep.subr.mxu0 0.0
    %1846 = vmatpush1.msra.mxu0 0.0
    %1847 = vmatprep.subr.mxu0 0.0
    %1848 = vmatpush1.msra.mxu0 0.0
    %1849 = vmatprep.subr.mxu0 0.0
    %1850 = vmatpush1.msra.mxu0 0.0
    %1851 = vmatprep.subr.mxu0 0.0
    %1852 = vmatpush1.msra.mxu0 0.0
    %1853 = vmatprep.subr.mxu0 0.0
    %1854 = vmatpush1.msra.mxu0 0.0
    %1855 = vmatprep.subr.mxu0 0.0
    %1856 = vmatpush1.msra.mxu0 0.0
    %1857 = vmatprep.subr.mxu0 0.0
    %1858 = vmatpush1.msra.mxu0 0.0
    %1859 = vmatprep.subr.mxu0 0.0
    %1860 = vmatpush1.msra.mxu0 0.0
    %1861 = vmatprep.subr.mxu0 0.0
    %1862 = vmatpush1.msra.mxu0 0.0
    %1863 = vmatprep.subr.mxu0 0.0
    %1864 = vmatpush1.msra.mxu0 0.0
    %1865 = vmatprep.subr.mxu0 0.0
    %1866 = vmatpush1.msra.mxu0 0.0
    %1867 = vmatprep.subr.mxu0 0.0
    %1868 = vmatpush1.msra.mxu0 0.0
    %1869 = vmatprep.subr.mxu0 0.0
    %1870 = vmatpush1.msra.mxu0 0.0
    %1871 = vmatprep.subr.mxu0 0.0
    %1872 = vmatpush1.msra.mxu0 0.0
    %1873 = vmatprep.subr.mxu0 0.0
    %1874 = vmatpush1.msra.mxu0 0.0
    %1875 = vmatprep.subr.mxu0 0.0
    %1876 = vmatpush1.msra.mxu0 0.0
    %1877 = vmatprep.subr.mxu0 0.0
    %1878 = vmatpush1.msra.mxu0 0.0
    %1879 = vmatprep.subr.mxu0 0.0
    %1880 = vmatpush1.msra.mxu0 0.0
    %1881 = vmatprep.mubr.f32.mxu0 0.0
    %1882 = vmatmul.mubr.f32.gmra.mrb[0].mxu0 %v1815
    %v1883 = vpop.f32.mrb[0].mxu0
    %v1884 = vadd.f32 0.0, %v1883
    %v1885 = vpop.f32.mrb[0].mxu0
    %1886 = vdwg.mxu0
    %v1887 = vadd.f32 %v1814, %v1884
    %v1888 = vxor.u32 %v1813, 2147483648
    %v1889 = vmul.f32 %v1888, 1.442695
    %v1890 = vpow.pop %v1889
    %v1891 = vadd.f32 %v1890, 1.0
    %v1892 = vrcp.pop %v1891
    %v1893 = vmul.f32 1.0, %v1892
    %v1894 = vtanh.pop %v1813
    %v1895 = vmul.f32 %v1893, %v1696
    %1897 = vrot.lane.b32.xlu0 %v1894, 64
    %v1898 = vpop.permute.xlu0 %1897
    %v1900 = vmul.f32 %v1893, %v1898
    %1902 = vrot.lane.b32.xlu0 %v1900, 32
    %v1903 = vpop.permute.xlu0 %1902
    %v1905 = vadd.f32 %v1895, %v1903
    %v1906 = vtanh.pop %v1905
    %1908 = vrot.lane.b32.xlu0 %v1906, 64
    %v1909 = vpop.permute.xlu0 %1908
    %v1911 = vmul.f32 %v1893, %v1909
    %v1912 = vxor.u32 %v1887, 2147483648
    %v1913 = vmul.f32 %v1912, 1.442695
    %v1914 = vpow.pop %v1913
    %v1915 = vadd.f32 %v1914, 1.0
    %v1916 = vrcp.pop %v1915
    %v1917 = vmul.f32 1.0, %v1916
    %v1918 = vtanh.pop %v1887
    %v1919 = vmul.f32 %v1917, %v1720
    %1921 = vrot.lane.b32.xlu0 %v1918, 64
    %v1922 = vpop.permute.xlu0 %1921
    %v1924 = vmul.f32 %v1917, %v1922
    %1926 = vrot.lane.b32.xlu0 %v1924, 32
    %v1927 = vpop.permute.xlu0 %1926
    %v1929 = vadd.f32 %v1919, %v1927
    %v1930 = vtanh.pop %v1929
    %1932 = vrot.lane.b32.xlu0 %v1930, 64
    %v1933 = vpop.permute.xlu0 %1932
    %v1935 = vmul.f32 %v1917, %v1933
    %1937 = vrot.lane.b32.xlu0 %v1911, 32
    %v1938 = vpop.permute.xlu0 %1937
    %s1940 = scalar_lea.vmem [#allocation4], 56
    %1941 = vst.msk [vmem:[%s1940] sm:$0xff] %vm272, %v1938
    %1943 = vrot.lane.b32.xlu0 %v1935, 32
    %v1944 = vpop.permute.xlu0 %1943
    %1946 = vst.msk [vmem:[#allocation5] sm:$0xff] %vm272, %v1944
    %v1947 = vld [vmem:[#allocation4] sm:$0xff]
    %v1948 = vld [vmem:[#allocation4 + $0x8] sm:$0xff]
    %v1949 = vld [vmem:[#allocation4 + $0x10] sm:$0xff]
    %v1950 = vld [vmem:[#allocation4 + $0x18] sm:$0xff]
    %v1951 = vld [vmem:[#allocation4 + $0x20] sm:$0xff]
    %v1952 = vld [vmem:[#allocation4 + $0x28] sm:$0xff]
    %v1953 = vld [vmem:[#allocation4 + $0x30] sm:$0xff]
    %v1954 = vld [vmem:[#allocation4 + $0x38] sm:$0xff]
    %v1955 = vld [vmem:[#allocation5] sm:$0xff]
    %v1956 = vld [vmem:[#allocation5 + $0x8] sm:$0xff]
    %v1957 = vld [vmem:[#allocation5 + $0x10] sm:$0xff]
    %v1958 = vld [vmem:[#allocation5 + $0x18] sm:$0xff]
    %v1959 = vld [vmem:[#allocation5 + $0x20] sm:$0xff]
    %v1960 = vld [vmem:[#allocation5 + $0x28] sm:$0xff]
    %v1961 = vld [vmem:[#allocation5 + $0x30] sm:$0xff]
    %v1962 = vld [vmem:[#allocation5 + $0x38] sm:$0xff]
    %v1963 = vld [vmem:[%s5] sm:$0xff]
    %v1964 = vld [vmem:[%s5 + $0x8] sm:$0xff]
    %v1965 = vld [vmem:[%s5 + $0x10] sm:$0xff]
    %v1966 = vld [vmem:[%s5 + $0x18] sm:$0xff]
    %v1967 = vld [vmem:[%s5 + $0x20] sm:$0xff]
    %v1968 = vld [vmem:[%s5 + $0x28] sm:$0xff]
    %v1969 = vld [vmem:[%s5 + $0x30] sm:$0xff]
    %v1970 = vld [vmem:[%s5 + $0x38] sm:$0xff]
    %v1971 = vld [vmem:[%s5 + $0x40] sm:$0xff]
    %v1972 = vld [vmem:[%s5 + $0x48] sm:$0xff]
    %v1973 = vld [vmem:[%s5 + $0x50] sm:$0xff]
    %v1974 = vld [vmem:[%s5 + $0x58] sm:$0xff]
    %v1975 = vld [vmem:[%s5 + $0x60] sm:$0xff]
    %v1976 = vld [vmem:[%s5 + $0x68] sm:$0xff]
    %v1977 = vld [vmem:[%s5 + $0x70] sm:$0xff]
    %v1978 = vld [vmem:[%s5 + $0x78] sm:$0xff]
    %v1980 = vsel %vm272, %v1955, 0
    %v1983 = vsel %vm272, %v1956, 0
    %v1986 = vsel %vm272, %v1957, 0
    %v1989 = vsel %vm272, %v1958, 0
    %v1992 = vsel %vm272, %v1959, 0
    %v1995 = vsel %vm272, %v1960, 0
    %v1998 = vsel %vm272, %v1961, 0
    %v2001 = vsel %vm272, %v1962, 0
    %2003 = vmatprep.subr.mxu0 %v1972
    %2004 = vmatpush1.msra.mxu0 %v1971
    %2005 = vmatprep.subr.mxu0 %v1974
    %2006 = vmatpush1.msra.mxu0 %v1973
    %2007 = vmatprep.subr.mxu0 %v1976
    %2008 = vmatpush1.msra.mxu0 %v1975
    %2009 = vmatprep.subr.mxu0 %v1978
    %2010 = vmatpush1.msra.mxu0 %v1977
    %2011 = vmatprep.subr.mxu0 0.0
    %2012 = vmatpush1.msra.mxu0 0.0
    %2013 = vmatprep.subr.mxu0 0.0
    %2014 = vmatpush1.msra.mxu0 0.0
    %2015 = vmatprep.subr.mxu0 0.0
    %2016 = vmatpush1.msra.mxu0 0.0
    %2017 = vmatprep.subr.mxu0 0.0
    %2018 = vmatpush1.msra.mxu0 0.0
    %2019 = vmatprep.subr.mxu0 0.0
    %2020 = vmatpush1.msra.mxu0 0.0
    %2021 = vmatprep.subr.mxu0 0.0
    %2022 = vmatpush1.msra.mxu0 0.0
    %2023 = vmatprep.subr.mxu0 0.0
    %2024 = vmatpush1.msra.mxu0 0.0
    %2025 = vmatprep.subr.mxu0 0.0
    %2026 = vmatpush1.msra.mxu0 0.0
    %2027 = vmatprep.subr.mxu0 0.0
    %2028 = vmatpush1.msra.mxu0 0.0
    %2029 = vmatprep.subr.mxu0 0.0
    %2030 = vmatpush1.msra.mxu0 0.0
    %2031 = vmatprep.subr.mxu0 0.0
    %2032 = vmatpush1.msra.mxu0 0.0
    %2033 = vmatprep.subr.mxu0 0.0
    %2034 = vmatpush1.msra.mxu0 0.0
    %2035 = vmatprep.subr.mxu0 0.0
    %2036 = vmatpush1.msra.mxu0 0.0
    %2037 = vmatprep.subr.mxu0 0.0
    %2038 = vmatpush1.msra.mxu0 0.0
    %2039 = vmatprep.subr.mxu0 0.0
    %2040 = vmatpush1.msra.mxu0 0.0
    %2041 = vmatprep.subr.mxu0 0.0
    %2042 = vmatpush1.msra.mxu0 0.0
    %2043 = vmatprep.subr.mxu0 0.0
    %2044 = vmatpush1.msra.mxu0 0.0
    %2045 = vmatprep.subr.mxu0 0.0
    %2046 = vmatpush1.msra.mxu0 0.0
    %2047 = vmatprep.subr.mxu0 0.0
    %2048 = vmatpush1.msra.mxu0 0.0
    %2049 = vmatprep.subr.mxu0 0.0
    %2050 = vmatpush1.msra.mxu0 0.0
    %2051 = vmatprep.subr.mxu0 0.0
    %2052 = vmatpush1.msra.mxu0 0.0
    %2053 = vmatprep.subr.mxu0 0.0
    %2054 = vmatpush1.msra.mxu0 0.0
    %2055 = vmatprep.subr.mxu0 0.0
    %2056 = vmatpush1.msra.mxu0 0.0
    %2057 = vmatprep.subr.mxu0 0.0
    %2058 = vmatpush1.msra.mxu0 0.0
    %2059 = vmatprep.subr.mxu0 0.0
    %2060 = vmatpush1.msra.mxu0 0.0
    %2061 = vmatprep.subr.mxu0 0.0
    %2062 = vmatpush1.msra.mxu0 0.0
    %2063 = vmatprep.subr.mxu0 0.0
    %2064 = vmatpush1.msra.mxu0 0.0
    %2065 = vmatprep.subr.mxu0 0.0
    %2066 = vmatpush1.msra.mxu0 0.0
    %2067 = vmatprep.mubr.f32.mxu0 0.0
    %2068 = vmatmul.mubr.f32.gmra.mrb[0].mxu0 %v1980
    %v2069 = vpop.f32.mrb[0].mxu0
    %v2070 = vadd.f32 0.0, %v2069
    %v2071 = vpop.f32.mrb[0].mxu0
    %v2072 = vadd.f32 0.0, %v2071
    %2073 = vmatprep.mubr.f32.mxu0 0.0
    %2074 = vmatmul.mubr.f32.gmra.mrb[0].mxu0 %v1983
    %v2075 = vpop.f32.mrb[0].mxu0
    %v2076 = vadd.f32 0.0, %v2075
    %v2077 = vpop.f32.mrb[0].mxu0
    %v2078 = vadd.f32 0.0, %v2077
    %2079 = vmatprep.mubr.f32.mxu0 0.0
    %2080 = vmatmul.mubr.f32.gmra.mrb[0].mxu0 %v1986
    %v2081 = vpop.f32.mrb[0].mxu0
    %v2082 = vadd.f32 0.0, %v2081
    %v2083 = vpop.f32.mrb[0].mxu0
    %v2084 = vadd.f32 0.0, %v2083
    %2085 = vmatprep.mubr.f32.mxu0 0.0
    %2086 = vmatmul.mubr.f32.gmra.mrb[0].mxu0 %v1989
    %v2087 = vpop.f32.mrb[0].mxu0
    %v2088 = vadd.f32 0.0, %v2087
    %v2089 = vpop.f32.mrb[0].mxu0
    %v2090 = vadd.f32 0.0, %v2089
    %2091 = vmatprep.mubr.f32.mxu0 0.0
    %2092 = vmatmul.mubr.f32.gmra.mrb[0].mxu0 %v1992
    %v2093 = vpop.f32.mrb[0].mxu0
    %v2094 = vadd.f32 0.0, %v2093
    %v2095 = vpop.f32.mrb[0].mxu0
    %v2096 = vadd.f32 0.0, %v2095
    %2097 = vmatprep.mubr.f32.mxu0 0.0
    %2098 = vmatmul.mubr.f32.gmra.mrb[0].mxu0 %v1995
    %v2099 = vpop.f32.mrb[0].mxu0
    %v2100 = vadd.f32 0.0, %v2099
    %v2101 = vpop.f32.mrb[0].mxu0
    %v2102 = vadd.f32 0.0, %v2101
    %2103 = vmatprep.mubr.f32.mxu0 0.0
    %2104 = vmatmul.mubr.f32.gmra.mrb[0].mxu0 %v1998
    %v2105 = vpop.f32.mrb[0].mxu0
    %v2106 = vadd.f32 0.0, %v2105
    %v2107 = vpop.f32.mrb[0].mxu0
    %v2108 = vadd.f32 0.0, %v2107
    %2109 = vmatprep.mubr.f32.mxu0 0.0
    %2110 = vmatmul.mubr.f32.gmra.mrb[0].mxu0 %v2001
    %v2111 = vpop.f32.mrb[0].mxu0
    %v2112 = vadd.f32 0.0, %v2111
    %v2113 = vpop.f32.mrb[0].mxu0
    %v2114 = vadd.f32 0.0, %v2113
    %2115 = vdwg.mxu0
    %v2117 = vsel %vm272, %v1947, 0
    %v2120 = vsel %vm272, %v1948, 0
    %v2123 = vsel %vm272, %v1949, 0
    %v2126 = vsel %vm272, %v1950, 0
    %v2129 = vsel %vm272, %v1951, 0
    %v2132 = vsel %vm272, %v1952, 0
    %v2135 = vsel %vm272, %v1953, 0
    %v2138 = vsel %vm272, %v1954, 0
    %2140 = vmatprep.subr.mxu0 %v1964
    %2141 = vmatpush1.msra.mxu0 %v1963
    %2142 = vmatprep.subr.mxu0 %v1966
    %2143 = vmatpush1.msra.mxu0 %v1965
    %2144 = vmatprep.subr.mxu0 %v1968
    %2145 = vmatpush1.msra.mxu0 %v1967
    %2146 = vmatprep.subr.mxu0 %v1970
    %2147 = vmatpush1.msra.mxu0 %v1969
    %2148 = vmatprep.subr.mxu0 0.0
    %2149 = vmatpush1.msra.mxu0 0.0
    %2150 = vmatprep.subr.mxu0 0.0
    %2151 = vmatpush1.msra.mxu0 0.0
    %2152 = vmatprep.subr.mxu0 0.0
    %2153 = vmatpush1.msra.mxu0 0.0
    %2154 = vmatprep.subr.mxu0 0.0
    %2155 = vmatpush1.msra.mxu0 0.0
    %2156 = vmatprep.subr.mxu0 0.0
    %2157 = vmatpush1.msra.mxu0 0.0
    %2158 = vmatprep.subr.mxu0 0.0
    %2159 = vmatpush1.msra.mxu0 0.0
    %2160 = vmatprep.subr.mxu0 0.0
    %2161 = vmatpush1.msra.mxu0 0.0
    %2162 = vmatprep.subr.mxu0 0.0
    %2163 = vmatpush1.msra.mxu0 0.0
    %2164 = vmatprep.subr.mxu0 0.0
    %2165 = vmatpush1.msra.mxu0 0.0
    %2166 = vmatprep.subr.mxu0 0.0
    %2167 = vmatpush1.msra.mxu0 0.0
    %2168 = vmatprep.subr.mxu0 0.0
    %2169 = vmatpush1.msra.mxu0 0.0
    %2170 = vmatprep.subr.mxu0 0.0
    %2171 = vmatpush1.msra.mxu0 0.0
    %2172 = vmatprep.subr.mxu0 0.0
    %2173 = vmatpush1.msra.mxu0 0.0
    %2174 = vmatprep.subr.mxu0 0.0
    %2175 = vmatpush1.msra.mxu0 0.0
    %2176 = vmatprep.subr.mxu0 0.0
    %2177 = vmatpush1.msra.mxu0 0.0
    %2178 = vmatprep.subr.mxu0 0.0
    %2179 = vmatpush1.msra.mxu0 0.0
    %2180 = vmatprep.subr.mxu0 0.0
    %2181 = vmatpush1.msra.mxu0 0.0
    %2182 = vmatprep.subr.mxu0 0.0
    %2183 = vmatpush1.msra.mxu0 0.0
    %2184 = vmatprep.subr.mxu0 0.0
    %2185 = vmatpush1.msra.mxu0 0.0
    %2186 = vmatprep.subr.mxu0 0.0
    %2187 = vmatpush1.msra.mxu0 0.0
    %2188 = vmatprep.subr.mxu0 0.0
    %2189 = vmatpush1.msra.mxu0 0.0
    %2190 = vmatprep.subr.mxu0 0.0
    %2191 = vmatpush1.msra.mxu0 0.0
    %2192 = vmatprep.subr.mxu0 0.0
    %2193 = vmatpush1.msra.mxu0 0.0
    %2194 = vmatprep.subr.mxu0 0.0
    %2195 = vmatpush1.msra.mxu0 0.0
    %2196 = vmatprep.subr.mxu0 0.0
    %2197 = vmatpush1.msra.mxu0 0.0
    %2198 = vmatprep.subr.mxu0 0.0
    %2199 = vmatpush1.msra.mxu0 0.0
    %2200 = vmatprep.subr.mxu0 0.0
    %2201 = vmatpush1.msra.mxu0 0.0
    %2202 = vmatprep.subr.mxu0 0.0
    %2203 = vmatpush1.msra.mxu0 0.0
    %2204 = vmatprep.mubr.f32.mxu0 0.0
    %2205 = vmatmul.mubr.f32.gmra.mrb[0].mxu0 %v2117
    %v2206 = vpop.f32.mrb[0].mxu0
    %v2207 = vadd.f32 %v2070, %v2206
    %v2208 = vpop.f32.mrb[0].mxu0
    %v2209 = vadd.f32 %v2072, %v2208
    %2210 = vmatprep.mubr.f32.mxu0 0.0
    %2211 = vmatmul.mubr.f32.gmra.mrb[0].mxu0 %v2120
    %v2212 = vpop.f32.mrb[0].mxu0
    %v2213 = vadd.f32 %v2076, %v2212
    %v2214 = vpop.f32.mrb[0].mxu0
    %v2215 = vadd.f32 %v2078, %v2214
    %2216 = vmatprep.mubr.f32.mxu0 0.0
    %2217 = vmatmul.mubr.f32.gmra.mrb[0].mxu0 %v2123
    %v2218 = vpop.f32.mrb[0].mxu0
    %v2219 = vadd.f32 %v2082, %v2218
    %v2220 = vpop.f32.mrb[0].mxu0
    %v2221 = vadd.f32 %v2084, %v2220
    %2222 = vmatprep.mubr.f32.mxu0 0.0
    %2223 = vmatmul.mubr.f32.gmra.mrb[0].mxu0 %v2126
    %v2224 = vpop.f32.mrb[0].mxu0
    %v2225 = vadd.f32 %v2088, %v2224
    %v2226 = vpop.f32.mrb[0].mxu0
    %v2227 = vadd.f32 %v2090, %v2226
    %2228 = vmatprep.mubr.f32.mxu0 0.0
    %2229 = vmatmul.mubr.f32.gmra.mrb[0].mxu0 %v2129
    %v2230 = vpop.f32.mrb[0].mxu0
    %v2231 = vadd.f32 %v2094, %v2230
    %v2232 = vpop.f32.mrb[0].mxu0
    %v2233 = vadd.f32 %v2096, %v2232
    %2234 = vmatprep.mubr.f32.mxu0 0.0
    %2235 = vmatmul.mubr.f32.gmra.mrb[0].mxu0 %v2132
    %v2236 = vpop.f32.mrb[0].mxu0
    %v2237 = vadd.f32 %v2100, %v2236
    %v2238 = vpop.f32.mrb[0].mxu0
    %v2239 = vadd.f32 %v2102, %v2238
    %2240 = vmatprep.mubr.f32.mxu0 0.0
    %2241 = vmatmul.mubr.f32.gmra.mrb[0].mxu0 %v2135
    %v2242 = vpop.f32.mrb[0].mxu0
    %v2243 = vadd.f32 %v2106, %v2242
    %v2244 = vpop.f32.mrb[0].mxu0
    %v2245 = vadd.f32 %v2108, %v2244
    %2246 = vmatprep.mubr.f32.mxu0 0.0
    %2247 = vmatmul.mubr.f32.gmra.mrb[0].mxu0 %v2138
    %v2248 = vpop.f32.mrb[0].mxu0
    %v2249 = vadd.f32 %v2112, %v2248
    %v2250 = vpop.f32.mrb[0].mxu0
    %v2251 = vadd.f32 %v2114, %v2250
    %2252 = vdwg.mxu0
    %v2253 = vld [vmem:[%s8] sm:$0x3]
    %v2255 = vlaneseq
    %v2256 = vshrl.u32 %v2255, 7
    %v2257 = vsub.s32 0, %v2256
    %v2258 = vrot.slane %v2253, %v2257
    %v2259 = vlaneseq
    %v2260 = vshrl.u32 %v2259, 7
    %v2261 = vsub.s32 1, %v2260
    %v2262 = vrot.slane %v2253, %v2261
    %v2265 = vadd.f32 %v2207, %v2258
    %v2266 = vadd.f32 %v2209, %v2262
    %v2267 = vadd.f32 %v2213, %v2258
    %v2268 = vadd.f32 %v2215, %v2262
    %v2269 = vadd.f32 %v2219, %v2258
    %v2270 = vadd.f32 %v2221, %v2262
    %v2271 = vadd.f32 %v2225, %v2258
    %v2272 = vadd.f32 %v2227, %v2262
    %v2273 = vadd.f32 %v2231, %v2258
    %v2274 = vadd.f32 %v2233, %v2262
    %v2275 = vadd.f32 %v2237, %v2258
    %v2276 = vadd.f32 %v2239, %v2262
    %v2277 = vadd.f32 %v2243, %v2258
    %v2278 = vadd.f32 %v2245, %v2262
    %v2279 = vadd.f32 %v2249, %v2258
    %v2280 = vadd.f32 %v2251, %v2262
    %2281 = vst [vmem:[#allocation2] sm:$0xff] %v2265
    %2282 = vst [vmem:[#allocation2 + $0x8] sm:$0xff] %v2267
    %2283 = vst [vmem:[#allocation2 + $0x10] sm:$0xff] %v2269
    %2284 = vst [vmem:[#allocation2 + $0x18] sm:$0xff] %v2271
    %2285 = vst [vmem:[#allocation2 + $0x20] sm:$0xff] %v2273
    %2286 = vst [vmem:[#allocation2 + $0x28] sm:$0xff] %v2275
    %2287 = vst [vmem:[#allocation2 + $0x30] sm:$0xff] %v2277
    %2288 = vst [vmem:[#allocation2 + $0x38] sm:$0xff] %v2279
    %2289 = vst [vmem:[#allocation3] sm:$0xff] %v2266
    %2290 = vst [vmem:[#allocation3 + $0x8] sm:$0xff] %v2268
    %2291 = vst [vmem:[#allocation3 + $0x10] sm:$0xff] %v2270
    %2292 = vst [vmem:[#allocation3 + $0x18] sm:$0xff] %v2272
    %2293 = vst [vmem:[#allocation3 + $0x20] sm:$0xff] %v2274
    %2294 = vst [vmem:[#allocation3 + $0x28] sm:$0xff] %v2276
    %2295 = vst [vmem:[#allocation3 + $0x30] sm:$0xff] %v2278
    %2296 = vst [vmem:[#allocation3 + $0x38] sm:$0xff] %v2280
    %v2297 = vld [vmem:[#allocation9] sm:$0xff]
    %v2298 = vld [vmem:[#allocation9 + $0x8] sm:$0xff]
    %v2299 = vld [vmem:[#allocation9 + $0x10] sm:$0xff]
    %v2300 = vld [vmem:[#allocation9 + $0x18] sm:$0xff]
    %v2301 = vld [vmem:[#allocation11] sm:$0xff]
    %v2302 = vld [vmem:[#allocation11 + $0x8] sm:$0xff]
    %v2303 = vld [vmem:[#allocation11 + $0x10] sm:$0xff]
    %v2304 = vld [vmem:[#allocation11 + $0x18] sm:$0xff]
    %v2305 = vld [vmem:[#allocation2] sm:$0xff]
    %2306 = vmatprep.subr.mxu0 0.0
    %2307 = vmatpush1.msra.mxu0 %v2297
    %2308 = vmatprep.subr.mxu0 0.0
    %2309 = vmatpush1.msra.mxu0 %v2298
    %2310 = vmatprep.subr.mxu0 0.0
    %2311 = vmatpush1.msra.mxu0 %v2299
    %2312 = vmatprep.subr.mxu0 0.0
    %2313 = vmatpush1.msra.mxu0 %v2300
    %2314 = vmatprep.subr.mxu0 0.0
    %2315 = vmatpush1.msra.mxu0 0.0
    %2316 = vmatprep.subr.mxu0 0.0
    %2317 = vmatpush1.msra.mxu0 0.0
    %2318 = vmatprep.subr.mxu0 0.0
    %2319 = vmatpush1.msra.mxu0 0.0
    %2320 = vmatprep.subr.mxu0 0.0
    %2321 = vmatpush1.msra.mxu0 0.0
    %2322 = vmatprep.subr.mxu0 0.0
    %2323 = vmatpush1.msra.mxu0 0.0
    %2324 = vmatprep.subr.mxu0 0.0
    %2325 = vmatpush1.msra.mxu0 0.0
    %2326 = vmatprep.subr.mxu0 0.0
    %2327 = vmatpush1.msra.mxu0 0.0
    %2328 = vmatprep.subr.mxu0 0.0
    %2329 = vmatpush1.msra.mxu0 0.0
    %2330 = vmatprep.subr.mxu0 0.0
    %2331 = vmatpush1.msra.mxu0 0.0
    %2332 = vmatprep.subr.mxu0 0.0
    %2333 = vmatpush1.msra.mxu0 0.0
    %2334 = vmatprep.subr.mxu0 0.0
    %2335 = vmatpush1.msra.mxu0 0.0
    %2336 = vmatprep.subr.mxu0 0.0
    %2337 = vmatpush1.msra.mxu0 0.0
    %2338 = vmatprep.subr.mxu0 0.0
    %2339 = vmatpush1.msra.mxu0 0.0
    %2340 = vmatprep.subr.mxu0 0.0
    %2341 = vmatpush1.msra.mxu0 0.0
    %2342 = vmatprep.subr.mxu0 0.0
    %2343 = vmatpush1.msra.mxu0 0.0
    %2344 = vmatprep.subr.mxu0 0.0
    %2345 = vmatpush1.msra.mxu0 0.0
    %2346 = vmatprep.subr.mxu0 0.0
    %2347 = vmatpush1.msra.mxu0 0.0
    %2348 = vmatprep.subr.mxu0 0.0
    %2349 = vmatpush1.msra.mxu0 0.0
    %2350 = vmatprep.subr.mxu0 0.0
    %2351 = vmatpush1.msra.mxu0 0.0
    %2352 = vmatprep.subr.mxu0 0.0
    %2353 = vmatpush1.msra.mxu0 0.0
    %2354 = vmatprep.subr.mxu0 0.0
    %2355 = vmatpush1.msra.mxu0 0.0
    %2356 = vmatprep.subr.mxu0 0.0
    %2357 = vmatpush1.msra.mxu0 0.0
    %2358 = vmatprep.subr.mxu0 0.0
    %2359 = vmatpush1.msra.mxu0 0.0
    %2360 = vmatprep.subr.mxu0 0.0
    %2361 = vmatpush1.msra.mxu0 0.0
    %2362 = vmatprep.subr.mxu0 0.0
    %2363 = vmatpush1.msra.mxu0 0.0
    %2364 = vmatprep.subr.mxu0 0.0
    %2365 = vmatpush1.msra.mxu0 0.0
    %2366 = vmatprep.subr.mxu0 0.0
    %2367 = vmatpush1.msra.mxu0 0.0
    %2368 = vmatprep.subr.mxu0 0.0
    %2369 = vmatpush1.msra.mxu0 0.0
    %2370 = vmatprep.mubr.f32.mxu0 0.0
    %2371 = vmatmul.mubr.f32.gmra.mrb[0].mxu0 %v274
    %v2372 = vpop.f32.mrb[0].mxu0
    %v2373 = vadd.f32 0.0, %v2372
    %v2374 = vpop.f32.mrb[0].mxu0
    %2375 = vdwg.mxu0
    %v2376 = vadd.f32 %v2305, %v2373
    %v2377 = vld [vmem:[%s347] sm:$0xff]
    %2378 = vmatprep.subr.mxu0 0.0
    %2379 = vmatpush1.msra.mxu0 %v2301
    %2380 = vmatprep.subr.mxu0 0.0
    %2381 = vmatpush1.msra.mxu0 %v2302
    %2382 = vmatprep.subr.mxu0 0.0
    %2383 = vmatpush1.msra.mxu0 %v2303
    %2384 = vmatprep.subr.mxu0 0.0
    %2385 = vmatpush1.msra.mxu0 %v2304
    %2386 = vmatprep.subr.mxu0 0.0
    %2387 = vmatpush1.msra.mxu0 0.0
    %2388 = vmatprep.subr.mxu0 0.0
    %2389 = vmatpush1.msra.mxu0 0.0
    %2390 = vmatprep.subr.mxu0 0.0
    %2391 = vmatpush1.msra.mxu0 0.0
    %2392 = vmatprep.subr.mxu0 0.0
    %2393 = vmatpush1.msra.mxu0 0.0
    %2394 = vmatprep.subr.mxu0 0.0
    %2395 = vmatpush1.msra.mxu0 0.0
    %2396 = vmatprep.subr.mxu0 0.0
    %2397 = vmatpush1.msra.mxu0 0.0
    %2398 = vmatprep.subr.mxu0 0.0
    %2399 = vmatpush1.msra.mxu0 0.0
    %2400 = vmatprep.subr.mxu0 0.0
    %2401 = vmatpush1.msra.mxu0 0.0
    %2402 = vmatprep.subr.mxu0 0.0
    %2403 = vmatpush1.msra.mxu0 0.0
    %2404 = vmatprep.subr.mxu0 0.0
    %2405 = vmatpush1.msra.mxu0 0.0
    %2406 = vmatprep.subr.mxu0 0.0
    %2407 = vmatpush1.msra.mxu0 0.0
    %2408 = vmatprep.subr.mxu0 0.0
    %2409 = vmatpush1.msra.mxu0 0.0
    %2410 = vmatprep.subr.mxu0 0.0
    %2411 = vmatpush1.msra.mxu0 0.0
    %2412 = vmatprep.subr.mxu0 0.0
    %2413 = vmatpush1.msra.mxu0 0.0
    %2414 = vmatprep.subr.mxu0 0.0
    %2415 = vmatpush1.msra.mxu0 0.0
    %2416 = vmatprep.subr.mxu0 0.0
    %2417 = vmatpush1.msra.mxu0 0.0
    %2418 = vmatprep.subr.mxu0 0.0
    %2419 = vmatpush1.msra.mxu0 0.0
    %2420 = vmatprep.subr.mxu0 0.0
    %2421 = vmatpush1.msra.mxu0 0.0
    %2422 = vmatprep.subr.mxu0 0.0
    %2423 = vmatpush1.msra.mxu0 0.0
    %2424 = vmatprep.subr.mxu0 0.0
    %2425 = vmatpush1.msra.mxu0 0.0
    %2426 = vmatprep.subr.mxu0 0.0
    %2427 = vmatpush1.msra.mxu0 0.0
    %2428 = vmatprep.subr.mxu0 0.0
    %2429 = vmatpush1.msra.mxu0 0.0
    %2430 = vmatprep.subr.mxu0 0.0
    %2431 = vmatpush1.msra.mxu0 0.0
    %2432 = vmatprep.subr.mxu0 0.0
    %2433 = vmatpush1.msra.mxu0 0.0
    %2434 = vmatprep.subr.mxu0 0.0
    %2435 = vmatpush1.msra.mxu0 0.0
    %2436 = vmatprep.subr.mxu0 0.0
    %2437 = vmatpush1.msra.mxu0 0.0
    %2438 = vmatprep.subr.mxu0 0.0
    %2439 = vmatpush1.msra.mxu0 0.0
    %2440 = vmatprep.subr.mxu0 0.0
    %2441 = vmatpush1.msra.mxu0 0.0
    %2442 = vmatprep.mubr.f32.mxu0 0.0
    %2443 = vmatmul.mubr.f32.gmra.mrb[0].mxu0 %v274
    %v2444 = vpop.f32.mrb[0].mxu0
    %v2445 = vadd.f32 0.0, %v2444
    %v2446 = vpop.f32.mrb[0].mxu0
    %2447 = vdwg.mxu0
    %v2448 = vadd.f32 %v2377, %v2445
    %v2449 = vxor.u32 %v2376, 2147483648
    %v2450 = vmul.f32 %v2449, 1.442695
    %v2451 = vpow.pop %v2450
    %v2452 = vadd.f32 %v2451, 1.0
    %v2453 = vrcp.pop %v2452
    %v2454 = vmul.f32 1.0, %v2453
    %v2455 = vtanh.pop %v2376
    %v2456 = vmul.f32 %v2454, 0.0
    %2458 = vrot.lane.b32.xlu0 %v2455, 64
    %v2459 = vpop.permute.xlu0 %2458
    %v2461 = vmul.f32 %v2454, %v2459
    %2463 = vrot.lane.b32.xlu0 %v2461, 32
    %v2464 = vpop.permute.xlu0 %2463
    %v2466 = vadd.f32 %v2456, %v2464
    %v2467 = vtanh.pop %v2466
    %2469 = vrot.lane.b32.xlu0 %v2467, 64
    %v2470 = vpop.permute.xlu0 %2469
    %v2472 = vmul.f32 %v2454, %v2470
    %v2473 = vxor.u32 %v2448, 2147483648
    %v2474 = vmul.f32 %v2473, 1.442695
    %v2475 = vpow.pop %v2474
    %v2476 = vadd.f32 %v2475, 1.0
    %v2477 = vrcp.pop %v2476
    %v2478 = vmul.f32 1.0, %v2477
    %v2479 = vtanh.pop %v2448
    %v2480 = vmul.f32 %v2478, 0.0
    %2482 = vrot.lane.b32.xlu0 %v2479, 64
    %v2483 = vpop.permute.xlu0 %2482
    %v2485 = vmul.f32 %v2478, %v2483
    %2487 = vrot.lane.b32.xlu0 %v2485, 32
    %v2488 = vpop.permute.xlu0 %2487
    %v2490 = vadd.f32 %v2480, %v2488
    %v2491 = vtanh.pop %v2490
    %2493 = vrot.lane.b32.xlu0 %v2491, 64
    %v2494 = vpop.permute.xlu0 %2493
    %v2496 = vmul.f32 %v2478, %v2494
    %2498 = vrot.lane.b32.xlu0 %v2472, 32
    %v2499 = vpop.permute.xlu0 %2498
    %2501 = vst.msk [vmem:[#allocation4] sm:$0xff] %vm272, %v2499
    %2503 = vrot.lane.b32.xlu0 %v2496, 32
    %v2504 = vpop.permute.xlu0 %2503
    %2506 = vst.msk [vmem:[%s477] sm:$0xff] %vm272, %v2504
    %v2507 = vld [vmem:[%s479] sm:$0xff]
    %v2508 = vsel %vm272, %v2499, 0
    %2510 = vmatprep.subr.mxu0 0.0
    %2511 = vmatpush1.msra.mxu0 %v2297
    %2512 = vmatprep.subr.mxu0 0.0
    %2513 = vmatpush1.msra.mxu0 %v2298
    %2514 = vmatprep.subr.mxu0 0.0
    %2515 = vmatpush1.msra.mxu0 %v2299
    %2516 = vmatprep.subr.mxu0 0.0
    %2517 = vmatpush1.msra.mxu0 %v2300
    %2518 = vmatprep.subr.mxu0 0.0
    %2519 = vmatpush1.msra.mxu0 0.0
    %2520 = vmatprep.subr.mxu0 0.0
    %2521 = vmatpush1.msra.mxu0 0.0
    %2522 = vmatprep.subr.mxu0 0.0
    %2523 = vmatpush1.msra.mxu0 0.0
    %2524 = vmatprep.subr.mxu0 0.0
    %2525 = vmatpush1.msra.mxu0 0.0
    %2526 = vmatprep.subr.mxu0 0.0
    %2527 = vmatpush1.msra.mxu0 0.0
    %2528 = vmatprep.subr.mxu0 0.0
    %2529 = vmatpush1.msra.mxu0 0.0
    %2530 = vmatprep.subr.mxu0 0.0
    %2531 = vmatpush1.msra.mxu0 0.0
    %2532 = vmatprep.subr.mxu0 0.0
    %2533 = vmatpush1.msra.mxu0 0.0
    %2534 = vmatprep.subr.mxu0 0.0
    %2535 = vmatpush1.msra.mxu0 0.0
    %2536 = vmatprep.subr.mxu0 0.0
    %2537 = vmatpush1.msra.mxu0 0.0
    %2538 = vmatprep.subr.mxu0 0.0
    %2539 = vmatpush1.msra.mxu0 0.0
    %2540 = vmatprep.subr.mxu0 0.0
    %2541 = vmatpush1.msra.mxu0 0.0
    %2542 = vmatprep.subr.mxu0 0.0
    %2543 = vmatpush1.msra.mxu0 0.0
    %2544 = vmatprep.subr.mxu0 0.0
    %2545 = vmatpush1.msra.mxu0 0.0
    %2546 = vmatprep.subr.mxu0 0.0
    %2547 = vmatpush1.msra.mxu0 0.0
    %2548 = vmatprep.subr.mxu0 0.0
    %2549 = vmatpush1.msra.mxu0 0.0
    %2550 = vmatprep.subr.mxu0 0.0
    %2551 = vmatpush1.msra.mxu0 0.0
    %2552 = vmatprep.subr.mxu0 0.0
    %2553 = vmatpush1.msra.mxu0 0.0
    %2554 = vmatprep.subr.mxu0 0.0
    %2555 = vmatpush1.msra.mxu0 0.0
    %2556 = vmatprep.subr.mxu0 0.0
    %2557 = vmatpush1.msra.mxu0 0.0
    %2558 = vmatprep.subr.mxu0 0.0
    %2559 = vmatpush1.msra.mxu0 0.0
    %2560 = vmatprep.subr.mxu0 0.0
    %2561 = vmatpush1.msra.mxu0 0.0
    %2562 = vmatprep.subr.mxu0 0.0
    %2563 = vmatpush1.msra.mxu0 0.0
    %2564 = vmatprep.subr.mxu0 0.0
    %2565 = vmatpush1.msra.mxu0 0.0
    %2566 = vmatprep.subr.mxu0 0.0
    %2567 = vmatpush1.msra.mxu0 0.0
    %2568 = vmatprep.subr.mxu0 0.0
    %2569 = vmatpush1.msra.mxu0 0.0
    %2570 = vmatprep.subr.mxu0 0.0
    %2571 = vmatpush1.msra.mxu0 0.0
    %2572 = vmatprep.subr.mxu0 0.0
    %2573 = vmatpush1.msra.mxu0 0.0
    %2574 = vmatprep.mubr.f32.mxu0 0.0
    %2575 = vmatmul.mubr.f32.gmra.mrb[0].mxu0 %v2508
    %v2576 = vpop.f32.mrb[0].mxu0
    %v2577 = vadd.f32 0.0, %v2576
    %v2578 = vpop.f32.mrb[0].mxu0
    %2579 = vdwg.mxu0
    %v2580 = vadd.f32 %v2507, %v2577
    %v2581 = vld [vmem:[%s554] sm:$0xff]
    %v2582 = vsel %vm272, %v2504, 0
    %2584 = vmatprep.subr.mxu0 0.0
    %2585 = vmatpush1.msra.mxu0 %v2301
    %2586 = vmatprep.subr.mxu0 0.0
    %2587 = vmatpush1.msra.mxu0 %v2302
    %2588 = vmatprep.subr.mxu0 0.0
    %2589 = vmatpush1.msra.mxu0 %v2303
    %2590 = vmatprep.subr.mxu0 0.0
    %2591 = vmatpush1.msra.mxu0 %v2304
    %2592 = vmatprep.subr.mxu0 0.0
    %2593 = vmatpush1.msra.mxu0 0.0
    %2594 = vmatprep.subr.mxu0 0.0
    %2595 = vmatpush1.msra.mxu0 0.0
    %2596 = vmatprep.subr.mxu0 0.0
    %2597 = vmatpush1.msra.mxu0 0.0
    %2598 = vmatprep.subr.mxu0 0.0
    %2599 = vmatpush1.msra.mxu0 0.0
    %2600 = vmatprep.subr.mxu0 0.0
    %2601 = vmatpush1.msra.mxu0 0.0
    %2602 = vmatprep.subr.mxu0 0.0
    %2603 = vmatpush1.msra.mxu0 0.0
    %2604 = vmatprep.subr.mxu0 0.0
    %2605 = vmatpush1.msra.mxu0 0.0
    %2606 = vmatprep.subr.mxu0 0.0
    %2607 = vmatpush1.msra.mxu0 0.0
    %2608 = vmatprep.subr.mxu0 0.0
    %2609 = vmatpush1.msra.mxu0 0.0
    %2610 = vmatprep.subr.mxu0 0.0
    %2611 = vmatpush1.msra.mxu0 0.0
    %2612 = vmatprep.subr.mxu0 0.0
    %2613 = vmatpush1.msra.mxu0 0.0
    %2614 = vmatprep.subr.mxu0 0.0
    %2615 = vmatpush1.msra.mxu0 0.0
    %2616 = vmatprep.subr.mxu0 0.0
    %2617 = vmatpush1.msra.mxu0 0.0
    %2618 = vmatprep.subr.mxu0 0.0
    %2619 = vmatpush1.msra.mxu0 0.0
    %2620 = vmatprep.subr.mxu0 0.0
    %2621 = vmatpush1.msra.mxu0 0.0
    %2622 = vmatprep.subr.mxu0 0.0
    %2623 = vmatpush1.msra.mxu0 0.0
    %2624 = vmatprep.subr.mxu0 0.0
    %2625 = vmatpush1.msra.mxu0 0.0
    %2626 = vmatprep.subr.mxu0 0.0
    %2627 = vmatpush1.msra.mxu0 0.0
    %2628 = vmatprep.subr.mxu0 0.0
    %2629 = vmatpush1.msra.mxu0 0.0
    %2630 = vmatprep.subr.mxu0 0.0
    %2631 = vmatpush1.msra.mxu0 0.0
    %2632 = vmatprep.subr.mxu0 0.0
    %2633 = vmatpush1.msra.mxu0 0.0
    %2634 = vmatprep.subr.mxu0 0.0
    %2635 = vmatpush1.msra.mxu0 0.0
    %2636 = vmatprep.subr.mxu0 0.0
    %2637 = vmatpush1.msra.mxu0 0.0
    %2638 = vmatprep.subr.mxu0 0.0
    %2639 = vmatpush1.msra.mxu0 0.0
    %2640 = vmatprep.subr.mxu0 0.0
    %2641 = vmatpush1.msra.mxu0 0.0
    %2642 = vmatprep.subr.mxu0 0.0
    %2643 = vmatpush1.msra.mxu0 0.0
    %2644 = vmatprep.subr.mxu0 0.0
    %2645 = vmatpush1.msra.mxu0 0.0
    %2646 = vmatprep.subr.mxu0 0.0
    %2647 = vmatpush1.msra.mxu0 0.0
    %2648 = vmatprep.mubr.f32.mxu0 0.0
    %2649 = vmatmul.mubr.f32.gmra.mrb[0].mxu0 %v2582
    %v2650 = vpop.f32.mrb[0].mxu0
    %v2651 = vadd.f32 0.0, %v2650
    %v2652 = vpop.f32.mrb[0].mxu0
    %2653 = vdwg.mxu0
    %v2654 = vadd.f32 %v2581, %v2651
    %v2655 = vxor.u32 %v2580, 2147483648
    %v2656 = vmul.f32 %v2655, 1.442695
    %v2657 = vpow.pop %v2656
    %v2658 = vadd.f32 %v2657, 1.0
    %v2659 = vrcp.pop %v2658
    %v2660 = vmul.f32 1.0, %v2659
    %v2661 = vtanh.pop %v2580
    %v2662 = vmul.f32 %v2660, %v2466
    %2664 = vrot.lane.b32.xlu0 %v2661, 64
    %v2665 = vpop.permute.xlu0 %2664
    %v2667 = vmul.f32 %v2660, %v2665
    %2669 = vrot.lane.b32.xlu0 %v2667, 32
    %v2670 = vpop.permute.xlu0 %2669
    %v2672 = vadd.f32 %v2662, %v2670
    %v2673 = vtanh.pop %v2672
    %2675 = vrot.lane.b32.xlu0 %v2673, 64
    %v2676 = vpop.permute.xlu0 %2675
    %v2678 = vmul.f32 %v2660, %v2676
    %v2679 = vxor.u32 %v2654, 2147483648
    %v2680 = vmul.f32 %v2679, 1.442695
    %v2681 = vpow.pop %v2680
    %v2682 = vadd.f32 %v2681, 1.0
    %v2683 = vrcp.pop %v2682
    %v2684 = vmul.f32 1.0, %v2683
    %v2685 = vtanh.pop %v2654
    %v2686 = vmul.f32 %v2684, %v2490
    %2688 = vrot.lane.b32.xlu0 %v2685, 64
    %v2689 = vpop.permute.xlu0 %2688
    %v2691 = vmul.f32 %v2684, %v2689
    %2693 = vrot.lane.b32.xlu0 %v2691, 32
    %v2694 = vpop.permute.xlu0 %2693
    %v2696 = vadd.f32 %v2686, %v2694
    %v2697 = vtanh.pop %v2696
    %2699 = vrot.lane.b32.xlu0 %v2697, 64
    %v2700 = vpop.permute.xlu0 %2699
    %v2702 = vmul.f32 %v2684, %v2700
    %2704 = vrot.lane.b32.xlu0 %v2678, 32
    %v2705 = vpop.permute.xlu0 %2704
    %2707 = vst.msk [vmem:[%s681] sm:$0xff] %vm272, %v2705
    %2709 = vrot.lane.b32.xlu0 %v2702, 32
    %v2710 = vpop.permute.xlu0 %2709
    %2712 = vst.msk [vmem:[%s687] sm:$0xff] %vm272, %v2710
    %v2713 = vld [vmem:[%s689] sm:$0xff]
    %v2714 = vsel %vm272, %v2705, 0
    %2716 = vmatprep.subr.mxu0 0.0
    %2717 = vmatpush1.msra.mxu0 %v2297
    %2718 = vmatprep.subr.mxu0 0.0
    %2719 = vmatpush1.msra.mxu0 %v2298
    %2720 = vmatprep.subr.mxu0 0.0
    %2721 = vmatpush1.msra.mxu0 %v2299
    %2722 = vmatprep.subr.mxu0 0.0
    %2723 = vmatpush1.msra.mxu0 %v2300
    %2724 = vmatprep.subr.mxu0 0.0
    %2725 = vmatpush1.msra.mxu0 0.0
    %2726 = vmatprep.subr.mxu0 0.0
    %2727 = vmatpush1.msra.mxu0 0.0
    %2728 = vmatprep.subr.mxu0 0.0
    %2729 = vmatpush1.msra.mxu0 0.0
    %2730 = vmatprep.subr.mxu0 0.0
    %2731 = vmatpush1.msra.mxu0 0.0
    %2732 = vmatprep.subr.mxu0 0.0
    %2733 = vmatpush1.msra.mxu0 0.0
    %2734 = vmatprep.subr.mxu0 0.0
    %2735 = vmatpush1.msra.mxu0 0.0
    %2736 = vmatprep.subr.mxu0 0.0
    %2737 = vmatpush1.msra.mxu0 0.0
    %2738 = vmatprep.subr.mxu0 0.0
    %2739 = vmatpush1.msra.mxu0 0.0
    %2740 = vmatprep.subr.mxu0 0.0
    %2741 = vmatpush1.msra.mxu0 0.0
    %2742 = vmatprep.subr.mxu0 0.0
    %2743 = vmatpush1.msra.mxu0 0.0
    %2744 = vmatprep.subr.mxu0 0.0
    %2745 = vmatpush1.msra.mxu0 0.0
    %2746 = vmatprep.subr.mxu0 0.0
    %2747 = vmatpush1.msra.mxu0 0.0
    %2748 = vmatprep.subr.mxu0 0.0
    %2749 = vmatpush1.msra.mxu0 0.0
    %2750 = vmatprep.subr.mxu0 0.0
    %2751 = vmatpush1.msra.mxu0 0.0
    %2752 = vmatprep.subr.mxu0 0.0
    %2753 = vmatpush1.msra.mxu0 0.0
    %2754 = vmatprep.subr.mxu0 0.0
    %2755 = vmatpush1.msra.mxu0 0.0
    %2756 = vmatprep.subr.mxu0 0.0
    %2757 = vmatpush1.msra.mxu0 0.0
    %2758 = vmatprep.subr.mxu0 0.0
    %2759 = vmatpush1.msra.mxu0 0.0
    %2760 = vmatprep.subr.mxu0 0.0
    %2761 = vmatpush1.msra.mxu0 0.0
    %2762 = vmatprep.subr.mxu0 0.0
    %2763 = vmatpush1.msra.mxu0 0.0
    %2764 = vmatprep.subr.mxu0 0.0
    %2765 = vmatpush1.msra.mxu0 0.0
    %2766 = vmatprep.subr.mxu0 0.0
    %2767 = vmatpush1.msra.mxu0 0.0
    %2768 = vmatprep.subr.mxu0 0.0
    %2769 = vmatpush1.msra.mxu0 0.0
    %2770 = vmatprep.subr.mxu0 0.0
    %2771 = vmatpush1.msra.mxu0 0.0
    %2772 = vmatprep.subr.mxu0 0.0
    %2773 = vmatpush1.msra.mxu0 0.0
    %2774 = vmatprep.subr.mxu0 0.0
    %2775 = vmatpush1.msra.mxu0 0.0
    %2776 = vmatprep.subr.mxu0 0.0
    %2777 = vmatpush1.msra.mxu0 0.0
    %2778 = vmatprep.subr.mxu0 0.0
    %2779 = vmatpush1.msra.mxu0 0.0
    %2780 = vmatprep.mubr.f32.mxu0 0.0
    %2781 = vmatmul.mubr.f32.gmra.mrb[0].mxu0 %v2714
    %v2782 = vpop.f32.mrb[0].mxu0
    %v2783 = vadd.f32 0.0, %v2782
    %v2784 = vpop.f32.mrb[0].mxu0
    %2785 = vdwg.mxu0
    %v2786 = vadd.f32 %v2713, %v2783
    %v2787 = vld [vmem:[%s764] sm:$0xff]
    %v2788 = vsel %vm272, %v2710, 0
    %2790 = vmatprep.subr.mxu0 0.0
    %2791 = vmatpush1.msra.mxu0 %v2301
    %2792 = vmatprep.subr.mxu0 0.0
    %2793 = vmatpush1.msra.mxu0 %v2302
    %2794 = vmatprep.subr.mxu0 0.0
    %2795 = vmatpush1.msra.mxu0 %v2303
    %2796 = vmatprep.subr.mxu0 0.0
    %2797 = vmatpush1.msra.mxu0 %v2304
    %2798 = vmatprep.subr.mxu0 0.0
    %2799 = vmatpush1.msra.mxu0 0.0
    %2800 = vmatprep.subr.mxu0 0.0
    %2801 = vmatpush1.msra.mxu0 0.0
    %2802 = vmatprep.subr.mxu0 0.0
    %2803 = vmatpush1.msra.mxu0 0.0
    %2804 = vmatprep.subr.mxu0 0.0
    %2805 = vmatpush1.msra.mxu0 0.0
    %2806 = vmatprep.subr.mxu0 0.0
    %2807 = vmatpush1.msra.mxu0 0.0
    %2808 = vmatprep.subr.mxu0 0.0
    %2809 = vmatpush1.msra.mxu0 0.0
    %2810 = vmatprep.subr.mxu0 0.0
    %2811 = vmatpush1.msra.mxu0 0.0
    %2812 = vmatprep.subr.mxu0 0.0
    %2813 = vmatpush1.msra.mxu0 0.0
    %2814 = vmatprep.subr.mxu0 0.0
    %2815 = vmatpush1.msra.mxu0 0.0
    %2816 = vmatprep.subr.mxu0 0.0
    %2817 = vmatpush1.msra.mxu0 0.0
    %2818 = vmatprep.subr.mxu0 0.0
    %2819 = vmatpush1.msra.mxu0 0.0
    %2820 = vmatprep.subr.mxu0 0.0
    %2821 = vmatpush1.msra.mxu0 0.0
    %2822 = vmatprep.subr.mxu0 0.0
    %2823 = vmatpush1.msra.mxu0 0.0
    %2824 = vmatprep.subr.mxu0 0.0
    %2825 = vmatpush1.msra.mxu0 0.0
    %2826 = vmatprep.subr.mxu0 0.0
    %2827 = vmatpush1.msra.mxu0 0.0
    %2828 = vmatprep.subr.mxu0 0.0
    %2829 = vmatpush1.msra.mxu0 0.0
    %2830 = vmatprep.subr.mxu0 0.0
    %2831 = vmatpush1.msra.mxu0 0.0
    %2832 = vmatprep.subr.mxu0 0.0
    %2833 = vmatpush1.msra.mxu0 0.0
    %2834 = vmatprep.subr.mxu0 0.0
    %2835 = vmatpush1.msra.mxu0 0.0
    %2836 = vmatprep.subr.mxu0 0.0
    %2837 = vmatpush1.msra.mxu0 0.0
    %2838 = vmatprep.subr.mxu0 0.0
    %2839 = vmatpush1.msra.mxu0 0.0
    %2840 = vmatprep.subr.mxu0 0.0
    %2841 = vmatpush1.msra.mxu0 0.0
    %2842 = vmatprep.subr.mxu0 0.0
    %2843 = vmatpush1.msra.mxu0 0.0
    %2844 = vmatprep.subr.mxu0 0.0
    %2845 = vmatpush1.msra.mxu0 0.0
    %2846 = vmatprep.subr.mxu0 0.0
    %2847 = vmatpush1.msra.mxu0 0.0
    %2848 = vmatprep.subr.mxu0 0.0
    %2849 = vmatpush1.msra.mxu0 0.0
    %2850 = vmatprep.subr.mxu0 0.0
    %2851 = vmatpush1.msra.mxu0 0.0
    %2852 = vmatprep.subr.mxu0 0.0
    %2853 = vmatpush1.msra.mxu0 0.0
    %2854 = vmatprep.mubr.f32.mxu0 0.0
    %2855 = vmatmul.mubr.f32.gmra.mrb[0].mxu0 %v2788
    %v2856 = vpop.f32.mrb[0].mxu0
    %v2857 = vadd.f32 0.0, %v2856
    %v2858 = vpop.f32.mrb[0].mxu0
    %2859 = vdwg.mxu0
    %v2860 = vadd.f32 %v2787, %v2857
    %v2861 = vxor.u32 %v2786, 2147483648
    %v2862 = vmul.f32 %v2861, 1.442695
    %v2863 = vpow.pop %v2862
    %v2864 = vadd.f32 %v2863, 1.0
    %v2865 = vrcp.pop %v2864
    %v2866 = vmul.f32 1.0, %v2865
    %v2867 = vtanh.pop %v2786
    %v2868 = vmul.f32 %v2866, %v2672
    %2870 = vrot.lane.b32.xlu0 %v2867, 64
    %v2871 = vpop.permute.xlu0 %2870
    %v2873 = vmul.f32 %v2866, %v2871
    %2875 = vrot.lane.b32.xlu0 %v2873, 32
    %v2876 = vpop.permute.xlu0 %2875
    %v2878 = vadd.f32 %v2868, %v2876
    %v2879 = vtanh.pop %v2878
    %2881 = vrot.lane.b32.xlu0 %v2879, 64
    %v2882 = vpop.permute.xlu0 %2881
    %v2884 = vmul.f32 %v2866, %v2882
    %v2885 = vxor.u32 %v2860, 2147483648
    %v2886 = vmul.f32 %v2885, 1.442695
    %v2887 = vpow.pop %v2886
    %v2888 = vadd.f32 %v2887, 1.0
    %v2889 = vrcp.pop %v2888
    %v2890 = vmul.f32 1.0, %v2889
    %v2891 = vtanh.pop %v2860
    %v2892 = vmul.f32 %v2890, %v2696
    %2894 = vrot.lane.b32.xlu0 %v2891, 64
    %v2895 = vpop.permute.xlu0 %2894
    %v2897 = vmul.f32 %v2890, %v2895
    %2899 = vrot.lane.b32.xlu0 %v2897, 32
    %v2900 = vpop.permute.xlu0 %2899
    %v2902 = vadd.f32 %v2892, %v2900
    %v2903 = vtanh.pop %v2902
    %2905 = vrot.lane.b32.xlu0 %v2903, 64
    %v2906 = vpop.permute.xlu0 %2905
    %v2908 = vmul.f32 %v2890, %v2906
    %2910 = vrot.lane.b32.xlu0 %v2884, 32
    %v2911 = vpop.permute.xlu0 %2910
    %2913 = vst.msk [vmem:[%s891] sm:$0xff] %vm272, %v2911
    %2915 = vrot.lane.b32.xlu0 %v2908, 32
    %v2916 = vpop.permute.xlu0 %2915
    %2918 = vst.msk [vmem:[%s897] sm:$0xff] %vm272, %v2916
    %v2919 = vld [vmem:[%s899] sm:$0xff]
    %v2920 = vsel %vm272, %v2911, 0
    %2922 = vmatprep.subr.mxu0 0.0
    %2923 = vmatpush1.msra.mxu0 %v2297
    %2924 = vmatprep.subr.mxu0 0.0
    %2925 = vmatpush1.msra.mxu0 %v2298
    %2926 = vmatprep.subr.mxu0 0.0
    %2927 = vmatpush1.msra.mxu0 %v2299
    %2928 = vmatprep.subr.mxu0 0.0
    %2929 = vmatpush1.msra.mxu0 %v2300
    %2930 = vmatprep.subr.mxu0 0.0
    %2931 = vmatpush1.msra.mxu0 0.0
    %2932 = vmatprep.subr.mxu0 0.0
    %2933 = vmatpush1.msra.mxu0 0.0
    %2934 = vmatprep.subr.mxu0 0.0
    %2935 = vmatpush1.msra.mxu0 0.0
    %2936 = vmatprep.subr.mxu0 0.0
    %2937 = vmatpush1.msra.mxu0 0.0
    %2938 = vmatprep.subr.mxu0 0.0
    %2939 = vmatpush1.msra.mxu0 0.0
    %2940 = vmatprep.subr.mxu0 0.0
    %2941 = vmatpush1.msra.mxu0 0.0
    %2942 = vmatprep.subr.mxu0 0.0
    %2943 = vmatpush1.msra.mxu0 0.0
    %2944 = vmatprep.subr.mxu0 0.0
    %2945 = vmatpush1.msra.mxu0 0.0
    %2946 = vmatprep.subr.mxu0 0.0
    %2947 = vmatpush1.msra.mxu0 0.0
    %2948 = vmatprep.subr.mxu0 0.0
    %2949 = vmatpush1.msra.mxu0 0.0
    %2950 = vmatprep.subr.mxu0 0.0
    %2951 = vmatpush1.msra.mxu0 0.0
    %2952 = vmatprep.subr.mxu0 0.0
    %2953 = vmatpush1.msra.mxu0 0.0
    %2954 = vmatprep.subr.mxu0 0.0
    %2955 = vmatpush1.msra.mxu0 0.0
    %2956 = vmatprep.subr.mxu0 0.0
    %2957 = vmatpush1.msra.mxu0 0.0
    %2958 = vmatprep.subr.mxu0 0.0
    %2959 = vmatpush1.msra.mxu0 0.0
    %2960 = vmatprep.subr.mxu0 0.0
    %2961 = vmatpush1.msra.mxu0 0.0
    %2962 = vmatprep.subr.mxu0 0.0
    %2963 = vmatpush1.msra.mxu0 0.0
    %2964 = vmatprep.subr.mxu0 0.0
    %2965 = vmatpush1.msra.mxu0 0.0
    %2966 = vmatprep.subr.mxu0 0.0
    %2967 = vmatpush1.msra.mxu0 0.0
    %2968 = vmatprep.subr.mxu0 0.0
    %2969 = vmatpush1.msra.mxu0 0.0
    %2970 = vmatprep.subr.mxu0 0.0
    %2971 = vmatpush1.msra.mxu0 0.0
    %2972 = vmatprep.subr.mxu0 0.0
    %2973 = vmatpush1.msra.mxu0 0.0
    %2974 = vmatprep.subr.mxu0 0.0
    %2975 = vmatpush1.msra.mxu0 0.0
    %2976 = vmatprep.subr.mxu0 0.0
    %2977 = vmatpush1.msra.mxu0 0.0
    %2978 = vmatprep.subr.mxu0 0.0
    %2979 = vmatpush1.msra.mxu0 0.0
    %2980 = vmatprep.subr.mxu0 0.0
    %2981 = vmatpush1.msra.mxu0 0.0
    %2982 = vmatprep.subr.mxu0 0.0
    %2983 = vmatpush1.msra.mxu0 0.0
    %2984 = vmatprep.subr.mxu0 0.0
    %2985 = vmatpush1.msra.mxu0 0.0
    %2986 = vmatprep.mubr.f32.mxu0 0.0
    %2987 = vmatmul.mubr.f32.gmra.mrb[0].mxu0 %v2920
    %v2988 = vpop.f32.mrb[0].mxu0
    %v2989 = vadd.f32 0.0, %v2988
    %v2990 = vpop.f32.mrb[0].mxu0
    %2991 = vdwg.mxu0
    %v2992 = vadd.f32 %v2919, %v2989
    %v2993 = vld [vmem:[%s974] sm:$0xff]
    %v2994 = vsel %vm272, %v2916, 0
    %2996 = vmatprep.subr.mxu0 0.0
    %2997 = vmatpush1.msra.mxu0 %v2301
    %2998 = vmatprep.subr.mxu0 0.0
    %2999 = vmatpush1.msra.mxu0 %v2302
    %3000 = vmatprep.subr.mxu0 0.0
    %3001 = vmatpush1.msra.mxu0 %v2303
    %3002 = vmatprep.subr.mxu0 0.0
    %3003 = vmatpush1.msra.mxu0 %v2304
    %3004 = vmatprep.subr.mxu0 0.0
    %3005 = vmatpush1.msra.mxu0 0.0
    %3006 = vmatprep.subr.mxu0 0.0
    %3007 = vmatpush1.msra.mxu0 0.0
    %3008 = vmatprep.subr.mxu0 0.0
    %3009 = vmatpush1.msra.mxu0 0.0
    %3010 = vmatprep.subr.mxu0 0.0
    %3011 = vmatpush1.msra.mxu0 0.0
    %3012 = vmatprep.subr.mxu0 0.0
    %3013 = vmatpush1.msra.mxu0 0.0
    %3014 = vmatprep.subr.mxu0 0.0
    %3015 = vmatpush1.msra.mxu0 0.0
    %3016 = vmatprep.subr.mxu0 0.0
    %3017 = vmatpush1.msra.mxu0 0.0
    %3018 = vmatprep.subr.mxu0 0.0
    %3019 = vmatpush1.msra.mxu0 0.0
    %3020 = vmatprep.subr.mxu0 0.0
    %3021 = vmatpush1.msra.mxu0 0.0
    %3022 = vmatprep.subr.mxu0 0.0
    %3023 = vmatpush1.msra.mxu0 0.0
    %3024 = vmatprep.subr.mxu0 0.0
    %3025 = vmatpush1.msra.mxu0 0.0
    %3026 = vmatprep.subr.mxu0 0.0
    %3027 = vmatpush1.msra.mxu0 0.0
    %3028 = vmatprep.subr.mxu0 0.0
    %3029 = vmatpush1.msra.mxu0 0.0
    %3030 = vmatprep.subr.mxu0 0.0
    %3031 = vmatpush1.msra.mxu0 0.0
    %3032 = vmatprep.subr.mxu0 0.0
    %3033 = vmatpush1.msra.mxu0 0.0
    %3034 = vmatprep.subr.mxu0 0.0
    %3035 = vmatpush1.msra.mxu0 0.0
    %3036 = vmatprep.subr.mxu0 0.0
    %3037 = vmatpush1.msra.mxu0 0.0
    %3038 = vmatprep.subr.mxu0 0.0
    %3039 = vmatpush1.msra.mxu0 0.0
    %3040 = vmatprep.subr.mxu0 0.0
    %3041 = vmatpush1.msra.mxu0 0.0
    %3042 = vmatprep.subr.mxu0 0.0
    %3043 = vmatpush1.msra.mxu0 0.0
    %3044 = vmatprep.subr.mxu0 0.0
    %3045 = vmatpush1.msra.mxu0 0.0
    %3046 = vmatprep.subr.mxu0 0.0
    %3047 = vmatpush1.msra.mxu0 0.0
    %3048 = vmatprep.subr.mxu0 0.0
    %3049 = vmatpush1.msra.mxu0 0.0
    %3050 = vmatprep.subr.mxu0 0.0
    %3051 = vmatpush1.msra.mxu0 0.0
    %3052 = vmatprep.subr.mxu0 0.0
    %3053 = vmatpush1.msra.mxu0 0.0
    %3054 = vmatprep.subr.mxu0 0.0
    %3055 = vmatpush1.msra.mxu0 0.0
    %3056 = vmatprep.subr.mxu0 0.0
    %3057 = vmatpush1.msra.mxu0 0.0
    %3058 = vmatprep.subr.mxu0 0.0
    %3059 = vmatpush1.msra.mxu0 0.0
    %3060 = vmatprep.mubr.f32.mxu0 0.0
    %3061 = vmatmul.mubr.f32.gmra.mrb[0].mxu0 %v2994
    %v3062 = vpop.f32.mrb[0].mxu0
    %v3063 = vadd.f32 0.0, %v3062
    %v3064 = vpop.f32.mrb[0].mxu0
    %3065 = vdwg.mxu0
    %v3066 = vadd.f32 %v2993, %v3063
    %v3067 = vxor.u32 %v2992, 2147483648
    %v3068 = vmul.f32 %v3067, 1.442695
    %v3069 = vpow.pop %v3068
    %v3070 = vadd.f32 %v3069, 1.0
    %v3071 = vrcp.pop %v3070
    %v3072 = vmul.f32 1.0, %v3071
    %v3073 = vtanh.pop %v2992
    %v3074 = vmul.f32 %v3072, %v2878
    %3076 = vrot.lane.b32.xlu0 %v3073, 64
    %v3077 = vpop.permute.xlu0 %3076
    %v3079 = vmul.f32 %v3072, %v3077
    %3081 = vrot.lane.b32.xlu0 %v3079, 32
    %v3082 = vpop.permute.xlu0 %3081
    %v3084 = vadd.f32 %v3074, %v3082
    %v3085 = vtanh.pop %v3084
    %3087 = vrot.lane.b32.xlu0 %v3085, 64
    %v3088 = vpop.permute.xlu0 %3087
    %v3090 = vmul.f32 %v3072, %v3088
    %v3091 = vxor.u32 %v3066, 2147483648
    %v3092 = vmul.f32 %v3091, 1.442695
    %v3093 = vpow.pop %v3092
    %v3094 = vadd.f32 %v3093, 1.0
    %v3095 = vrcp.pop %v3094
    %v3096 = vmul.f32 1.0, %v3095
    %v3097 = vtanh.pop %v3066
    %v3098 = vmul.f32 %v3096, %v2902
    %3100 = vrot.lane.b32.xlu0 %v3097, 64
    %v3101 = vpop.permute.xlu0 %3100
    %v3103 = vmul.f32 %v3096, %v3101
    %3105 = vrot.lane.b32.xlu0 %v3103, 32
    %v3106 = vpop.permute.xlu0 %3105
    %v3108 = vadd.f32 %v3098, %v3106
    %v3109 = vtanh.pop %v3108
    %3111 = vrot.lane.b32.xlu0 %v3109, 64
    %v3112 = vpop.permute.xlu0 %3111
    %v3114 = vmul.f32 %v3096, %v3112
    %3116 = vrot.lane.b32.xlu0 %v3090, 32
    %v3117 = vpop.permute.xlu0 %3116
    %3119 = vst.msk [vmem:[%s1101] sm:$0xff] %vm272, %v3117
    %3121 = vrot.lane.b32.xlu0 %v3114, 32
    %v3122 = vpop.permute.xlu0 %3121
    %3124 = vst.msk [vmem:[%s1107] sm:$0xff] %vm272, %v3122
    %v3125 = vld [vmem:[%s1109] sm:$0xff]
    %v3126 = vsel %vm272, %v3117, 0
    %3128 = vmatprep.subr.mxu0 0.0
    %3129 = vmatpush1.msra.mxu0 %v2297
    %3130 = vmatprep.subr.mxu0 0.0
    %3131 = vmatpush1.msra.mxu0 %v2298
    %3132 = vmatprep.subr.mxu0 0.0
    %3133 = vmatpush1.msra.mxu0 %v2299
    %3134 = vmatprep.subr.mxu0 0.0
    %3135 = vmatpush1.msra.mxu0 %v2300
    %3136 = vmatprep.subr.mxu0 0.0
    %3137 = vmatpush1.msra.mxu0 0.0
    %3138 = vmatprep.subr.mxu0 0.0
    %3139 = vmatpush1.msra.mxu0 0.0
    %3140 = vmatprep.subr.mxu0 0.0
    %3141 = vmatpush1.msra.mxu0 0.0
    %3142 = vmatprep.subr.mxu0 0.0
    %3143 = vmatpush1.msra.mxu0 0.0
    %3144 = vmatprep.subr.mxu0 0.0
    %3145 = vmatpush1.msra.mxu0 0.0
    %3146 = vmatprep.subr.mxu0 0.0
    %3147 = vmatpush1.msra.mxu0 0.0
    %3148 = vmatprep.subr.mxu0 0.0
    %3149 = vmatpush1.msra.mxu0 0.0
    %3150 = vmatprep.subr.mxu0 0.0
    %3151 = vmatpush1.msra.mxu0 0.0
    %3152 = vmatprep.subr.mxu0 0.0
    %3153 = vmatpush1.msra.mxu0 0.0
    %3154 = vmatprep.subr.mxu0 0.0
    %3155 = vmatpush1.msra.mxu0 0.0
    %3156 = vmatprep.subr.mxu0 0.0
    %3157 = vmatpush1.msra.mxu0 0.0
    %3158 = vmatprep.subr.mxu0 0.0
    %3159 = vmatpush1.msra.mxu0 0.0
    %3160 = vmatprep.subr.mxu0 0.0
    %3161 = vmatpush1.msra.mxu0 0.0
    %3162 = vmatprep.subr.mxu0 0.0
    %3163 = vmatpush1.msra.mxu0 0.0
    %3164 = vmatprep.subr.mxu0 0.0
    %3165 = vmatpush1.msra.mxu0 0.0
    %3166 = vmatprep.subr.mxu0 0.0
    %3167 = vmatpush1.msra.mxu0 0.0
    %3168 = vmatprep.subr.mxu0 0.0
    %3169 = vmatpush1.msra.mxu0 0.0
    %3170 = vmatprep.subr.mxu0 0.0
    %3171 = vmatpush1.msra.mxu0 0.0
    %3172 = vmatprep.subr.mxu0 0.0
    %3173 = vmatpush1.msra.mxu0 0.0
    %3174 = vmatprep.subr.mxu0 0.0
    %3175 = vmatpush1.msra.mxu0 0.0
    %3176 = vmatprep.subr.mxu0 0.0
    %3177 = vmatpush1.msra.mxu0 0.0
    %3178 = vmatprep.subr.mxu0 0.0
    %3179 = vmatpush1.msra.mxu0 0.0
    %3180 = vmatprep.subr.mxu0 0.0
    %3181 = vmatpush1.msra.mxu0 0.0
    %3182 = vmatprep.subr.mxu0 0.0
    %3183 = vmatpush1.msra.mxu0 0.0
    %3184 = vmatprep.subr.mxu0 0.0
    %3185 = vmatpush1.msra.mxu0 0.0
    %3186 = vmatprep.subr.mxu0 0.0
    %3187 = vmatpush1.msra.mxu0 0.0
    %3188 = vmatprep.subr.mxu0 0.0
    %3189 = vmatpush1.msra.mxu0 0.0
    %3190 = vmatprep.subr.mxu0 0.0
    %3191 = vmatpush1.msra.mxu0 0.0
    %3192 = vmatprep.mubr.f32.mxu0 0.0
    %3193 = vmatmul.mubr.f32.gmra.mrb[0].mxu0 %v3126
    %v3194 = vpop.f32.mrb[0].mxu0
    %v3195 = vadd.f32 0.0, %v3194
    %v3196 = vpop.f32.mrb[0].mxu0
    %3197 = vdwg.mxu0
    %v3198 = vadd.f32 %v3125, %v3195
    %v3199 = vld [vmem:[%s1184] sm:$0xff]
    %v3200 = vsel %vm272, %v3122, 0
    %3202 = vmatprep.subr.mxu0 0.0
    %3203 = vmatpush1.msra.mxu0 %v2301
    %3204 = vmatprep.subr.mxu0 0.0
    %3205 = vmatpush1.msra.mxu0 %v2302
    %3206 = vmatprep.subr.mxu0 0.0
    %3207 = vmatpush1.msra.mxu0 %v2303
    %3208 = vmatprep.subr.mxu0 0.0
    %3209 = vmatpush1.msra.mxu0 %v2304
    %3210 = vmatprep.subr.mxu0 0.0
    %3211 = vmatpush1.msra.mxu0 0.0
    %3212 = vmatprep.subr.mxu0 0.0
    %3213 = vmatpush1.msra.mxu0 0.0
    %3214 = vmatprep.subr.mxu0 0.0
    %3215 = vmatpush1.msra.mxu0 0.0
    %3216 = vmatprep.subr.mxu0 0.0
    %3217 = vmatpush1.msra.mxu0 0.0
    %3218 = vmatprep.subr.mxu0 0.0
    %3219 = vmatpush1.msra.mxu0 0.0
    %3220 = vmatprep.subr.mxu0 0.0
    %3221 = vmatpush1.msra.mxu0 0.0
    %3222 = vmatprep.subr.mxu0 0.0
    %3223 = vmatpush1.msra.mxu0 0.0
    %3224 = vmatprep.subr.mxu0 0.0
    %3225 = vmatpush1.msra.mxu0 0.0
    %3226 = vmatprep.subr.mxu0 0.0
    %3227 = vmatpush1.msra.mxu0 0.0
    %3228 = vmatprep.subr.mxu0 0.0
    %3229 = vmatpush1.msra.mxu0 0.0
    %3230 = vmatprep.subr.mxu0 0.0
    %3231 = vmatpush1.msra.mxu0 0.0
    %3232 = vmatprep.subr.mxu0 0.0
    %3233 = vmatpush1.msra.mxu0 0.0
    %3234 = vmatprep.subr.mxu0 0.0
    %3235 = vmatpush1.msra.mxu0 0.0
    %3236 = vmatprep.subr.mxu0 0.0
    %3237 = vmatpush1.msra.mxu0 0.0
    %3238 = vmatprep.subr.mxu0 0.0
    %3239 = vmatpush1.msra.mxu0 0.0
    %3240 = vmatprep.subr.mxu0 0.0
    %3241 = vmatpush1.msra.mxu0 0.0
    %3242 = vmatprep.subr.mxu0 0.0
    %3243 = vmatpush1.msra.mxu0 0.0
    %3244 = vmatprep.subr.mxu0 0.0
    %3245 = vmatpush1.msra.mxu0 0.0
    %3246 = vmatprep.subr.mxu0 0.0
    %3247 = vmatpush1.msra.mxu0 0.0
    %3248 = vmatprep.subr.mxu0 0.0
    %3249 = vmatpush1.msra.mxu0 0.0
    %3250 = vmatprep.subr.mxu0 0.0
    %3251 = vmatpush1.msra.mxu0 0.0
    %3252 = vmatprep.subr.mxu0 0.0
    %3253 = vmatpush1.msra.mxu0 0.0
    %3254 = vmatprep.subr.mxu0 0.0
    %3255 = vmatpush1.msra.mxu0 0.0
    %3256 = vmatprep.subr.mxu0 0.0
    %3257 = vmatpush1.msra.mxu0 0.0
    %3258 = vmatprep.subr.mxu0 0.0
    %3259 = vmatpush1.msra.mxu0 0.0
    %3260 = vmatprep.subr.mxu0 0.0
    %3261 = vmatpush1.msra.mxu0 0.0
    %3262 = vmatprep.subr.mxu0 0.0
    %3263 = vmatpush1.msra.mxu0 0.0
    %3264 = vmatprep.subr.mxu0 0.0
    %3265 = vmatpush1.msra.mxu0 0.0
    %3266 = vmatprep.mubr.f32.mxu0 0.0
    %3267 = vmatmul.mubr.f32.gmra.mrb[0].mxu0 %v3200
    %v3268 = vpop.f32.mrb[0].mxu0
    %v3269 = vadd.f32 0.0, %v3268
    %v3270 = vpop.f32.mrb[0].mxu0
    %3271 = vdwg.mxu0
    %v3272 = vadd.f32 %v3199, %v3269
    %v3273 = vxor.u32 %v3198, 2147483648
    %v3274 = vmul.f32 %v3273, 1.442695
    %v3275 = vpow.pop %v3274
    %v3276 = vadd.f32 %v3275, 1.0
    %v3277 = vrcp.pop %v3276
    %v3278 = vmul.f32 1.0, %v3277
    %v3279 = vtanh.pop %v3198
    %v3280 = vmul.f32 %v3278, %v3084
    %3282 = vrot.lane.b32.xlu0 %v3279, 64
    %v3283 = vpop.permute.xlu0 %3282
    %v3285 = vmul.f32 %v3278, %v3283
    %3287 = vrot.lane.b32.xlu0 %v3285, 32
    %v3288 = vpop.permute.xlu0 %3287
    %v3290 = vadd.f32 %v3280, %v3288
    %v3291 = vtanh.pop %v3290
    %3293 = vrot.lane.b32.xlu0 %v3291, 64
    %v3294 = vpop.permute.xlu0 %3293
    %v3296 = vmul.f32 %v3278, %v3294
    %v3297 = vxor.u32 %v3272, 2147483648
    %v3298 = vmul.f32 %v3297, 1.442695
    %v3299 = vpow.pop %v3298
    %v3300 = vadd.f32 %v3299, 1.0
    %v3301 = vrcp.pop %v3300
    %v3302 = vmul.f32 1.0, %v3301
    %v3303 = vtanh.pop %v3272
    %v3304 = vmul.f32 %v3302, %v3108
    %3306 = vrot.lane.b32.xlu0 %v3303, 64
    %v3307 = vpop.permute.xlu0 %3306
    %v3309 = vmul.f32 %v3302, %v3307
    %3311 = vrot.lane.b32.xlu0 %v3309, 32
    %v3312 = vpop.permute.xlu0 %3311
    %v3314 = vadd.f32 %v3304, %v3312
    %v3315 = vtanh.pop %v3314
    %3317 = vrot.lane.b32.xlu0 %v3315, 64
    %v3318 = vpop.permute.xlu0 %3317
    %v3320 = vmul.f32 %v3302, %v3318
    %3322 = vrot.lane.b32.xlu0 %v3296, 32
    %v3323 = vpop.permute.xlu0 %3322
    %3325 = vst.msk [vmem:[%s1311] sm:$0xff] %vm272, %v3323
    %3327 = vrot.lane.b32.xlu0 %v3320, 32
    %v3328 = vpop.permute.xlu0 %3327
    %3330 = vst.msk [vmem:[%s1317] sm:$0xff] %vm272, %v3328
    %v3331 = vld [vmem:[%s1319] sm:$0xff]
    %v3332 = vsel %vm272, %v3323, 0
    %3334 = vmatprep.subr.mxu0 0.0
    %3335 = vmatpush1.msra.mxu0 %v2297
    %3336 = vmatprep.subr.mxu0 0.0
    %3337 = vmatpush1.msra.mxu0 %v2298
    %3338 = vmatprep.subr.mxu0 0.0
    %3339 = vmatpush1.msra.mxu0 %v2299
    %3340 = vmatprep.subr.mxu0 0.0
    %3341 = vmatpush1.msra.mxu0 %v2300
    %3342 = vmatprep.subr.mxu0 0.0
    %3343 = vmatpush1.msra.mxu0 0.0
    %3344 = vmatprep.subr.mxu0 0.0
    %3345 = vmatpush1.msra.mxu0 0.0
    %3346 = vmatprep.subr.mxu0 0.0
    %3347 = vmatpush1.msra.mxu0 0.0
    %3348 = vmatprep.subr.mxu0 0.0
    %3349 = vmatpush1.msra.mxu0 0.0
    %3350 = vmatprep.subr.mxu0 0.0
    %3351 = vmatpush1.msra.mxu0 0.0
    %3352 = vmatprep.subr.mxu0 0.0
    %3353 = vmatpush1.msra.mxu0 0.0
    %3354 = vmatprep.subr.mxu0 0.0
    %3355 = vmatpush1.msra.mxu0 0.0
    %3356 = vmatprep.subr.mxu0 0.0
    %3357 = vmatpush1.msra.mxu0 0.0
    %3358 = vmatprep.subr.mxu0 0.0
    %3359 = vmatpush1.msra.mxu0 0.0
    %3360 = vmatprep.subr.mxu0 0.0
    %3361 = vmatpush1.msra.mxu0 0.0
    %3362 = vmatprep.subr.mxu0 0.0
    %3363 = vmatpush1.msra.mxu0 0.0
    %3364 = vmatprep.subr.mxu0 0.0
    %3365 = vmatpush1.msra.mxu0 0.0
    %3366 = vmatprep.subr.mxu0 0.0
    %3367 = vmatpush1.msra.mxu0 0.0
    %3368 = vmatprep.subr.mxu0 0.0
    %3369 = vmatpush1.msra.mxu0 0.0
    %3370 = vmatprep.subr.mxu0 0.0
    %3371 = vmatpush1.msra.mxu0 0.0
    %3372 = vmatprep.subr.mxu0 0.0
    %3373 = vmatpush1.msra.mxu0 0.0
    %3374 = vmatprep.subr.mxu0 0.0
    %3375 = vmatpush1.msra.mxu0 0.0
    %3376 = vmatprep.subr.mxu0 0.0
    %3377 = vmatpush1.msra.mxu0 0.0
    %3378 = vmatprep.subr.mxu0 0.0
    %3379 = vmatpush1.msra.mxu0 0.0
    %3380 = vmatprep.subr.mxu0 0.0
    %3381 = vmatpush1.msra.mxu0 0.0
    %3382 = vmatprep.subr.mxu0 0.0
    %3383 = vmatpush1.msra.mxu0 0.0
    %3384 = vmatprep.subr.mxu0 0.0
    %3385 = vmatpush1.msra.mxu0 0.0
    %3386 = vmatprep.subr.mxu0 0.0
    %3387 = vmatpush1.msra.mxu0 0.0
    %3388 = vmatprep.subr.mxu0 0.0
    %3389 = vmatpush1.msra.mxu0 0.0
    %3390 = vmatprep.subr.mxu0 0.0
    %3391 = vmatpush1.msra.mxu0 0.0
    %3392 = vmatprep.subr.mxu0 0.0
    %3393 = vmatpush1.msra.mxu0 0.0
    %3394 = vmatprep.subr.mxu0 0.0
    %3395 = vmatpush1.msra.mxu0 0.0
    %3396 = vmatprep.subr.mxu0 0.0
    %3397 = vmatpush1.msra.mxu0 0.0
    %3398 = vmatprep.mubr.f32.mxu0 0.0
    %3399 = vmatmul.mubr.f32.gmra.mrb[0].mxu0 %v3332
    %v3400 = vpop.f32.mrb[0].mxu0
    %v3401 = vadd.f32 0.0, %v3400
    %v3402 = vpop.f32.mrb[0].mxu0
    %3403 = vdwg.mxu0
    %v3404 = vadd.f32 %v3331, %v3401
    %v3405 = vld [vmem:[%s1394] sm:$0xff]
    %v3406 = vsel %vm272, %v3328, 0
    %3408 = vmatprep.subr.mxu0 0.0
    %3409 = vmatpush1.msra.mxu0 %v2301
    %3410 = vmatprep.subr.mxu0 0.0
    %3411 = vmatpush1.msra.mxu0 %v2302
    %3412 = vmatprep.subr.mxu0 0.0
    %3413 = vmatpush1.msra.mxu0 %v2303
    %3414 = vmatprep.subr.mxu0 0.0
    %3415 = vmatpush1.msra.mxu0 %v2304
    %3416 = vmatprep.subr.mxu0 0.0
    %3417 = vmatpush1.msra.mxu0 0.0
    %3418 = vmatprep.subr.mxu0 0.0
    %3419 = vmatpush1.msra.mxu0 0.0
    %3420 = vmatprep.subr.mxu0 0.0
    %3421 = vmatpush1.msra.mxu0 0.0
    %3422 = vmatprep.subr.mxu0 0.0
    %3423 = vmatpush1.msra.mxu0 0.0
    %3424 = vmatprep.subr.mxu0 0.0
    %3425 = vmatpush1.msra.mxu0 0.0
    %3426 = vmatprep.subr.mxu0 0.0
    %3427 = vmatpush1.msra.mxu0 0.0
    %3428 = vmatprep.subr.mxu0 0.0
    %3429 = vmatpush1.msra.mxu0 0.0
    %3430 = vmatprep.subr.mxu0 0.0
    %3431 = vmatpush1.msra.mxu0 0.0
    %3432 = vmatprep.subr.mxu0 0.0
    %3433 = vmatpush1.msra.mxu0 0.0
    %3434 = vmatprep.subr.mxu0 0.0
    %3435 = vmatpush1.msra.mxu0 0.0
    %3436 = vmatprep.subr.mxu0 0.0
    %3437 = vmatpush1.msra.mxu0 0.0
    %3438 = vmatprep.subr.mxu0 0.0
    %3439 = vmatpush1.msra.mxu0 0.0
    %3440 = vmatprep.subr.mxu0 0.0
    %3441 = vmatpush1.msra.mxu0 0.0
    %3442 = vmatprep.subr.mxu0 0.0
    %3443 = vmatpush1.msra.mxu0 0.0
    %3444 = vmatprep.subr.mxu0 0.0
    %3445 = vmatpush1.msra.mxu0 0.0
    %3446 = vmatprep.subr.mxu0 0.0
    %3447 = vmatpush1.msra.mxu0 0.0
    %3448 = vmatprep.subr.mxu0 0.0
    %3449 = vmatpush1.msra.mxu0 0.0
    %3450 = vmatprep.subr.mxu0 0.0
    %3451 = vmatpush1.msra.mxu0 0.0
    %3452 = vmatprep.subr.mxu0 0.0
    %3453 = vmatpush1.msra.mxu0 0.0
    %3454 = vmatprep.subr.mxu0 0.0
    %3455 = vmatpush1.msra.mxu0 0.0
    %3456 = vmatprep.subr.mxu0 0.0
    %3457 = vmatpush1.msra.mxu0 0.0
    %3458 = vmatprep.subr.mxu0 0.0
    %3459 = vmatpush1.msra.mxu0 0.0
    %3460 = vmatprep.subr.mxu0 0.0
    %3461 = vmatpush1.msra.mxu0 0.0
    %3462 = vmatprep.subr.mxu0 0.0
    %3463 = vmatpush1.msra.mxu0 0.0
    %3464 = vmatprep.subr.mxu0 0.0
    %3465 = vmatpush1.msra.mxu0 0.0
    %3466 = vmatprep.subr.mxu0 0.0
    %3467 = vmatpush1.msra.mxu0 0.0
    %3468 = vmatprep.subr.mxu0 0.0
    %3469 = vmatpush1.msra.mxu0 0.0
    %3470 = vmatprep.subr.mxu0 0.0
    %3471 = vmatpush1.msra.mxu0 0.0
    %3472 = vmatprep.mubr.f32.mxu0 0.0
    %3473 = vmatmul.mubr.f32.gmra.mrb[0].mxu0 %v3406
    %v3474 = vpop.f32.mrb[0].mxu0
    %v3475 = vadd.f32 0.0, %v3474
    %v3476 = vpop.f32.mrb[0].mxu0
    %3477 = vdwg.mxu0
    %v3478 = vadd.f32 %v3405, %v3475
    %v3479 = vxor.u32 %v3404, 2147483648
    %v3480 = vmul.f32 %v3479, 1.442695
    %v3481 = vpow.pop %v3480
    %v3482 = vadd.f32 %v3481, 1.0
    %v3483 = vrcp.pop %v3482
    %v3484 = vmul.f32 1.0, %v3483
    %v3485 = vtanh.pop %v3404
    %v3486 = vmul.f32 %v3484, %v3290
    %3488 = vrot.lane.b32.xlu0 %v3485, 64
    %v3489 = vpop.permute.xlu0 %3488
    %v3491 = vmul.f32 %v3484, %v3489
    %3493 = vrot.lane.b32.xlu0 %v3491, 32
    %v3494 = vpop.permute.xlu0 %3493
    %v3496 = vadd.f32 %v3486, %v3494
    %v3497 = vtanh.pop %v3496
    %3499 = vrot.lane.b32.xlu0 %v3497, 64
    %v3500 = vpop.permute.xlu0 %3499
    %v3502 = vmul.f32 %v3484, %v3500
    %v3503 = vxor.u32 %v3478, 2147483648
    %v3504 = vmul.f32 %v3503, 1.442695
    %v3505 = vpow.pop %v3504
    %v3506 = vadd.f32 %v3505, 1.0
    %v3507 = vrcp.pop %v3506
    %v3508 = vmul.f32 1.0, %v3507
    %v3509 = vtanh.pop %v3478
    %v3510 = vmul.f32 %v3508, %v3314
    %3512 = vrot.lane.b32.xlu0 %v3509, 64
    %v3513 = vpop.permute.xlu0 %3512
    %v3515 = vmul.f32 %v3508, %v3513
    %3517 = vrot.lane.b32.xlu0 %v3515, 32
    %v3518 = vpop.permute.xlu0 %3517
    %v3520 = vadd.f32 %v3510, %v3518
    %v3521 = vtanh.pop %v3520
    %3523 = vrot.lane.b32.xlu0 %v3521, 64
    %v3524 = vpop.permute.xlu0 %3523
    %v3526 = vmul.f32 %v3508, %v3524
    %3528 = vrot.lane.b32.xlu0 %v3502, 32
    %v3529 = vpop.permute.xlu0 %3528
    %3531 = vst.msk [vmem:[%s1521] sm:$0xff] %vm272, %v3529
    %3533 = vrot.lane.b32.xlu0 %v3526, 32
    %v3534 = vpop.permute.xlu0 %3533
    %3536 = vst.msk [vmem:[%s1527] sm:$0xff] %vm272, %v3534
    %v3537 = vld [vmem:[%s1529] sm:$0xff]
    %v3538 = vsel %vm272, %v3529, 0
    %3540 = vmatprep.subr.mxu0 0.0
    %3541 = vmatpush1.msra.mxu0 %v2297
    %3542 = vmatprep.subr.mxu0 0.0
    %3543 = vmatpush1.msra.mxu0 %v2298
    %3544 = vmatprep.subr.mxu0 0.0
    %3545 = vmatpush1.msra.mxu0 %v2299
    %3546 = vmatprep.subr.mxu0 0.0
    %3547 = vmatpush1.msra.mxu0 %v2300
    %3548 = vmatprep.subr.mxu0 0.0
    %3549 = vmatpush1.msra.mxu0 0.0
    %3550 = vmatprep.subr.mxu0 0.0
    %3551 = vmatpush1.msra.mxu0 0.0
    %3552 = vmatprep.subr.mxu0 0.0
    %3553 = vmatpush1.msra.mxu0 0.0
    %3554 = vmatprep.subr.mxu0 0.0
    %3555 = vmatpush1.msra.mxu0 0.0
    %3556 = vmatprep.subr.mxu0 0.0
    %3557 = vmatpush1.msra.mxu0 0.0
    %3558 = vmatprep.subr.mxu0 0.0
    %3559 = vmatpush1.msra.mxu0 0.0
    %3560 = vmatprep.subr.mxu0 0.0
    %3561 = vmatpush1.msra.mxu0 0.0
    %3562 = vmatprep.subr.mxu0 0.0
    %3563 = vmatpush1.msra.mxu0 0.0
    %3564 = vmatprep.subr.mxu0 0.0
    %3565 = vmatpush1.msra.mxu0 0.0
    %3566 = vmatprep.subr.mxu0 0.0
    %3567 = vmatpush1.msra.mxu0 0.0
    %3568 = vmatprep.subr.mxu0 0.0
    %3569 = vmatpush1.msra.mxu0 0.0
    %3570 = vmatprep.subr.mxu0 0.0
    %3571 = vmatpush1.msra.mxu0 0.0
    %3572 = vmatprep.subr.mxu0 0.0
    %3573 = vmatpush1.msra.mxu0 0.0
    %3574 = vmatprep.subr.mxu0 0.0
    %3575 = vmatpush1.msra.mxu0 0.0
    %3576 = vmatprep.subr.mxu0 0.0
    %3577 = vmatpush1.msra.mxu0 0.0
    %3578 = vmatprep.subr.mxu0 0.0
    %3579 = vmatpush1.msra.mxu0 0.0
    %3580 = vmatprep.subr.mxu0 0.0
    %3581 = vmatpush1.msra.mxu0 0.0
    %3582 = vmatprep.subr.mxu0 0.0
    %3583 = vmatpush1.msra.mxu0 0.0
    %3584 = vmatprep.subr.mxu0 0.0
    %3585 = vmatpush1.msra.mxu0 0.0
    %3586 = vmatprep.subr.mxu0 0.0
    %3587 = vmatpush1.msra.mxu0 0.0
    %3588 = vmatprep.subr.mxu0 0.0
    %3589 = vmatpush1.msra.mxu0 0.0
    %3590 = vmatprep.subr.mxu0 0.0
    %3591 = vmatpush1.msra.mxu0 0.0
    %3592 = vmatprep.subr.mxu0 0.0
    %3593 = vmatpush1.msra.mxu0 0.0
    %3594 = vmatprep.subr.mxu0 0.0
    %3595 = vmatpush1.msra.mxu0 0.0
    %3596 = vmatprep.subr.mxu0 0.0
    %3597 = vmatpush1.msra.mxu0 0.0
    %3598 = vmatprep.subr.mxu0 0.0
    %3599 = vmatpush1.msra.mxu0 0.0
    %3600 = vmatprep.subr.mxu0 0.0
    %3601 = vmatpush1.msra.mxu0 0.0
    %3602 = vmatprep.subr.mxu0 0.0
    %3603 = vmatpush1.msra.mxu0 0.0
    %3604 = vmatprep.mubr.f32.mxu0 0.0
    %3605 = vmatmul.mubr.f32.gmra.mrb[0].mxu0 %v3538
    %v3606 = vpop.f32.mrb[0].mxu0
    %v3607 = vadd.f32 0.0, %v3606
    %v3608 = vpop.f32.mrb[0].mxu0
    %3609 = vdwg.mxu0
    %v3610 = vadd.f32 %v3537, %v3607
    %v3611 = vld [vmem:[%s1604] sm:$0xff]
    %v3612 = vsel %vm272, %v3534, 0
    %3614 = vmatprep.subr.mxu0 0.0
    %3615 = vmatpush1.msra.mxu0 %v2301
    %3616 = vmatprep.subr.mxu0 0.0
    %3617 = vmatpush1.msra.mxu0 %v2302
    %3618 = vmatprep.subr.mxu0 0.0
    %3619 = vmatpush1.msra.mxu0 %v2303
    %3620 = vmatprep.subr.mxu0 0.0
    %3621 = vmatpush1.msra.mxu0 %v2304
    %3622 = vmatprep.subr.mxu0 0.0
    %3623 = vmatpush1.msra.mxu0 0.0
    %3624 = vmatprep.subr.mxu0 0.0
    %3625 = vmatpush1.msra.mxu0 0.0
    %3626 = vmatprep.subr.mxu0 0.0
    %3627 = vmatpush1.msra.mxu0 0.0
    %3628 = vmatprep.subr.mxu0 0.0
    %3629 = vmatpush1.msra.mxu0 0.0
    %3630 = vmatprep.subr.mxu0 0.0
    %3631 = vmatpush1.msra.mxu0 0.0
    %3632 = vmatprep.subr.mxu0 0.0
    %3633 = vmatpush1.msra.mxu0 0.0
    %3634 = vmatprep.subr.mxu0 0.0
    %3635 = vmatpush1.msra.mxu0 0.0
    %3636 = vmatprep.subr.mxu0 0.0
    %3637 = vmatpush1.msra.mxu0 0.0
    %3638 = vmatprep.subr.mxu0 0.0
    %3639 = vmatpush1.msra.mxu0 0.0
    %3640 = vmatprep.subr.mxu0 0.0
    %3641 = vmatpush1.msra.mxu0 0.0
    %3642 = vmatprep.subr.mxu0 0.0
    %3643 = vmatpush1.msra.mxu0 0.0
    %3644 = vmatprep.subr.mxu0 0.0
    %3645 = vmatpush1.msra.mxu0 0.0
    %3646 = vmatprep.subr.mxu0 0.0
    %3647 = vmatpush1.msra.mxu0 0.0
    %3648 = vmatprep.subr.mxu0 0.0
    %3649 = vmatpush1.msra.mxu0 0.0
    %3650 = vmatprep.subr.mxu0 0.0
    %3651 = vmatpush1.msra.mxu0 0.0
    %3652 = vmatprep.subr.mxu0 0.0
    %3653 = vmatpush1.msra.mxu0 0.0
    %3654 = vmatprep.subr.mxu0 0.0
    %3655 = vmatpush1.msra.mxu0 0.0
    %3656 = vmatprep.subr.mxu0 0.0
    %3657 = vmatpush1.msra.mxu0 0.0
    %3658 = vmatprep.subr.mxu0 0.0
    %3659 = vmatpush1.msra.mxu0 0.0
    %3660 = vmatprep.subr.mxu0 0.0
    %3661 = vmatpush1.msra.mxu0 0.0
    %3662 = vmatprep.subr.mxu0 0.0
    %3663 = vmatpush1.msra.mxu0 0.0
    %3664 = vmatprep.subr.mxu0 0.0
    %3665 = vmatpush1.msra.mxu0 0.0
    %3666 = vmatprep.subr.mxu0 0.0
    %3667 = vmatpush1.msra.mxu0 0.0
    %3668 = vmatprep.subr.mxu0 0.0
    %3669 = vmatpush1.msra.mxu0 0.0
    %3670 = vmatprep.subr.mxu0 0.0
    %3671 = vmatpush1.msra.mxu0 0.0
    %3672 = vmatprep.subr.mxu0 0.0
    %3673 = vmatpush1.msra.mxu0 0.0
    %3674 = vmatprep.subr.mxu0 0.0
    %3675 = vmatpush1.msra.mxu0 0.0
    %3676 = vmatprep.subr.mxu0 0.0
    %3677 = vmatpush1.msra.mxu0 0.0
    %3678 = vmatprep.mubr.f32.mxu0 0.0
    %3679 = vmatmul.mubr.f32.gmra.mrb[0].mxu0 %v3612
    %v3680 = vpop.f32.mrb[0].mxu0
    %v3681 = vadd.f32 0.0, %v3680
    %v3682 = vpop.f32.mrb[0].mxu0
    %3683 = vdwg.mxu0
    %v3684 = vadd.f32 %v3611, %v3681
    %v3685 = vxor.u32 %v3610, 2147483648
    %v3686 = vmul.f32 %v3685, 1.442695
    %v3687 = vpow.pop %v3686
    %v3688 = vadd.f32 %v3687, 1.0
    %v3689 = vrcp.pop %v3688
    %v3690 = vmul.f32 1.0, %v3689
    %v3691 = vtanh.pop %v3610
    %v3692 = vmul.f32 %v3690, %v3496
    %3694 = vrot.lane.b32.xlu0 %v3691, 64
    %v3695 = vpop.permute.xlu0 %3694
    %v3697 = vmul.f32 %v3690, %v3695
    %3699 = vrot.lane.b32.xlu0 %v3697, 32
    %v3700 = vpop.permute.xlu0 %3699
    %v3702 = vadd.f32 %v3692, %v3700
    %v3703 = vtanh.pop %v3702
    %3705 = vrot.lane.b32.xlu0 %v3703, 64
    %v3706 = vpop.permute.xlu0 %3705
    %v3708 = vmul.f32 %v3690, %v3706
    %v3709 = vxor.u32 %v3684, 2147483648
    %v3710 = vmul.f32 %v3709, 1.442695
    %v3711 = vpow.pop %v3710
    %v3712 = vadd.f32 %v3711, 1.0
    %v3713 = vrcp.pop %v3712
    %v3714 = vmul.f32 1.0, %v3713
    %v3715 = vtanh.pop %v3684
    %v3716 = vmul.f32 %v3714, %v3520
    %3718 = vrot.lane.b32.xlu0 %v3715, 64
    %v3719 = vpop.permute.xlu0 %3718
    %v3721 = vmul.f32 %v3714, %v3719
    %3723 = vrot.lane.b32.xlu0 %v3721, 32
    %v3724 = vpop.permute.xlu0 %3723
    %v3726 = vadd.f32 %v3716, %v3724
    %v3727 = vtanh.pop %v3726
    %3729 = vrot.lane.b32.xlu0 %v3727, 64
    %v3730 = vpop.permute.xlu0 %3729
    %v3732 = vmul.f32 %v3714, %v3730
    %3734 = vrot.lane.b32.xlu0 %v3708, 32
    %v3735 = vpop.permute.xlu0 %3734
    %3737 = vst.msk [vmem:[%s1731] sm:$0xff] %vm272, %v3735
    %3739 = vrot.lane.b32.xlu0 %v3732, 32
    %v3740 = vpop.permute.xlu0 %3739
    %3742 = vst.msk [vmem:[%s1737] sm:$0xff] %vm272, %v3740
    %v3743 = vld [vmem:[%s1739] sm:$0xff]
    %v3744 = vsel %vm272, %v3735, 0
    %3746 = vmatprep.subr.mxu0 0.0
    %3747 = vmatpush1.msra.mxu0 %v2297
    %3748 = vmatprep.subr.mxu0 0.0
    %3749 = vmatpush1.msra.mxu0 %v2298
    %3750 = vmatprep.subr.mxu0 0.0
    %3751 = vmatpush1.msra.mxu0 %v2299
    %3752 = vmatprep.subr.mxu0 0.0
    %3753 = vmatpush1.msra.mxu0 %v2300
    %3754 = vmatprep.subr.mxu0 0.0
    %3755 = vmatpush1.msra.mxu0 0.0
    %3756 = vmatprep.subr.mxu0 0.0
    %3757 = vmatpush1.msra.mxu0 0.0
    %3758 = vmatprep.subr.mxu0 0.0
    %3759 = vmatpush1.msra.mxu0 0.0
    %3760 = vmatprep.subr.mxu0 0.0
    %3761 = vmatpush1.msra.mxu0 0.0
    %3762 = vmatprep.subr.mxu0 0.0
    %3763 = vmatpush1.msra.mxu0 0.0
    %3764 = vmatprep.subr.mxu0 0.0
    %3765 = vmatpush1.msra.mxu0 0.0
    %3766 = vmatprep.subr.mxu0 0.0
    %3767 = vmatpush1.msra.mxu0 0.0
    %3768 = vmatprep.subr.mxu0 0.0
    %3769 = vmatpush1.msra.mxu0 0.0
    %3770 = vmatprep.subr.mxu0 0.0
    %3771 = vmatpush1.msra.mxu0 0.0
    %3772 = vmatprep.subr.mxu0 0.0
    %3773 = vmatpush1.msra.mxu0 0.0
    %3774 = vmatprep.subr.mxu0 0.0
    %3775 = vmatpush1.msra.mxu0 0.0
    %3776 = vmatprep.subr.mxu0 0.0
    %3777 = vmatpush1.msra.mxu0 0.0
    %3778 = vmatprep.subr.mxu0 0.0
    %3779 = vmatpush1.msra.mxu0 0.0
    %3780 = vmatprep.subr.mxu0 0.0
    %3781 = vmatpush1.msra.mxu0 0.0
    %3782 = vmatprep.subr.mxu0 0.0
    %3783 = vmatpush1.msra.mxu0 0.0
    %3784 = vmatprep.subr.mxu0 0.0
    %3785 = vmatpush1.msra.mxu0 0.0
    %3786 = vmatprep.subr.mxu0 0.0
    %3787 = vmatpush1.msra.mxu0 0.0
    %3788 = vmatprep.subr.mxu0 0.0
    %3789 = vmatpush1.msra.mxu0 0.0
    %3790 = vmatprep.subr.mxu0 0.0
    %3791 = vmatpush1.msra.mxu0 0.0
    %3792 = vmatprep.subr.mxu0 0.0
    %3793 = vmatpush1.msra.mxu0 0.0
    %3794 = vmatprep.subr.mxu0 0.0
    %3795 = vmatpush1.msra.mxu0 0.0
    %3796 = vmatprep.subr.mxu0 0.0
    %3797 = vmatpush1.msra.mxu0 0.0
    %3798 = vmatprep.subr.mxu0 0.0
    %3799 = vmatpush1.msra.mxu0 0.0
    %3800 = vmatprep.subr.mxu0 0.0
    %3801 = vmatpush1.msra.mxu0 0.0
    %3802 = vmatprep.subr.mxu0 0.0
    %3803 = vmatpush1.msra.mxu0 0.0
    %3804 = vmatprep.subr.mxu0 0.0
    %3805 = vmatpush1.msra.mxu0 0.0
    %3806 = vmatprep.subr.mxu0 0.0
    %3807 = vmatpush1.msra.mxu0 0.0
    %3808 = vmatprep.subr.mxu0 0.0
    %3809 = vmatpush1.msra.mxu0 0.0
    %3810 = vmatprep.mubr.f32.mxu0 0.0
    %3811 = vmatmul.mubr.f32.gmra.mrb[0].mxu0 %v3744
    %v3812 = vpop.f32.mrb[0].mxu0
    %v3813 = vadd.f32 0.0, %v3812
    %v3814 = vpop.f32.mrb[0].mxu0
    %3815 = vdwg.mxu0
    %v3816 = vadd.f32 %v3743, %v3813
    %v3817 = vld [vmem:[#allocation3] sm:$0xff]
    %v3818 = vsel %vm272, %v3740, 0
    %3820 = vmatprep.subr.mxu0 0.0
    %3821 = vmatpush1.msra.mxu0 %v2301
    %3822 = vmatprep.subr.mxu0 0.0
    %3823 = vmatpush1.msra.mxu0 %v2302
    %3824 = vmatprep.subr.mxu0 0.0
    %3825 = vmatpush1.msra.mxu0 %v2303
    %3826 = vmatprep.subr.mxu0 0.0
    %3827 = vmatpush1.msra.mxu0 %v2304
    %3828 = vmatprep.subr.mxu0 0.0
    %3829 = vmatpush1.msra.mxu0 0.0
    %3830 = vmatprep.subr.mxu0 0.0
    %3831 = vmatpush1.msra.mxu0 0.0
    %3832 = vmatprep.subr.mxu0 0.0
    %3833 = vmatpush1.msra.mxu0 0.0
    %3834 = vmatprep.subr.mxu0 0.0
    %3835 = vmatpush1.msra.mxu0 0.0
    %3836 = vmatprep.subr.mxu0 0.0
    %3837 = vmatpush1.msra.mxu0 0.0
    %3838 = vmatprep.subr.mxu0 0.0
    %3839 = vmatpush1.msra.mxu0 0.0
    %3840 = vmatprep.subr.mxu0 0.0
    %3841 = vmatpush1.msra.mxu0 0.0
    %3842 = vmatprep.subr.mxu0 0.0
    %3843 = vmatpush1.msra.mxu0 0.0
    %3844 = vmatprep.subr.mxu0 0.0
    %3845 = vmatpush1.msra.mxu0 0.0
    %3846 = vmatprep.subr.mxu0 0.0
    %3847 = vmatpush1.msra.mxu0 0.0
    %3848 = vmatprep.subr.mxu0 0.0
    %3849 = vmatpush1.msra.mxu0 0.0
    %3850 = vmatprep.subr.mxu0 0.0
    %3851 = vmatpush1.msra.mxu0 0.0
    %3852 = vmatprep.subr.mxu0 0.0
    %3853 = vmatpush1.msra.mxu0 0.0
    %3854 = vmatprep.subr.mxu0 0.0
    %3855 = vmatpush1.msra.mxu0 0.0
    %3856 = vmatprep.subr.mxu0 0.0
    %3857 = vmatpush1.msra.mxu0 0.0
    %3858 = vmatprep.subr.mxu0 0.0
    %3859 = vmatpush1.msra.mxu0 0.0
    %3860 = vmatprep.subr.mxu0 0.0
    %3861 = vmatpush1.msra.mxu0 0.0
    %3862 = vmatprep.subr.mxu0 0.0
    %3863 = vmatpush1.msra.mxu0 0.0
    %3864 = vmatprep.subr.mxu0 0.0
    %3865 = vmatpush1.msra.mxu0 0.0
    %3866 = vmatprep.subr.mxu0 0.0
    %3867 = vmatpush1.msra.mxu0 0.0
    %3868 = vmatprep.subr.mxu0 0.0
    %3869 = vmatpush1.msra.mxu0 0.0
    %3870 = vmatprep.subr.mxu0 0.0
    %3871 = vmatpush1.msra.mxu0 0.0
    %3872 = vmatprep.subr.mxu0 0.0
    %3873 = vmatpush1.msra.mxu0 0.0
    %3874 = vmatprep.subr.mxu0 0.0
    %3875 = vmatpush1.msra.mxu0 0.0
    %3876 = vmatprep.subr.mxu0 0.0
    %3877 = vmatpush1.msra.mxu0 0.0
    %3878 = vmatprep.subr.mxu0 0.0
    %3879 = vmatpush1.msra.mxu0 0.0
    %3880 = vmatprep.subr.mxu0 0.0
    %3881 = vmatpush1.msra.mxu0 0.0
    %3882 = vmatprep.subr.mxu0 0.0
    %3883 = vmatpush1.msra.mxu0 0.0
    %3884 = vmatprep.mubr.f32.mxu0 0.0
    %3885 = vmatmul.mubr.f32.gmra.mrb[0].mxu0 %v3818
    %v3886 = vpop.f32.mrb[0].mxu0
    %v3887 = vadd.f32 0.0, %v3886
    %v3888 = vpop.f32.mrb[0].mxu0
    %3889 = vdwg.mxu0
    %v3890 = vadd.f32 %v3817, %v3887
    %v3891 = vxor.u32 %v3816, 2147483648
    %v3892 = vmul.f32 %v3891, 1.442695
    %v3893 = vpow.pop %v3892
    %v3894 = vadd.f32 %v3893, 1.0
    %v3895 = vrcp.pop %v3894
    %v3896 = vmul.f32 1.0, %v3895
    %v3897 = vtanh.pop %v3816
    %v3898 = vmul.f32 %v3896, %v3702
    %3900 = vrot.lane.b32.xlu0 %v3897, 64
    %v3901 = vpop.permute.xlu0 %3900
    %v3903 = vmul.f32 %v3896, %v3901
    %3905 = vrot.lane.b32.xlu0 %v3903, 32
    %v3906 = vpop.permute.xlu0 %3905
    %v3908 = vadd.f32 %v3898, %v3906
    %v3909 = vtanh.pop %v3908
    %3911 = vrot.lane.b32.xlu0 %v3909, 64
    %v3912 = vpop.permute.xlu0 %3911
    %v3914 = vmul.f32 %v3896, %v3912
    %v3915 = vxor.u32 %v3890, 2147483648
    %v3916 = vmul.f32 %v3915, 1.442695
    %v3917 = vpow.pop %v3916
    %v3918 = vadd.f32 %v3917, 1.0
    %v3919 = vrcp.pop %v3918
    %v3920 = vmul.f32 1.0, %v3919
    %v3921 = vtanh.pop %v3890
    %v3922 = vmul.f32 %v3920, %v3726
    %3924 = vrot.lane.b32.xlu0 %v3921, 64
    %v3925 = vpop.permute.xlu0 %3924
    %v3927 = vmul.f32 %v3920, %v3925
    %3929 = vrot.lane.b32.xlu0 %v3927, 32
    %v3930 = vpop.permute.xlu0 %3929
    %v3932 = vadd.f32 %v3922, %v3930
    %v3933 = vtanh.pop %v3932
    %3935 = vrot.lane.b32.xlu0 %v3933, 64
    %v3936 = vpop.permute.xlu0 %3935
    %v3938 = vmul.f32 %v3920, %v3936
    %3940 = vrot.lane.b32.xlu0 %v3914, 32
    %v3941 = vpop.permute.xlu0 %3940
    %3943 = vst.msk [vmem:[%s1940] sm:$0xff] %vm272, %v3941
    %3945 = vrot.lane.b32.xlu0 %v3938, 32
    %v3946 = vpop.permute.xlu0 %3945
    %3948 = vst.msk [vmem:[#allocation5] sm:$0xff] %vm272, %v3946
    %v3949 = vld [vmem:[%s9] sm:$0xff]
    %v3950 = vld [vmem:[%s9 + $0x8] sm:$0xff]
    %v3951 = vld [vmem:[%s9 + $0x10] sm:$0xff]
    %v3952 = vld [vmem:[%s9 + $0x18] sm:$0xff]
    %v3953 = vld [vmem:[%s477] sm:$0xff]
    %v3954 = vld [vmem:[%s9 + $0x20] sm:$0xff]
    %v3955 = vld [vmem:[%s9 + $0x28] sm:$0xff]
    %v3956 = vld [vmem:[%s9 + $0x30] sm:$0xff]
    %v3957 = vld [vmem:[%s9 + $0x38] sm:$0xff]
    %v3959 = vsel %vm272, %v3953, 0
    %3961 = vmatprep.subr.mxu0 0.0
    %3962 = vmatpush1.msra.mxu0 %v3954
    %3963 = vmatprep.subr.mxu0 0.0
    %3964 = vmatpush1.msra.mxu0 %v3955
    %3965 = vmatprep.subr.mxu0 0.0
    %3966 = vmatpush1.msra.mxu0 %v3956
    %3967 = vmatprep.subr.mxu0 0.0
    %3968 = vmatpush1.msra.mxu0 %v3957
    %3969 = vmatprep.subr.mxu0 0.0
    %3970 = vmatpush1.msra.mxu0 0.0
    %3971 = vmatprep.subr.mxu0 0.0
    %3972 = vmatpush1.msra.mxu0 0.0
    %3973 = vmatprep.subr.mxu0 0.0
    %3974 = vmatpush1.msra.mxu0 0.0
    %3975 = vmatprep.subr.mxu0 0.0
    %3976 = vmatpush1.msra.mxu0 0.0
    %3977 = vmatprep.subr.mxu0 0.0
    %3978 = vmatpush1.msra.mxu0 0.0
    %3979 = vmatprep.subr.mxu0 0.0
    %3980 = vmatpush1.msra.mxu0 0.0
    %3981 = vmatprep.subr.mxu0 0.0
    %3982 = vmatpush1.msra.mxu0 0.0
    %3983 = vmatprep.subr.mxu0 0.0
    %3984 = vmatpush1.msra.mxu0 0.0
    %3985 = vmatprep.subr.mxu0 0.0
    %3986 = vmatpush1.msra.mxu0 0.0
    %3987 = vmatprep.subr.mxu0 0.0
    %3988 = vmatpush1.msra.mxu0 0.0
    %3989 = vmatprep.subr.mxu0 0.0
    %3990 = vmatpush1.msra.mxu0 0.0
    %3991 = vmatprep.subr.mxu0 0.0
    %3992 = vmatpush1.msra.mxu0 0.0
    %3993 = vmatprep.subr.mxu0 0.0
    %3994 = vmatpush1.msra.mxu0 0.0
    %3995 = vmatprep.subr.mxu0 0.0
    %3996 = vmatpush1.msra.mxu0 0.0
    %3997 = vmatprep.subr.mxu0 0.0
    %3998 = vmatpush1.msra.mxu0 0.0
    %3999 = vmatprep.subr.mxu0 0.0
    %4000 = vmatpush1.msra.mxu0 0.0
    %4001 = vmatprep.subr.mxu0 0.0
    %4002 = vmatpush1.msra.mxu0 0.0
    %4003 = vmatprep.subr.mxu0 0.0
    %4004 = vmatpush1.msra.mxu0 0.0
    %4005 = vmatprep.subr.mxu0 0.0
    %4006 = vmatpush1.msra.mxu0 0.0
    %4007 = vmatprep.subr.mxu0 0.0
    %4008 = vmatpush1.msra.mxu0 0.0
    %4009 = vmatprep.subr.mxu0 0.0
    %4010 = vmatpush1.msra.mxu0 0.0
    %4011 = vmatprep.subr.mxu0 0.0
    %4012 = vmatpush1.msra.mxu0 0.0
    %4013 = vmatprep.subr.mxu0 0.0
    %4014 = vmatpush1.msra.mxu0 0.0
    %4015 = vmatprep.subr.mxu0 0.0
    %4016 = vmatpush1.msra.mxu0 0.0
    %4017 = vmatprep.subr.mxu0 0.0
    %4018 = vmatpush1.msra.mxu0 0.0
    %4019 = vmatprep.subr.mxu0 0.0
    %4020 = vmatpush1.msra.mxu0 0.0
    %4021 = vmatprep.subr.mxu0 0.0
    %4022 = vmatpush1.msra.mxu0 0.0
    %4023 = vmatprep.subr.mxu0 0.0
    %4024 = vmatpush1.msra.mxu0 0.0
    %4025 = vmatprep.mubr.f32.mxu0 0.0
    %4026 = vmatmul.mubr.f32.gmra.mrb[0].mxu0 %v3959
    %v4027 = vpop.f32.mrb[0].mxu0
    %v4028 = vadd.f32 0.0, %v4027
    %v4029 = vpop.f32.mrb[0].mxu0
    %4030 = vdwg.mxu0
    %v4031 = vsel %vm272, %v3941, 0
    %4033 = vmatprep.subr.mxu0 0.0
    %4034 = vmatpush1.msra.mxu0 %v3949
    %4035 = vmatprep.subr.mxu0 0.0
    %4036 = vmatpush1.msra.mxu0 %v3950
    %4037 = vmatprep.subr.mxu0 0.0
    %4038 = vmatpush1.msra.mxu0 %v3951
    %4039 = vmatprep.subr.mxu0 0.0
    %4040 = vmatpush1.msra.mxu0 %v3952
    %4041 = vmatprep.subr.mxu0 0.0
    %4042 = vmatpush1.msra.mxu0 0.0
    %4043 = vmatprep.subr.mxu0 0.0
    %4044 = vmatpush1.msra.mxu0 0.0
    %4045 = vmatprep.subr.mxu0 0.0
    %4046 = vmatpush1.msra.mxu0 0.0
    %4047 = vmatprep.subr.mxu0 0.0
    %4048 = vmatpush1.msra.mxu0 0.0
    %4049 = vmatprep.subr.mxu0 0.0
    %4050 = vmatpush1.msra.mxu0 0.0
    %4051 = vmatprep.subr.mxu0 0.0
    %4052 = vmatpush1.msra.mxu0 0.0
    %4053 = vmatprep.subr.mxu0 0.0
    %4054 = vmatpush1.msra.mxu0 0.0
    %4055 = vmatprep.subr.mxu0 0.0
    %4056 = vmatpush1.msra.mxu0 0.0
    %4057 = vmatprep.subr.mxu0 0.0
    %4058 = vmatpush1.msra.mxu0 0.0
    %4059 = vmatprep.subr.mxu0 0.0
    %4060 = vmatpush1.msra.mxu0 0.0
    %4061 = vmatprep.subr.mxu0 0.0
    %4062 = vmatpush1.msra.mxu0 0.0
    %4063 = vmatprep.subr.mxu0 0.0
    %4064 = vmatpush1.msra.mxu0 0.0
    %4065 = vmatprep.subr.mxu0 0.0
    %4066 = vmatpush1.msra.mxu0 0.0
    %4067 = vmatprep.subr.mxu0 0.0
    %4068 = vmatpush1.msra.mxu0 0.0
    %4069 = vmatprep.subr.mxu0 0.0
    %4070 = vmatpush1.msra.mxu0 0.0
    %4071 = vmatprep.subr.mxu0 0.0
    %4072 = vmatpush1.msra.mxu0 0.0
    %4073 = vmatprep.subr.mxu0 0.0
    %4074 = vmatpush1.msra.mxu0 0.0
    %4075 = vmatprep.subr.mxu0 0.0
    %4076 = vmatpush1.msra.mxu0 0.0
    %4077 = vmatprep.subr.mxu0 0.0
    %4078 = vmatpush1.msra.mxu0 0.0
    %4079 = vmatprep.subr.mxu0 0.0
    %4080 = vmatpush1.msra.mxu0 0.0
    %4081 = vmatprep.subr.mxu0 0.0
    %4082 = vmatpush1.msra.mxu0 0.0
    %4083 = vmatprep.subr.mxu0 0.0
    %4084 = vmatpush1.msra.mxu0 0.0
    %4085 = vmatprep.subr.mxu0 0.0
    %4086 = vmatpush1.msra.mxu0 0.0
    %4087 = vmatprep.subr.mxu0 0.0
    %4088 = vmatpush1.msra.mxu0 0.0
    %4089 = vmatprep.subr.mxu0 0.0
    %4090 = vmatpush1.msra.mxu0 0.0
    %4091 = vmatprep.subr.mxu0 0.0
    %4092 = vmatpush1.msra.mxu0 0.0
    %4093 = vmatprep.subr.mxu0 0.0
    %4094 = vmatpush1.msra.mxu0 0.0
    %4095 = vmatprep.subr.mxu0 0.0
    %4096 = vmatpush1.msra.mxu0 0.0
    %4097 = vmatprep.mubr.f32.mxu0 0.0
    %4098 = vmatmul.mubr.f32.gmra.mrb[0].mxu0 %v4031
    %v4099 = vpop.f32.mrb[0].mxu0
    %v4100 = vadd.f32 %v4028, %v4099
    %v4101 = vpop.f32.mrb[0].mxu0
    %4102 = vdwg.mxu0
    %v4103 = vld [vmem:[#allocation6] sm:$0x1]
    %v4105 = vlaneseq
    %v4106 = vshrl.u32 %v4105, 7
    %v4107 = vsub.s32 0, %v4106
    %v4108 = vrot.slane %v4103, %v4107
    %v4110 = vadd.f32 %v4100, %v4108
    %vm4111 = vcmask 7168
    %4112 = vst.msk [vmem:[%s11] sm:$0xff] %vm4111, %v4110
    // Predicated region
    $region58: #{tpu_custom_call.1} parent=1 // pred_check
      _
    $region59: #{tpu_custom_call.1} parent=1 // pred_check_branch
      %4114 = sbr.rel (0) target = $region61
    $region60: #{tpu_custom_call.1} parent=1 // pred_region
      _
    $region61: #{tpu_custom_call.1} parent=1 // pred_fallthru
      _
    // Predicated region
    $region62: #{tpu_custom_call.1} parent=1 // pred_check
      _
    $region63: #{tpu_custom_call.1} parent=1 // pred_check_branch
      %4116 = sbr.rel (0) target = $region65
    $region64: #{tpu_custom_call.1} parent=1 // pred_region
      _
    $region65: #{tpu_custom_call.1} parent=1 // pred_fallthru
      _
    %4117 = vsyncpa [#allocation8], 1
    %4118 = vsyncpa [#allocation10], 1

</llo_original>
